<compile_context>
chip_gen: v7x
topology: tpu7x:2x2x1
jax: 0.10.0
libtpu: 0.0.40
codegen_flags: <defaults>
</compile_context>

<pallas_src>
import functools

import jax
import jax.numpy as jnp
from jax import lax
from jax.experimental import pallas as pl
from jax.experimental.pallas import tpu as pltpu

# ----------------------------- config -----------------------------
EMBED_SIZE = 32
HIDDEN_SIZE = 32
VOCAB_SIZE = 50
NUM_LAYERS = 2
VOCAB_PAD = ((VOCAB_SIZE + 127) // 128) * 128   # 128: lane-dense logits store
SUBLANE = 8                                      # batch padded to a full sublane tile


# ----------------------------- fused decoder kernel -----------------------------
def _decoder_kernel(x_ref, wih0_ref, whh0_ref, b0_ref,
                    wcat_r_ref, b_r_ref,
                    wlin_ref, blin_ref,
                    out_ref,
                    xp_sc,
                    *, hidden, num_layers, seq_len, batch):
    G = 4 * hidden
    T1, B = seq_len, batch
    vpad = wlin_ref.shape[1]

    # ---- hoisted layer-0 input projection (+ combined bias) for ALL timesteps:
    #      one ((T1*B), E) x (E, 4H) MXU matmul, result parked in VMEM scratch.
    xp_sc[...] = (jnp.dot(x_ref[...], wih0_ref[...],
                          preferred_element_type=jnp.float32)
                  + b0_ref[...])                                   # (T1*B, 4H)

    # ---- loop-invariant loads / broadcasts hoisted out of the recurrence
    whh0 = whh0_ref[...]                                           # (H, 4H)
    rest = []
    for l in range(num_layers - 1):
        rest.append((wcat_r_ref[l],                                # (2H, 4H) fused weight
                     jnp.broadcast_to(b_r_ref[l], (B, G))))        # (B, 4H) bias
    wlin = wlin_ref[...]                                           # (H, VOCAB_PAD)
    blin_b = jnp.broadcast_to(blin_ref[...], (B, vpad))            # (B, VOCAB_PAD)

    # Gate lanes are packed [i, f, o, g]: sigmoid on lanes [0, 3H), tanh on [3H, 4H).
    # sigmoid(x) = 0.5 * tanh(0.5 * x) + 0.5  ->  ONE tanh push activates all 4 gates.
    lane = lax.broadcasted_iota(jnp.int32, (B, G), 1)
    is_sig = lane < 3 * hidden
    act_scale = jnp.where(is_sig, 0.5, 1.0)    # pre- AND post-scale (same value)
    act_off = jnp.where(is_sig, 0.5, 0.0)

    def cell(gates, c_prev):
        act = jnp.tanh(gates * act_scale) * act_scale + act_off    # 1st (only) gate EUP
        i_g = act[:, 0 * hidden:1 * hidden]
        f_g = act[:, 1 * hidden:2 * hidden]
        o_g = act[:, 2 * hidden:3 * hidden]
        g_g = act[:, 3 * hidden:4 * hidden]
        c_new = f_g * c_prev + i_g * g_g
        h_new = o_g * jnp.tanh(c_new)                              # 2nd (last) EUP push
        return h_new, c_new

    zeros = jnp.zeros((B, hidden), jnp.float32)
    hs = [zeros] * num_layers
    cs = [zeros] * num_layers

    # ---- fully unrolled recurrence: static offsets, state stays in vregs.
    for t in range(T1):
        row = t * B                                  # static, multiple of 8
        # layer 0: only the recurrent matmul is on the serial path
        g0 = (xp_sc[row:row + B, :]
              + jnp.dot(hs[0], whh0, preferred_element_type=jnp.float32))
        hs[0], cs[0] = cell(g0, cs[0])
        x_l = hs[0]
        # remaining layers: one fused dot each ([x_l | h_prev] @ W_cat + b)
        for l, (wcat, bias_b) in enumerate(rest, start=1):
            xin = jnp.concatenate([x_l, hs[l]], axis=1)            # (B, 2H)
            g = jnp.dot(xin, wcat, preferred_element_type=jnp.float32) + bias_b
            hs[l], cs[l] = cell(g, cs[l])
            x_l = hs[l]
        # per-step vocab projection + aligned lane-dense (8, 128) unmasked store;
        # off the recurrence dependency chain -> overlaps with the next step.
        out_ref[row:row + B, :] = (
            jnp.dot(x_l, wlin, preferred_element_type=jnp.float32) + blin_b)


# ----------------------------- wrapper -----------------------------
def decoder_rnn_forward(params, features, code):
    # embeddings = dropout(embed(code)); dropout -> eval-mode identity
    emb = jnp.take(params["embed"], code, axis=0).astype(jnp.float32)        # (T, B, E)
    x = jnp.concatenate([features[None].astype(jnp.float32), emb], axis=0)   # (T+1, B, E)
    T1, B, E = x.shape

    # zero-pad batch to a full 8-sublane tile so all per-step slices are aligned
    B_pad = ((B + SUBLANE - 1) // SUBLANE) * SUBLANE
    if B_pad != B:
        x = jnp.pad(x, ((0, 0), (0, B_pad - B), (0, 0)))                     # zeros: finite
    x2d = x.reshape(T1 * B_pad, E)                                           # row = t*B_pad + b

    kernel = functools.partial(_decoder_kernel, hidden=HIDDEN_SIZE,
                               num_layers=NUM_LAYERS, seq_len=T1, batch=B_pad)
    out2d = pl.pallas_call(
        kernel,
        out_shape=jax.ShapeDtypeStruct((T1 * B_pad, VOCAB_PAD), jnp.float32),
        scratch_shapes=[
            pltpu.VMEM((T1 * B_pad, 4 * HIDDEN_SIZE), jnp.float32),  # hoisted X @ W_ih0
        ],
    )(x2d,
      params["w_ih0_t"], params["w_hh0_t"], params["b0"],
      params["w_cat_rest_t"], params["b_rest"],
      params["w_lin_pad_t"], params["b_lin_pad"])

    # slice off both the batch pad and the vocab pad
    return out2d.reshape(T1, B_pad, VOCAB_PAD)[:, :B, :VOCAB_SIZE]


# ----------------------------- params -----------------------------
def init_params(key):
    ks = jax.random.split(key, 3 + 3 * NUM_LAYERS)
    p = {}
    p["embed"] = 0.1 * jax.random.normal(ks[0], (VOCAB_SIZE, EMBED_SIZE), jnp.float32)

    # Linear(hidden -> vocab), padded to 128 output lanes (sliced back in the wrapper).
    w_lin = 0.1 * jax.random.normal(ks[1], (HIDDEN_SIZE, VOCAB_SIZE), jnp.float32)
    b_lin = 0.1 * jax.random.normal(ks[2], (VOCAB_SIZE,), jnp.float32)
    p["w_lin_pad_t"] = jnp.zeros((HIDDEN_SIZE, VOCAB_PAD),
                                 jnp.float32).at[:, :VOCAB_SIZE].set(w_lin)
    p["b_lin_pad"] = jnp.zeros((1, VOCAB_PAD), jnp.float32).at[:, :VOCAB_SIZE].set(b_lin)

    # LSTM weights.  NOTE for importing real PyTorch weights:
    #   * torch packs gate rows as [i, f, g, o]; this kernel uses [i, f, o, g]
    #     (sigmoid gates first) -> permute the 4H blocks, then transpose to (in, 4H).
    #   * the kernel uses a single combined bias b = b_ih + b_hh per layer.
    #   * for layers >= 1, W_ih^T and W_hh^T are vertically stacked into one (2H, 4H).
    # Here weights are random-initialised directly in the kernel's layout.
    w_cat_rest, b_rest = [], []
    for layer in range(NUM_LAYERS):
        in_dim = EMBED_SIZE if layer == 0 else HIDDEN_SIZE
        kw = ks[3 + 3 * layer: 3 + 3 * (layer + 1)]
        w_ih = 0.1 * jax.random.normal(kw[0], (in_dim, 4 * HIDDEN_SIZE), jnp.float32)
        w_hh = 0.1 * jax.random.normal(kw[1], (HIDDEN_SIZE, 4 * HIDDEN_SIZE), jnp.float32)
        b = (0.1 * jax.random.normal(kw[2], (4 * HIDDEN_SIZE,), jnp.float32)).reshape(1, -1)
        if layer == 0:
            p["w_ih0_t"], p["w_hh0_t"], p["b0"] = w_ih, w_hh, b
        else:
            w_cat_rest.append(jnp.concatenate([w_ih, w_hh], axis=0))  # (2H, 4H) fused
            b_rest.append(b)
    p["w_cat_rest_t"] = jnp.stack(w_cat_rest)   # (L-1, 2H, 4H)
    p["b_rest"] = jnp.stack(b_rest)             # (L-1, 1, 4H)
    return p


if __name__ == "__main__":
    key = jax.random.PRNGKey(0)
    k_param, k_feat, k_code = jax.random.split(key, 3)

    B, T = 2, 8
    params = init_params(k_param)
    features = jax.random.normal(k_feat, (B, EMBED_SIZE), jnp.float32)   # encoder output
    code = jax.random.randint(k_code, (T, B), 0, VOCAB_SIZE)             # time-major tokens

    out = decoder_rnn_forward(params, features, code)
    out = jax.block_until_ready(out)

    assert out.shape == (T + 1, B, VOCAB_SIZE), out.shape
    assert bool(jnp.all(jnp.isfinite(out)))
    print("KERNEL_OK")
</pallas_src>

<mosaic_0001>
module attributes {stable_mosaic.version = 11 : i64} {
  func.func @_decoder_kernel(%arg0: memref<72x32xf32, #tpu.memory_space<vmem>>, %arg1: memref<32x128xf32, #tpu.memory_space<vmem>>, %arg2: memref<32x128xf32, #tpu.memory_space<vmem>>, %arg3: memref<1x128xf32, #tpu.memory_space<vmem>>, %arg4: memref<1x64x128xf32, #tpu.memory_space<vmem>>, %arg5: memref<1x1x128xf32, #tpu.memory_space<vmem>>, %arg6: memref<32x128xf32, #tpu.memory_space<vmem>>, %arg7: memref<1x128xf32, #tpu.memory_space<vmem>>, %arg8: memref<72x128xf32, #tpu.memory_space<vmem>>, %arg9: memref<72x128xf32, #tpu.memory_space<vmem>>) attributes {dimension_semantics = [], scalar_prefetch = 0 : i64, scratch_operands = 1 : i64, tpu.core_type = #tpu.core_type<tc>} {
    %c0 = arith.constant 0 : index
    %c0_0 = arith.constant 0 : index
    %0 = vector.load %arg0[%c0, %c0_0] : memref<72x32xf32, #tpu.memory_space<vmem>>, vector<72x32xf32>
    %c0_1 = arith.constant 0 : index
    %c0_2 = arith.constant 0 : index
    %1 = vector.load %arg1[%c0_1, %c0_2] : memref<32x128xf32, #tpu.memory_space<vmem>>, vector<32x128xf32>
    %cst = arith.constant dense<0.000000e+00> : vector<72x128xf32>
    %2 = tpu.matmul %0, %1, %cst {dimension_numbers = #tpu.dot_dimension_numbers<[1], [0], [0], [1], [0, 0, 1, 1], [], []>} : vector<72x32xf32>, vector<32x128xf32>, vector<72x128xf32> -> vector<72x128xf32>
    %c0_3 = arith.constant 0 : index
    %c0_4 = arith.constant 0 : index
    %3 = vector.load %arg3[%c0_3, %c0_4] : memref<1x128xf32, #tpu.memory_space<vmem>>, vector<1x128xf32>
    %4 = vector.broadcast %3 : vector<1x128xf32> to vector<72x128xf32>
    %5 = arith.addf %2, %4 : vector<72x128xf32>
    %c0_5 = arith.constant 0 : index
    %c0_6 = arith.constant 0 : index
    %6 = vector.load %arg9[%c0_5, %c0_6] : memref<72x128xf32, #tpu.memory_space<vmem>>, vector<72x128xf32>
    tpu.vector_store %arg9[%c0_5, %c0_6], %5 {strides = array<i32>} : memref<72x128xf32, #tpu.memory_space<vmem>>, vector<72x128xf32>,
    %c0_7 = arith.constant 0 : index
    %c0_8 = arith.constant 0 : index
    %7 = vector.load %arg2[%c0_7, %c0_8] : memref<32x128xf32, #tpu.memory_space<vmem>>, vector<32x128xf32>
    %c0_9 = arith.constant 0 : index
    %c0_10 = arith.constant 0 : index
    %c0_11 = arith.constant 0 : index
    %8 = vector.load %arg4[%c0_9, %c0_10, %c0_11] : memref<1x64x128xf32, #tpu.memory_space<vmem>>, vector<1x64x128xf32>
    %9 = vector.shape_cast %8 : vector<1x64x128xf32> to vector<64x128xf32>
    %c0_12 = arith.constant 0 : index
    %c0_13 = arith.constant 0 : index
    %c0_14 = arith.constant 0 : index
    %10 = vector.load %arg5[%c0_12, %c0_13, %c0_14] : memref<1x1x128xf32, #tpu.memory_space<vmem>>, vector<1x1x128xf32>
    %11 = vector.shape_cast %10 : vector<1x1x128xf32> to vector<1x128xf32>
    %12 = vector.shape_cast %11 : vector<1x128xf32> to vector<1x128xf32>
    %13 = vector.broadcast %12 : vector<1x128xf32> to vector<8x128xf32>
    %c0_15 = arith.constant 0 : index
    %c0_16 = arith.constant 0 : index
    %14 = vector.load %arg6[%c0_15, %c0_16] : memref<32x128xf32, #tpu.memory_space<vmem>>, vector<32x128xf32>
    %c0_17 = arith.constant 0 : index
    %c0_18 = arith.constant 0 : index
    %15 = vector.load %arg7[%c0_17, %c0_18] : memref<1x128xf32, #tpu.memory_space<vmem>>, vector<1x128xf32>
    %16 = vector.shape_cast %15 : vector<1x128xf32> to vector<1x128xf32>
    %17 = vector.broadcast %16 : vector<1x128xf32> to vector<8x128xf32>
    %18 = tpu.iota {dimensions = array<i32: 1>} : vector<8x128xi32>
    %c96_i32 = arith.constant 96 : i32
    %19 = vector.broadcast %c96_i32 : i32 to vector<8x128xi32>
    %20 = arith.cmpi slt, %18, %19 : vector<8x128xi32>
    %cst_19 = arith.constant 5.000000e-01 : f32
    %cst_20 = arith.constant 1.000000e+00 : f32
    %21 = vector.broadcast %cst_19 : f32 to vector<8x128xf32>
    %22 = vector.broadcast %cst_20 : f32 to vector<8x128xf32>
    %23 = arith.select %20, %21, %22 : vector<8x128xi1>, vector<8x128xf32>
    %cst_21 = arith.constant 5.000000e-01 : f32
    %cst_22 = arith.constant 0.000000e+00 : f32
    %24 = vector.broadcast %cst_21 : f32 to vector<8x128xf32>
    %25 = vector.broadcast %cst_22 : f32 to vector<8x128xf32>
    %26 = arith.select %20, %24, %25 : vector<8x128xi1>, vector<8x128xf32>
    %cst_23 = arith.constant 0.000000e+00 : f32
    %27 = vector.broadcast %cst_23 : f32 to vector<8x32xf32>
    %c0_24 = arith.constant 0 : index
    %c0_25 = arith.constant 0 : index
    %28 = vector.load %arg9[%c0_24, %c0_25] : memref<72x128xf32, #tpu.memory_space<vmem>>, vector<8x128xf32>
    %cst_26 = arith.constant dense<0.000000e+00> : vector<8x128xf32>
    %29 = tpu.matmul %27, %7, %cst_26 {dimension_numbers = #tpu.dot_dimension_numbers<[1], [0], [0], [1], [0, 0, 1, 1], [], []>} : vector<8x32xf32>, vector<32x128xf32>, vector<8x128xf32> -> vector<8x128xf32>
    %30 = arith.addf %28, %29 : vector<8x128xf32>
    %31 = arith.mulf %30, %23 : vector<8x128xf32>
    %32 = math.tanh %31 : vector<8x128xf32>
    %33 = arith.mulf %32, %23 : vector<8x128xf32>
    %34 = arith.addf %33, %26 : vector<8x128xf32>
    %35 = vector.extract_strided_slice %34 {offsets = [0, 0], sizes = [8, 32], strides = [1, 1]} : vector<8x128xf32> to vector<8x32xf32>
    %36 = vector.extract_strided_slice %34 {offsets = [0, 32], sizes = [8, 32], strides = [1, 1]} : vector<8x128xf32> to vector<8x32xf32>
    %37 = vector.extract_strided_slice %34 {offsets = [0, 64], sizes = [8, 32], strides = [1, 1]} : vector<8x128xf32> to vector<8x32xf32>
    %38 = vector.extract_strided_slice %34 {offsets = [0, 96], sizes = [8, 32], strides = [1, 1]} : vector<8x128xf32> to vector<8x32xf32>
    %39 = arith.mulf %36, %27 : vector<8x32xf32>
    %40 = arith.mulf %35, %38 : vector<8x32xf32>
    %41 = arith.addf %39, %40 : vector<8x32xf32>
    %42 = math.tanh %41 : vector<8x32xf32>
    %43 = arith.mulf %37, %42 : vector<8x32xf32>
    %44 = tpu.concatenate %43, %27 in 1 : vector<8x32xf32>, vector<8x32xf32> -> vector<8x64xf32>
    %cst_27 = arith.constant dense<0.000000e+00> : vector<8x128xf32>
    %45 = tpu.matmul %44, %9, %cst_27 {dimension_numbers = #tpu.dot_dimension_numbers<[1], [0], [0], [1], [0, 0, 1, 1], [], []>} : vector<8x64xf32>, vector<64x128xf32>, vector<8x128xf32> -> vector<8x128xf32>
    %46 = arith.addf %45, %13 : vector<8x128xf32>
    %47 = arith.mulf %46, %23 : vector<8x128xf32>
    %48 = math.tanh %47 : vector<8x128xf32>
    %49 = arith.mulf %48, %23 : vector<8x128xf32>
    %50 = arith.addf %49, %26 : vector<8x128xf32>
    %51 = vector.extract_strided_slice %50 {offsets = [0, 0], sizes = [8, 32], strides = [1, 1]} : vector<8x128xf32> to vector<8x32xf32>
    %52 = vector.extract_strided_slice %50 {offsets = [0, 32], sizes = [8, 32], strides = [1, 1]} : vector<8x128xf32> to vector<8x32xf32>
    %53 = vector.extract_strided_slice %50 {offsets = [0, 64], sizes = [8, 32], strides = [1, 1]} : vector<8x128xf32> to vector<8x32xf32>
    %54 = vector.extract_strided_slice %50 {offsets = [0, 96], sizes = [8, 32], strides = [1, 1]} : vector<8x128xf32> to vector<8x32xf32>
    %55 = arith.mulf %52, %27 : vector<8x32xf32>
    %56 = arith.mulf %51, %54 : vector<8x32xf32>
    %57 = arith.addf %55, %56 : vector<8x32xf32>
    %58 = math.tanh %57 : vector<8x32xf32>
    %59 = arith.mulf %53, %58 : vector<8x32xf32>
    %cst_28 = arith.constant dense<0.000000e+00> : vector<8x128xf32>
    %60 = tpu.matmul %59, %14, %cst_28 {dimension_numbers = #tpu.dot_dimension_numbers<[1], [0], [0], [1], [0, 0, 1, 1], [], []>} : vector<8x32xf32>, vector<32x128xf32>, vector<8x128xf32> -> vector<8x128xf32>
    %61 = arith.addf %60, %17 : vector<8x128xf32>
    %c0_29 = arith.constant 0 : index
    %c0_30 = arith.constant 0 : index
    %62 = vector.load %arg8[%c0_29, %c0_30] : memref<72x128xf32, #tpu.memory_space<vmem>>, vector<8x128xf32>
    tpu.vector_store %arg8[%c0_29, %c0_30], %61 {strides = array<i32>} : memref<72x128xf32, #tpu.memory_space<vmem>>, vector<8x128xf32>,
    %c8 = arith.constant 8 : index
    %c0_31 = arith.constant 0 : index
    %63 = vector.load %arg9[%c8, %c0_31] : memref<72x128xf32, #tpu.memory_space<vmem>>, vector<8x128xf32>
    %cst_32 = arith.constant dense<0.000000e+00> : vector<8x128xf32>
    %64 = tpu.matmul %43, %7, %cst_32 {dimension_numbers = #tpu.dot_dimension_numbers<[1], [0], [0], [1], [0, 0, 1, 1], [], []>} : vector<8x32xf32>, vector<32x128xf32>, vector<8x128xf32> -> vector<8x128xf32>
    %65 = arith.addf %63, %64 : vector<8x128xf32>
    %66 = arith.mulf %65, %23 : vector<8x128xf32>
    %67 = math.tanh %66 : vector<8x128xf32>
    %68 = arith.mulf %67, %23 : vector<8x128xf32>
    %69 = arith.addf %68, %26 : vector<8x128xf32>
    %70 = vector.extract_strided_slice %69 {offsets = [0, 0], sizes = [8, 32], strides = [1, 1]} : vector<8x128xf32> to vector<8x32xf32>
    %71 = vector.extract_strided_slice %69 {offsets = [0, 32], sizes = [8, 32], strides = [1, 1]} : vector<8x128xf32> to vector<8x32xf32>
    %72 = vector.extract_strided_slice %69 {offsets = [0, 64], sizes = [8, 32], strides = [1, 1]} : vector<8x128xf32> to vector<8x32xf32>
    %73 = vector.extract_strided_slice %69 {offsets = [0, 96], sizes = [8, 32], strides = [1, 1]} : vector<8x128xf32> to vector<8x32xf32>
    %74 = arith.mulf %71, %41 : vector<8x32xf32>
    %75 = arith.mulf %70, %73 : vector<8x32xf32>
    %76 = arith.addf %74, %75 : vector<8x32xf32>
    %77 = math.tanh %76 : vector<8x32xf32>
    %78 = arith.mulf %72, %77 : vector<8x32xf32>
    %79 = tpu.concatenate %78, %59 in 1 : vector<8x32xf32>, vector<8x32xf32> -> vector<8x64xf32>
    %cst_33 = arith.constant dense<0.000000e+00> : vector<8x128xf32>
    %80 = tpu.matmul %79, %9, %cst_33 {dimension_numbers = #tpu.dot_dimension_numbers<[1], [0], [0], [1], [0, 0, 1, 1], [], []>} : vector<8x64xf32>, vector<64x128xf32>, vector<8x128xf32> -> vector<8x128xf32>
    %81 = arith.addf %80, %13 : vector<8x128xf32>
    %82 = arith.mulf %81, %23 : vector<8x128xf32>
    %83 = math.tanh %82 : vector<8x128xf32>
    %84 = arith.mulf %83, %23 : vector<8x128xf32>
    %85 = arith.addf %84, %26 : vector<8x128xf32>
    %86 = vector.extract_strided_slice %85 {offsets = [0, 0], sizes = [8, 32], strides = [1, 1]} : vector<8x128xf32> to vector<8x32xf32>
    %87 = vector.extract_strided_slice %85 {offsets = [0, 32], sizes = [8, 32], strides = [1, 1]} : vector<8x128xf32> to vector<8x32xf32>
    %88 = vector.extract_strided_slice %85 {offsets = [0, 64], sizes = [8, 32], strides = [1, 1]} : vector<8x128xf32> to vector<8x32xf32>
    %89 = vector.extract_strided_slice %85 {offsets = [0, 96], sizes = [8, 32], strides = [1, 1]} : vector<8x128xf32> to vector<8x32xf32>
    %90 = arith.mulf %87, %57 : vector<8x32xf32>
    %91 = arith.mulf %86, %89 : vector<8x32xf32>
    %92 = arith.addf %90, %91 : vector<8x32xf32>
    %93 = math.tanh %92 : vector<8x32xf32>
    %94 = arith.mulf %88, %93 : vector<8x32xf32>
    %cst_34 = arith.constant dense<0.000000e+00> : vector<8x128xf32>
    %95 = tpu.matmul %94, %14, %cst_34 {dimension_numbers = #tpu.dot_dimension_numbers<[1], [0], [0], [1], [0, 0, 1, 1], [], []>} : vector<8x32xf32>, vector<32x128xf32>, vector<8x128xf32> -> vector<8x128xf32>
    %96 = arith.addf %95, %17 : vector<8x128xf32>
    %c8_35 = arith.constant 8 : index
    %c0_36 = arith.constant 0 : index
    %97 = vector.load %arg8[%c8_35, %c0_36] : memref<72x128xf32, #tpu.memory_space<vmem>>, vector<8x128xf32>
    tpu.vector_store %arg8[%c8_35, %c0_36], %96 {strides = array<i32>} : memref<72x128xf32, #tpu.memory_space<vmem>>, vector<8x128xf32>,
    %c16 = arith.constant 16 : index
    %c0_37 = arith.constant 0 : index
    %98 = vector.load %arg9[%c16, %c0_37] : memref<72x128xf32, #tpu.memory_space<vmem>>, vector<8x128xf32>
    %cst_38 = arith.constant dense<0.000000e+00> : vector<8x128xf32>
    %99 = tpu.matmul %78, %7, %cst_38 {dimension_numbers = #tpu.dot_dimension_numbers<[1], [0], [0], [1], [0, 0, 1, 1], [], []>} : vector<8x32xf32>, vector<32x128xf32>, vector<8x128xf32> -> vector<8x128xf32>
    %100 = arith.addf %98, %99 : vector<8x128xf32>
    %101 = arith.mulf %100, %23 : vector<8x128xf32>
    %102 = math.tanh %101 : vector<8x128xf32>
    %103 = arith.mulf %102, %23 : vector<8x128xf32>
    %104 = arith.addf %103, %26 : vector<8x128xf32>
    %105 = vector.extract_strided_slice %104 {offsets = [0, 0], sizes = [8, 32], strides = [1, 1]} : vector<8x128xf32> to vector<8x32xf32>
    %106 = vector.extract_strided_slice %104 {offsets = [0, 32], sizes = [8, 32], strides = [1, 1]} : vector<8x128xf32> to vector<8x32xf32>
    %107 = vector.extract_strided_slice %104 {offsets = [0, 64], sizes = [8, 32], strides = [1, 1]} : vector<8x128xf32> to vector<8x32xf32>
    %108 = vector.extract_strided_slice %104 {offsets = [0, 96], sizes = [8, 32], strides = [1, 1]} : vector<8x128xf32> to vector<8x32xf32>
    %109 = arith.mulf %106, %76 : vector<8x32xf32>
    %110 = arith.mulf %105, %108 : vector<8x32xf32>
    %111 = arith.addf %109, %110 : vector<8x32xf32>
    %112 = math.tanh %111 : vector<8x32xf32>
    %113 = arith.mulf %107, %112 : vector<8x32xf32>
    %114 = tpu.concatenate %113, %94 in 1 : vector<8x32xf32>, vector<8x32xf32> -> vector<8x64xf32>
    %cst_39 = arith.constant dense<0.000000e+00> : vector<8x128xf32>
    %115 = tpu.matmul %114, %9, %cst_39 {dimension_numbers = #tpu.dot_dimension_numbers<[1], [0], [0], [1], [0, 0, 1, 1], [], []>} : vector<8x64xf32>, vector<64x128xf32>, vector<8x128xf32> -> vector<8x128xf32>
    %116 = arith.addf %115, %13 : vector<8x128xf32>
    %117 = arith.mulf %116, %23 : vector<8x128xf32>
    %118 = math.tanh %117 : vector<8x128xf32>
    %119 = arith.mulf %118, %23 : vector<8x128xf32>
    %120 = arith.addf %119, %26 : vector<8x128xf32>
    %121 = vector.extract_strided_slice %120 {offsets = [0, 0], sizes = [8, 32], strides = [1, 1]} : vector<8x128xf32> to vector<8x32xf32>
    %122 = vector.extract_strided_slice %120 {offsets = [0, 32], sizes = [8, 32], strides = [1, 1]} : vector<8x128xf32> to vector<8x32xf32>
    %123 = vector.extract_strided_slice %120 {offsets = [0, 64], sizes = [8, 32], strides = [1, 1]} : vector<8x128xf32> to vector<8x32xf32>
    %124 = vector.extract_strided_slice %120 {offsets = [0, 96], sizes = [8, 32], strides = [1, 1]} : vector<8x128xf32> to vector<8x32xf32>
    %125 = arith.mulf %122, %92 : vector<8x32xf32>
    %126 = arith.mulf %121, %124 : vector<8x32xf32>
    %127 = arith.addf %125, %126 : vector<8x32xf32>
    %128 = math.tanh %127 : vector<8x32xf32>
    %129 = arith.mulf %123, %128 : vector<8x32xf32>
    %cst_40 = arith.constant dense<0.000000e+00> : vector<8x128xf32>
    %130 = tpu.matmul %129, %14, %cst_40 {dimension_numbers = #tpu.dot_dimension_numbers<[1], [0], [0], [1], [0, 0, 1, 1], [], []>} : vector<8x32xf32>, vector<32x128xf32>, vector<8x128xf32> -> vector<8x128xf32>
    %131 = arith.addf %130, %17 : vector<8x128xf32>
    %c16_41 = arith.constant 16 : index
    %c0_42 = arith.constant 0 : index
    %132 = vector.load %arg8[%c16_41, %c0_42] : memref<72x128xf32, #tpu.memory_space<vmem>>, vector<8x128xf32>
    tpu.vector_store %arg8[%c16_41, %c0_42], %131 {strides = array<i32>} : memref<72x128xf32, #tpu.memory_space<vmem>>, vector<8x128xf32>,
    %c24 = arith.constant 24 : index
    %c0_43 = arith.constant 0 : index
    %133 = vector.load %arg9[%c24, %c0_43] : memref<72x128xf32, #tpu.memory_space<vmem>>, vector<8x128xf32>
    %cst_44 = arith.constant dense<0.000000e+00> : vector<8x128xf32>
    %134 = tpu.matmul %113, %7, %cst_44 {dimension_numbers = #tpu.dot_dimension_numbers<[1], [0], [0], [1], [0, 0, 1, 1], [], []>} : vector<8x32xf32>, vector<32x128xf32>, vector<8x128xf32> -> vector<8x128xf32>
    %135 = arith.addf %133, %134 : vector<8x128xf32>
    %136 = arith.mulf %135, %23 : vector<8x128xf32>
    %137 = math.tanh %136 : vector<8x128xf32>
    %138 = arith.mulf %137, %23 : vector<8x128xf32>
    %139 = arith.addf %138, %26 : vector<8x128xf32>
    %140 = vector.extract_strided_slice %139 {offsets = [0, 0], sizes = [8, 32], strides = [1, 1]} : vector<8x128xf32> to vector<8x32xf32>
    %141 = vector.extract_strided_slice %139 {offsets = [0, 32], sizes = [8, 32], strides = [1, 1]} : vector<8x128xf32> to vector<8x32xf32>
    %142 = vector.extract_strided_slice %139 {offsets = [0, 64], sizes = [8, 32], strides = [1, 1]} : vector<8x128xf32> to vector<8x32xf32>
    %143 = vector.extract_strided_slice %139 {offsets = [0, 96], sizes = [8, 32], strides = [1, 1]} : vector<8x128xf32> to vector<8x32xf32>
    %144 = arith.mulf %141, %111 : vector<8x32xf32>
    %145 = arith.mulf %140, %143 : vector<8x32xf32>
    %146 = arith.addf %144, %145 : vector<8x32xf32>
    %147 = math.tanh %146 : vector<8x32xf32>
    %148 = arith.mulf %142, %147 : vector<8x32xf32>
    %149 = tpu.concatenate %148, %129 in 1 : vector<8x32xf32>, vector<8x32xf32> -> vector<8x64xf32>
    %cst_45 = arith.constant dense<0.000000e+00> : vector<8x128xf32>
    %150 = tpu.matmul %149, %9, %cst_45 {dimension_numbers = #tpu.dot_dimension_numbers<[1], [0], [0], [1], [0, 0, 1, 1], [], []>} : vector<8x64xf32>, vector<64x128xf32>, vector<8x128xf32> -> vector<8x128xf32>
    %151 = arith.addf %150, %13 : vector<8x128xf32>
    %152 = arith.mulf %151, %23 : vector<8x128xf32>
    %153 = math.tanh %152 : vector<8x128xf32>
    %154 = arith.mulf %153, %23 : vector<8x128xf32>
    %155 = arith.addf %154, %26 : vector<8x128xf32>
    %156 = vector.extract_strided_slice %155 {offsets = [0, 0], sizes = [8, 32], strides = [1, 1]} : vector<8x128xf32> to vector<8x32xf32>
    %157 = vector.extract_strided_slice %155 {offsets = [0, 32], sizes = [8, 32], strides = [1, 1]} : vector<8x128xf32> to vector<8x32xf32>
    %158 = vector.extract_strided_slice %155 {offsets = [0, 64], sizes = [8, 32], strides = [1, 1]} : vector<8x128xf32> to vector<8x32xf32>
    %159 = vector.extract_strided_slice %155 {offsets = [0, 96], sizes = [8, 32], strides = [1, 1]} : vector<8x128xf32> to vector<8x32xf32>
    %160 = arith.mulf %157, %127 : vector<8x32xf32>
    %161 = arith.mulf %156, %159 : vector<8x32xf32>
    %162 = arith.addf %160, %161 : vector<8x32xf32>
    %163 = math.tanh %162 : vector<8x32xf32>
    %164 = arith.mulf %158, %163 : vector<8x32xf32>
    %cst_46 = arith.constant dense<0.000000e+00> : vector<8x128xf32>
    %165 = tpu.matmul %164, %14, %cst_46 {dimension_numbers = #tpu.dot_dimension_numbers<[1], [0], [0], [1], [0, 0, 1, 1], [], []>} : vector<8x32xf32>, vector<32x128xf32>, vector<8x128xf32> -> vector<8x128xf32>
    %166 = arith.addf %165, %17 : vector<8x128xf32>
    %c24_47 = arith.constant 24 : index
    %c0_48 = arith.constant 0 : index
    %167 = vector.load %arg8[%c24_47, %c0_48] : memref<72x128xf32, #tpu.memory_space<vmem>>, vector<8x128xf32>
    tpu.vector_store %arg8[%c24_47, %c0_48], %166 {strides = array<i32>} : memref<72x128xf32, #tpu.memory_space<vmem>>, vector<8x128xf32>,
    %c32 = arith.constant 32 : index
    %c0_49 = arith.constant 0 : index
    %168 = vector.load %arg9[%c32, %c0_49] : memref<72x128xf32, #tpu.memory_space<vmem>>, vector<8x128xf32>
    %cst_50 = arith.constant dense<0.000000e+00> : vector<8x128xf32>
    %169 = tpu.matmul %148, %7, %cst_50 {dimension_numbers = #tpu.dot_dimension_numbers<[1], [0], [0], [1], [0, 0, 1, 1], [], []>} : vector<8x32xf32>, vector<32x128xf32>, vector<8x128xf32> -> vector<8x128xf32>
    %170 = arith.addf %168, %169 : vector<8x128xf32>
    %171 = arith.mulf %170, %23 : vector<8x128xf32>
    %172 = math.tanh %171 : vector<8x128xf32>
    %173 = arith.mulf %172, %23 : vector<8x128xf32>
    %174 = arith.addf %173, %26 : vector<8x128xf32>
    %175 = vector.extract_strided_slice %174 {offsets = [0, 0], sizes = [8, 32], strides = [1, 1]} : vector<8x128xf32> to vector<8x32xf32>
    %176 = vector.extract_strided_slice %174 {offsets = [0, 32], sizes = [8, 32], strides = [1, 1]} : vector<8x128xf32> to vector<8x32xf32>
    %177 = vector.extract_strided_slice %174 {offsets = [0, 64], sizes = [8, 32], strides = [1, 1]} : vector<8x128xf32> to vector<8x32xf32>
    %178 = vector.extract_strided_slice %174 {offsets = [0, 96], sizes = [8, 32], strides = [1, 1]} : vector<8x128xf32> to vector<8x32xf32>
    %179 = arith.mulf %176, %146 : vector<8x32xf32>
    %180 = arith.mulf %175, %178 : vector<8x32xf32>
    %181 = arith.addf %179, %180 : vector<8x32xf32>
    %182 = math.tanh %181 : vector<8x32xf32>
    %183 = arith.mulf %177, %182 : vector<8x32xf32>
    %184 = tpu.concatenate %183, %164 in 1 : vector<8x32xf32>, vector<8x32xf32> -> vector<8x64xf32>
    %cst_51 = arith.constant dense<0.000000e+00> : vector<8x128xf32>
    %185 = tpu.matmul %184, %9, %cst_51 {dimension_numbers = #tpu.dot_dimension_numbers<[1], [0], [0], [1], [0, 0, 1, 1], [], []>} : vector<8x64xf32>, vector<64x128xf32>, vector<8x128xf32> -> vector<8x128xf32>
    %186 = arith.addf %185, %13 : vector<8x128xf32>
    %187 = arith.mulf %186, %23 : vector<8x128xf32>
    %188 = math.tanh %187 : vector<8x128xf32>
    %189 = arith.mulf %188, %23 : vector<8x128xf32>
    %190 = arith.addf %189, %26 : vector<8x128xf32>
    %191 = vector.extract_strided_slice %190 {offsets = [0, 0], sizes = [8, 32], strides = [1, 1]} : vector<8x128xf32> to vector<8x32xf32>
    %192 = vector.extract_strided_slice %190 {offsets = [0, 32], sizes = [8, 32], strides = [1, 1]} : vector<8x128xf32> to vector<8x32xf32>
    %193 = vector.extract_strided_slice %190 {offsets = [0, 64], sizes = [8, 32], strides = [1, 1]} : vector<8x128xf32> to vector<8x32xf32>
    %194 = vector.extract_strided_slice %190 {offsets = [0, 96], sizes = [8, 32], strides = [1, 1]} : vector<8x128xf32> to vector<8x32xf32>
    %195 = arith.mulf %192, %162 : vector<8x32xf32>
    %196 = arith.mulf %191, %194 : vector<8x32xf32>
    %197 = arith.addf %195, %196 : vector<8x32xf32>
    %198 = math.tanh %197 : vector<8x32xf32>
    %199 = arith.mulf %193, %198 : vector<8x32xf32>
    %cst_52 = arith.constant dense<0.000000e+00> : vector<8x128xf32>
    %200 = tpu.matmul %199, %14, %cst_52 {dimension_numbers = #tpu.dot_dimension_numbers<[1], [0], [0], [1], [0, 0, 1, 1], [], []>} : vector<8x32xf32>, vector<32x128xf32>, vector<8x128xf32> -> vector<8x128xf32>
    %201 = arith.addf %200, %17 : vector<8x128xf32>
    %c32_53 = arith.constant 32 : index
    %c0_54 = arith.constant 0 : index
    %202 = vector.load %arg8[%c32_53, %c0_54] : memref<72x128xf32, #tpu.memory_space<vmem>>, vector<8x128xf32>
    tpu.vector_store %arg8[%c32_53, %c0_54], %201 {strides = array<i32>} : memref<72x128xf32, #tpu.memory_space<vmem>>, vector<8x128xf32>,
    %c40 = arith.constant 40 : index
    %c0_55 = arith.constant 0 : index
    %203 = vector.load %arg9[%c40, %c0_55] : memref<72x128xf32, #tpu.memory_space<vmem>>, vector<8x128xf32>
    %cst_56 = arith.constant dense<0.000000e+00> : vector<8x128xf32>
    %204 = tpu.matmul %183, %7, %cst_56 {dimension_numbers = #tpu.dot_dimension_numbers<[1], [0], [0], [1], [0, 0, 1, 1], [], []>} : vector<8x32xf32>, vector<32x128xf32>, vector<8x128xf32> -> vector<8x128xf32>
    %205 = arith.addf %203, %204 : vector<8x128xf32>
    %206 = arith.mulf %205, %23 : vector<8x128xf32>
    %207 = math.tanh %206 : vector<8x128xf32>
    %208 = arith.mulf %207, %23 : vector<8x128xf32>
    %209 = arith.addf %208, %26 : vector<8x128xf32>
    %210 = vector.extract_strided_slice %209 {offsets = [0, 0], sizes = [8, 32], strides = [1, 1]} : vector<8x128xf32> to vector<8x32xf32>
    %211 = vector.extract_strided_slice %209 {offsets = [0, 32], sizes = [8, 32], strides = [1, 1]} : vector<8x128xf32> to vector<8x32xf32>
    %212 = vector.extract_strided_slice %209 {offsets = [0, 64], sizes = [8, 32], strides = [1, 1]} : vector<8x128xf32> to vector<8x32xf32>
    %213 = vector.extract_strided_slice %209 {offsets = [0, 96], sizes = [8, 32], strides = [1, 1]} : vector<8x128xf32> to vector<8x32xf32>
    %214 = arith.mulf %211, %181 : vector<8x32xf32>
    %215 = arith.mulf %210, %213 : vector<8x32xf32>
    %216 = arith.addf %214, %215 : vector<8x32xf32>
    %217 = math.tanh %216 : vector<8x32xf32>
    %218 = arith.mulf %212, %217 : vector<8x32xf32>
    %219 = tpu.concatenate %218, %199 in 1 : vector<8x32xf32>, vector<8x32xf32> -> vector<8x64xf32>
    %cst_57 = arith.constant dense<0.000000e+00> : vector<8x128xf32>
    %220 = tpu.matmul %219, %9, %cst_57 {dimension_numbers = #tpu.dot_dimension_numbers<[1], [0], [0], [1], [0, 0, 1, 1], [], []>} : vector<8x64xf32>, vector<64x128xf32>, vector<8x128xf32> -> vector<8x128xf32>
    %221 = arith.addf %220, %13 : vector<8x128xf32>
    %222 = arith.mulf %221, %23 : vector<8x128xf32>
    %223 = math.tanh %222 : vector<8x128xf32>
    %224 = arith.mulf %223, %23 : vector<8x128xf32>
    %225 = arith.addf %224, %26 : vector<8x128xf32>
    %226 = vector.extract_strided_slice %225 {offsets = [0, 0], sizes = [8, 32], strides = [1, 1]} : vector<8x128xf32> to vector<8x32xf32>
    %227 = vector.extract_strided_slice %225 {offsets = [0, 32], sizes = [8, 32], strides = [1, 1]} : vector<8x128xf32> to vector<8x32xf32>
    %228 = vector.extract_strided_slice %225 {offsets = [0, 64], sizes = [8, 32], strides = [1, 1]} : vector<8x128xf32> to vector<8x32xf32>
    %229 = vector.extract_strided_slice %225 {offsets = [0, 96], sizes = [8, 32], strides = [1, 1]} : vector<8x128xf32> to vector<8x32xf32>
    %230 = arith.mulf %227, %197 : vector<8x32xf32>
    %231 = arith.mulf %226, %229 : vector<8x32xf32>
    %232 = arith.addf %230, %231 : vector<8x32xf32>
    %233 = math.tanh %232 : vector<8x32xf32>
    %234 = arith.mulf %228, %233 : vector<8x32xf32>
    %cst_58 = arith.constant dense<0.000000e+00> : vector<8x128xf32>
    %235 = tpu.matmul %234, %14, %cst_58 {dimension_numbers = #tpu.dot_dimension_numbers<[1], [0], [0], [1], [0, 0, 1, 1], [], []>} : vector<8x32xf32>, vector<32x128xf32>, vector<8x128xf32> -> vector<8x128xf32>
    %236 = arith.addf %235, %17 : vector<8x128xf32>
    %c40_59 = arith.constant 40 : index
    %c0_60 = arith.constant 0 : index
    %237 = vector.load %arg8[%c40_59, %c0_60] : memref<72x128xf32, #tpu.memory_space<vmem>>, vector<8x128xf32>
    tpu.vector_store %arg8[%c40_59, %c0_60], %236 {strides = array<i32>} : memref<72x128xf32, #tpu.memory_space<vmem>>, vector<8x128xf32>,
    %c48 = arith.constant 48 : index
    %c0_61 = arith.constant 0 : index
    %238 = vector.load %arg9[%c48, %c0_61] : memref<72x128xf32, #tpu.memory_space<vmem>>, vector<8x128xf32>
    %cst_62 = arith.constant dense<0.000000e+00> : vector<8x128xf32>
    %239 = tpu.matmul %218, %7, %cst_62 {dimension_numbers = #tpu.dot_dimension_numbers<[1], [0], [0], [1], [0, 0, 1, 1], [], []>} : vector<8x32xf32>, vector<32x128xf32>, vector<8x128xf32> -> vector<8x128xf32>
    %240 = arith.addf %238, %239 : vector<8x128xf32>
    %241 = arith.mulf %240, %23 : vector<8x128xf32>
    %242 = math.tanh %241 : vector<8x128xf32>
    %243 = arith.mulf %242, %23 : vector<8x128xf32>
    %244 = arith.addf %243, %26 : vector<8x128xf32>
    %245 = vector.extract_strided_slice %244 {offsets = [0, 0], sizes = [8, 32], strides = [1, 1]} : vector<8x128xf32> to vector<8x32xf32>
    %246 = vector.extract_strided_slice %244 {offsets = [0, 32], sizes = [8, 32], strides = [1, 1]} : vector<8x128xf32> to vector<8x32xf32>
    %247 = vector.extract_strided_slice %244 {offsets = [0, 64], sizes = [8, 32], strides = [1, 1]} : vector<8x128xf32> to vector<8x32xf32>
    %248 = vector.extract_strided_slice %244 {offsets = [0, 96], sizes = [8, 32], strides = [1, 1]} : vector<8x128xf32> to vector<8x32xf32>
    %249 = arith.mulf %246, %216 : vector<8x32xf32>
    %250 = arith.mulf %245, %248 : vector<8x32xf32>
    %251 = arith.addf %249, %250 : vector<8x32xf32>
    %252 = math.tanh %251 : vector<8x32xf32>
    %253 = arith.mulf %247, %252 : vector<8x32xf32>
    %254 = tpu.concatenate %253, %234 in 1 : vector<8x32xf32>, vector<8x32xf32> -> vector<8x64xf32>
    %cst_63 = arith.constant dense<0.000000e+00> : vector<8x128xf32>
    %255 = tpu.matmul %254, %9, %cst_63 {dimension_numbers = #tpu.dot_dimension_numbers<[1], [0], [0], [1], [0, 0, 1, 1], [], []>} : vector<8x64xf32>, vector<64x128xf32>, vector<8x128xf32> -> vector<8x128xf32>
    %256 = arith.addf %255, %13 : vector<8x128xf32>
    %257 = arith.mulf %256, %23 : vector<8x128xf32>
    %258 = math.tanh %257 : vector<8x128xf32>
    %259 = arith.mulf %258, %23 : vector<8x128xf32>
    %260 = arith.addf %259, %26 : vector<8x128xf32>
    %261 = vector.extract_strided_slice %260 {offsets = [0, 0], sizes = [8, 32], strides = [1, 1]} : vector<8x128xf32> to vector<8x32xf32>
    %262 = vector.extract_strided_slice %260 {offsets = [0, 32], sizes = [8, 32], strides = [1, 1]} : vector<8x128xf32> to vector<8x32xf32>
    %263 = vector.extract_strided_slice %260 {offsets = [0, 64], sizes = [8, 32], strides = [1, 1]} : vector<8x128xf32> to vector<8x32xf32>
    %264 = vector.extract_strided_slice %260 {offsets = [0, 96], sizes = [8, 32], strides = [1, 1]} : vector<8x128xf32> to vector<8x32xf32>
    %265 = arith.mulf %262, %232 : vector<8x32xf32>
    %266 = arith.mulf %261, %264 : vector<8x32xf32>
    %267 = arith.addf %265, %266 : vector<8x32xf32>
    %268 = math.tanh %267 : vector<8x32xf32>
    %269 = arith.mulf %263, %268 : vector<8x32xf32>
    %cst_64 = arith.constant dense<0.000000e+00> : vector<8x128xf32>
    %270 = tpu.matmul %269, %14, %cst_64 {dimension_numbers = #tpu.dot_dimension_numbers<[1], [0], [0], [1], [0, 0, 1, 1], [], []>} : vector<8x32xf32>, vector<32x128xf32>, vector<8x128xf32> -> vector<8x128xf32>
    %271 = arith.addf %270, %17 : vector<8x128xf32>
    %c48_65 = arith.constant 48 : index
    %c0_66 = arith.constant 0 : index
    %272 = vector.load %arg8[%c48_65, %c0_66] : memref<72x128xf32, #tpu.memory_space<vmem>>, vector<8x128xf32>
    tpu.vector_store %arg8[%c48_65, %c0_66], %271 {strides = array<i32>} : memref<72x128xf32, #tpu.memory_space<vmem>>, vector<8x128xf32>,
    %c56 = arith.constant 56 : index
    %c0_67 = arith.constant 0 : index
    %273 = vector.load %arg9[%c56, %c0_67] : memref<72x128xf32, #tpu.memory_space<vmem>>, vector<8x128xf32>
    %cst_68 = arith.constant dense<0.000000e+00> : vector<8x128xf32>
    %274 = tpu.matmul %253, %7, %cst_68 {dimension_numbers = #tpu.dot_dimension_numbers<[1], [0], [0], [1], [0, 0, 1, 1], [], []>} : vector<8x32xf32>, vector<32x128xf32>, vector<8x128xf32> -> vector<8x128xf32>
    %275 = arith.addf %273, %274 : vector<8x128xf32>
    %276 = arith.mulf %275, %23 : vector<8x128xf32>
    %277 = math.tanh %276 : vector<8x128xf32>
    %278 = arith.mulf %277, %23 : vector<8x128xf32>
    %279 = arith.addf %278, %26 : vector<8x128xf32>
    %280 = vector.extract_strided_slice %279 {offsets = [0, 0], sizes = [8, 32], strides = [1, 1]} : vector<8x128xf32> to vector<8x32xf32>
    %281 = vector.extract_strided_slice %279 {offsets = [0, 32], sizes = [8, 32], strides = [1, 1]} : vector<8x128xf32> to vector<8x32xf32>
    %282 = vector.extract_strided_slice %279 {offsets = [0, 64], sizes = [8, 32], strides = [1, 1]} : vector<8x128xf32> to vector<8x32xf32>
    %283 = vector.extract_strided_slice %279 {offsets = [0, 96], sizes = [8, 32], strides = [1, 1]} : vector<8x128xf32> to vector<8x32xf32>
    %284 = arith.mulf %281, %251 : vector<8x32xf32>
    %285 = arith.mulf %280, %283 : vector<8x32xf32>
    %286 = arith.addf %284, %285 : vector<8x32xf32>
    %287 = math.tanh %286 : vector<8x32xf32>
    %288 = arith.mulf %282, %287 : vector<8x32xf32>
    %289 = tpu.concatenate %288, %269 in 1 : vector<8x32xf32>, vector<8x32xf32> -> vector<8x64xf32>
    %cst_69 = arith.constant dense<0.000000e+00> : vector<8x128xf32>
    %290 = tpu.matmul %289, %9, %cst_69 {dimension_numbers = #tpu.dot_dimension_numbers<[1], [0], [0], [1], [0, 0, 1, 1], [], []>} : vector<8x64xf32>, vector<64x128xf32>, vector<8x128xf32> -> vector<8x128xf32>
    %291 = arith.addf %290, %13 : vector<8x128xf32>
    %292 = arith.mulf %291, %23 : vector<8x128xf32>
    %293 = math.tanh %292 : vector<8x128xf32>
    %294 = arith.mulf %293, %23 : vector<8x128xf32>
    %295 = arith.addf %294, %26 : vector<8x128xf32>
    %296 = vector.extract_strided_slice %295 {offsets = [0, 0], sizes = [8, 32], strides = [1, 1]} : vector<8x128xf32> to vector<8x32xf32>
    %297 = vector.extract_strided_slice %295 {offsets = [0, 32], sizes = [8, 32], strides = [1, 1]} : vector<8x128xf32> to vector<8x32xf32>
    %298 = vector.extract_strided_slice %295 {offsets = [0, 64], sizes = [8, 32], strides = [1, 1]} : vector<8x128xf32> to vector<8x32xf32>
    %299 = vector.extract_strided_slice %295 {offsets = [0, 96], sizes = [8, 32], strides = [1, 1]} : vector<8x128xf32> to vector<8x32xf32>
    %300 = arith.mulf %297, %267 : vector<8x32xf32>
    %301 = arith.mulf %296, %299 : vector<8x32xf32>
    %302 = arith.addf %300, %301 : vector<8x32xf32>
    %303 = math.tanh %302 : vector<8x32xf32>
    %304 = arith.mulf %298, %303 : vector<8x32xf32>
    %cst_70 = arith.constant dense<0.000000e+00> : vector<8x128xf32>
    %305 = tpu.matmul %304, %14, %cst_70 {dimension_numbers = #tpu.dot_dimension_numbers<[1], [0], [0], [1], [0, 0, 1, 1], [], []>} : vector<8x32xf32>, vector<32x128xf32>, vector<8x128xf32> -> vector<8x128xf32>
    %306 = arith.addf %305, %17 : vector<8x128xf32>
    %c56_71 = arith.constant 56 : index
    %c0_72 = arith.constant 0 : index
    %307 = vector.load %arg8[%c56_71, %c0_72] : memref<72x128xf32, #tpu.memory_space<vmem>>, vector<8x128xf32>
    tpu.vector_store %arg8[%c56_71, %c0_72], %306 {strides = array<i32>} : memref<72x128xf32, #tpu.memory_space<vmem>>, vector<8x128xf32>,
    %c64 = arith.constant 64 : index
    %c0_73 = arith.constant 0 : index
    %308 = vector.load %arg9[%c64, %c0_73] : memref<72x128xf32, #tpu.memory_space<vmem>>, vector<8x128xf32>
    %cst_74 = arith.constant dense<0.000000e+00> : vector<8x128xf32>
    %309 = tpu.matmul %288, %7, %cst_74 {dimension_numbers = #tpu.dot_dimension_numbers<[1], [0], [0], [1], [0, 0, 1, 1], [], []>} : vector<8x32xf32>, vector<32x128xf32>, vector<8x128xf32> -> vector<8x128xf32>
    %310 = arith.addf %308, %309 : vector<8x128xf32>
    %311 = arith.mulf %310, %23 : vector<8x128xf32>
    %312 = math.tanh %311 : vector<8x128xf32>
    %313 = arith.mulf %312, %23 : vector<8x128xf32>
    %314 = arith.addf %313, %26 : vector<8x128xf32>
    %315 = vector.extract_strided_slice %314 {offsets = [0, 0], sizes = [8, 32], strides = [1, 1]} : vector<8x128xf32> to vector<8x32xf32>
    %316 = vector.extract_strided_slice %314 {offsets = [0, 32], sizes = [8, 32], strides = [1, 1]} : vector<8x128xf32> to vector<8x32xf32>
    %317 = vector.extract_strided_slice %314 {offsets = [0, 64], sizes = [8, 32], strides = [1, 1]} : vector<8x128xf32> to vector<8x32xf32>
    %318 = vector.extract_strided_slice %314 {offsets = [0, 96], sizes = [8, 32], strides = [1, 1]} : vector<8x128xf32> to vector<8x32xf32>
    %319 = arith.mulf %316, %286 : vector<8x32xf32>
    %320 = arith.mulf %315, %318 : vector<8x32xf32>
    %321 = arith.addf %319, %320 : vector<8x32xf32>
    %322 = math.tanh %321 : vector<8x32xf32>
    %323 = arith.mulf %317, %322 : vector<8x32xf32>
    %324 = tpu.concatenate %323, %304 in 1 : vector<8x32xf32>, vector<8x32xf32> -> vector<8x64xf32>
    %cst_75 = arith.constant dense<0.000000e+00> : vector<8x128xf32>
    %325 = tpu.matmul %324, %9, %cst_75 {dimension_numbers = #tpu.dot_dimension_numbers<[1], [0], [0], [1], [0, 0, 1, 1], [], []>} : vector<8x64xf32>, vector<64x128xf32>, vector<8x128xf32> -> vector<8x128xf32>
    %326 = arith.addf %325, %13 : vector<8x128xf32>
    %327 = arith.mulf %326, %23 : vector<8x128xf32>
    %328 = math.tanh %327 : vector<8x128xf32>
    %329 = arith.mulf %328, %23 : vector<8x128xf32>
    %330 = arith.addf %329, %26 : vector<8x128xf32>
    %331 = vector.extract_strided_slice %330 {offsets = [0, 0], sizes = [8, 32], strides = [1, 1]} : vector<8x128xf32> to vector<8x32xf32>
    %332 = vector.extract_strided_slice %330 {offsets = [0, 32], sizes = [8, 32], strides = [1, 1]} : vector<8x128xf32> to vector<8x32xf32>
    %333 = vector.extract_strided_slice %330 {offsets = [0, 64], sizes = [8, 32], strides = [1, 1]} : vector<8x128xf32> to vector<8x32xf32>
    %334 = vector.extract_strided_slice %330 {offsets = [0, 96], sizes = [8, 32], strides = [1, 1]} : vector<8x128xf32> to vector<8x32xf32>
    %335 = arith.mulf %332, %302 : vector<8x32xf32>
    %336 = arith.mulf %331, %334 : vector<8x32xf32>
    %337 = arith.addf %335, %336 : vector<8x32xf32>
    %338 = math.tanh %337 : vector<8x32xf32>
    %339 = arith.mulf %333, %338 : vector<8x32xf32>
    %cst_76 = arith.constant dense<0.000000e+00> : vector<8x128xf32>
    %340 = tpu.matmul %339, %14, %cst_76 {dimension_numbers = #tpu.dot_dimension_numbers<[1], [0], [0], [1], [0, 0, 1, 1], [], []>} : vector<8x32xf32>, vector<32x128xf32>, vector<8x128xf32> -> vector<8x128xf32>
    %341 = arith.addf %340, %17 : vector<8x128xf32>
    %c64_77 = arith.constant 64 : index
    %c0_78 = arith.constant 0 : index
    %342 = vector.load %arg8[%c64_77, %c0_78] : memref<72x128xf32, #tpu.memory_space<vmem>>, vector<8x128xf32>
    tpu.vector_store %arg8[%c64_77, %c0_78], %341 {strides = array<i32>} : memref<72x128xf32, #tpu.memory_space<vmem>>, vector<8x128xf32>,
    return
  }
}

</mosaic_0001>

<llo_original>
// kernel: tpu_custom_call.1
$region0: #{tpu_custom_call.1}
  #allocation0 [shape = 'u32[]', space=smem, size = 0x4, offset = 0x4, fixed_abs, tag = 'smem constant byte address 0x4 - core index']
  #allocation1 [shape = 'u32[144,128]{1,0:T(1,128)}', space=vmem, size = 0x12000, scoped, tag = 'internal scratch']
  #allocation2 [shape = 'f32[72,128]{1,0:T(8,128)}', space=vmem, size = 0x9000, scoped, tag = 'scratch operand']
  %s0 = inlined_call_operand.vmem [shape: f32[72,32], index: 0, kind: input, shape index: {}]
  %s1 = inlined_call_operand.vmem [shape: f32[32,128], index: 1, kind: input, shape index: {}]
  %s2 = inlined_call_operand.hbm [shape: f32[32,128], index: 2, kind: input, shape index: {}]
  %s3 = inlined_call_operand.vmem [shape: f32[1,128], index: 3, kind: input, shape index: {}]
  %s4 = inlined_call_operand.vmem [shape: f32[1,64,128], index: 4, kind: input, shape index: {}]
  %s5 = inlined_call_operand.vmem [shape: f32[1,1,128], index: 5, kind: input, shape index: {}]
  %s6 = inlined_call_operand.hbm [shape: f32[32,128], index: 6, kind: input, shape index: {}]
  %s7 = inlined_call_operand.vmem [shape: f32[1,128], index: 7, kind: input, shape index: {}]
  %s8 = inlined_call_operand.hbm [shape: f32[72,128], index: 8, kind: output, shape index: {}]
  %s9 = sld [smem:[#allocation0]]
  $region50: #{tpu_custom_call.1} parent=0
    _
  %s11 = ssub.s32 1, %s9
  %s12 = scalar_select 0, %s11, %s9
  $region1: #{tpu_custom_call.1} parent=0
    #allocation3 [shape = 'u8[16384]{0}', space=vmem, size = 0x4000, scoped, tag = 'input window, operand 2, single buffered']
    #allocation4 [shape = 's32[1]{0}', space=sflag, size = 0x4, scoped, tag = 'scoped memory for tpu_custom_call.1']
    #allocation5 [shape = 's32[1]{0}', space=sflag, size = 0x4, scoped, tag = 'scoped memory for tpu_custom_call.1']
    #allocation6 [shape = 'u8[16384]{0}', space=vmem, size = 0x4000, scoped, tag = 'input window, operand 6, single buffered']
    #allocation7 [shape = 's32[1]{0}', space=sflag, size = 0x4, scoped, tag = 'scoped memory for tpu_custom_call.1']
    #allocation8 [shape = 'u8[36864]{0}', space=vmem, size = 0x9000, scoped, tag = 'output window, operand 0, single buffered']
    %13 = vsyncpa [#allocation4], 0
    %14 = vsyncpa [#allocation7], 0
    %15 = vsyncpa [#allocation5], 0
    // Predicated region
    $region2: #{tpu_custom_call.1} parent=1 // pred_check
      _
    $region3: #{tpu_custom_call.1} parent=1 // pred_check_branch
      %17 = sbr.rel (0) target = $region5
    $region4: #{tpu_custom_call.1} parent=1 // pred_region
      _
    $region5: #{tpu_custom_call.1} parent=1 // pred_fallthru
      _
    // Predicated region
    $region6: #{tpu_custom_call.1} parent=1 // pred_check
      _
    $region7: #{tpu_custom_call.1} parent=1 // pred_check_branch
      %19 = sbr.rel (0) target = $region9
    $region8: #{tpu_custom_call.1} parent=1 // pred_region
      _
    $region9: #{tpu_custom_call.1} parent=1 // pred_fallthru
      _
    // Predicated region
    $region10: #{tpu_custom_call.1} parent=1 // pred_check
      _
    $region11: #{tpu_custom_call.1} parent=1 // pred_check_branch
      %21 = sbr.rel (0) target = $region13
    $region12: #{tpu_custom_call.1} parent=1 // pred_region
      %s23 = ssub.s32 512, 512
      %24 = vsyncadd [#allocation4], %s23
      %s25 = sshll.u32 [#allocation3], 4
      %s26 = int_to_ptr.vmem [resolvable:$true] %s25
      %31 = dma.hbm_to_vmem [thread:$0]  %s2, 512, %s26, [#allocation4], 128, 128, 8
    $region13: #{tpu_custom_call.1} parent=1 // pred_fallthru
      _
    // Predicated region
    $region14: #{tpu_custom_call.1} parent=1 // pred_check
      _
    $region15: #{tpu_custom_call.1} parent=1 // pred_check_branch
      %33 = sbr.rel (0) target = $region17
    $region16: #{tpu_custom_call.1} parent=1 // pred_region
      _
    $region17: #{tpu_custom_call.1} parent=1 // pred_fallthru
      _
    // Predicated region
    $region18: #{tpu_custom_call.1} parent=1 // pred_check
      _
    $region19: #{tpu_custom_call.1} parent=1 // pred_check_branch
      %35 = sbr.rel (0) target = $region21
    $region20: #{tpu_custom_call.1} parent=1 // pred_region
      _
    $region21: #{tpu_custom_call.1} parent=1 // pred_fallthru
      _
    // Predicated region
    $region22: #{tpu_custom_call.1} parent=1 // pred_check
      _
    $region23: #{tpu_custom_call.1} parent=1 // pred_check_branch
      %37 = sbr.rel (0) target = $region25
    $region24: #{tpu_custom_call.1} parent=1 // pred_region
      _
    $region25: #{tpu_custom_call.1} parent=1 // pred_fallthru
      _
    // Predicated region
    $region26: #{tpu_custom_call.1} parent=1 // pred_check
      _
    $region27: #{tpu_custom_call.1} parent=1 // pred_check_branch
      %39 = sbr.rel (0) target = $region29
    $region28: #{tpu_custom_call.1} parent=1 // pred_region
      %s41 = ssub.s32 512, 512
      %42 = vsyncadd [#allocation7], %s41
      %s43 = sshll.u32 [#allocation6], 4
      %s44 = int_to_ptr.vmem [resolvable:$true] %s43
      %49 = dma.hbm_to_vmem [thread:$0]  %s6, 512, %s44, [#allocation7], 128, 128, 8
    $region29: #{tpu_custom_call.1} parent=1 // pred_fallthru
      _
    // Predicated region
    $region30: #{tpu_custom_call.1} parent=1 // pred_check
      _
    $region31: #{tpu_custom_call.1} parent=1 // pred_check_branch
      %51 = sbr.rel (0) target = $region33
    $region32: #{tpu_custom_call.1} parent=1 // pred_region
      _
    $region33: #{tpu_custom_call.1} parent=1 // pred_fallthru
      _
    // Predicated region
    $region34: #{tpu_custom_call.1} parent=1 // pred_check
      _
    $region35: #{tpu_custom_call.1} parent=1 // pred_check_branch
      %53 = sbr.rel (0) target = $region37
    $region36: #{tpu_custom_call.1} parent=1 // pred_region
      %54 = dma.done [#allocation4], 512
    $region37: #{tpu_custom_call.1} parent=1 // pred_fallthru
      _
    // Predicated region
    $region38: #{tpu_custom_call.1} parent=1 // pred_check
      _
    $region39: #{tpu_custom_call.1} parent=1 // pred_check_branch
      %56 = sbr.rel (0) target = $region41
    $region40: #{tpu_custom_call.1} parent=1 // pred_region
      %57 = dma.done [#allocation7], 512
    $region41: #{tpu_custom_call.1} parent=1 // pred_fallthru
      _
    %v58 = vld [vmem:[%s0] sm:$0xff]
    %v59 = vld [vmem:[%s0 + $0x8] sm:$0xff]
    %v60 = vld [vmem:[%s0 + $0x10] sm:$0xff]
    %v61 = vld [vmem:[%s0 + $0x18] sm:$0xff]
    %v62 = vld [vmem:[%s0 + $0x20] sm:$0xff]
    %v63 = vld [vmem:[%s0 + $0x28] sm:$0xff]
    %v64 = vld [vmem:[%s0 + $0x30] sm:$0xff]
    %v65 = vld [vmem:[%s0 + $0x38] sm:$0xff]
    %v66 = vld [vmem:[%s0 + $0x40] sm:$0xff]
    %v67 = vld [vmem:[%s1] sm:$0xff]
    %v68 = vld [vmem:[%s1 + $0x8] sm:$0xff]
    %v69 = vld [vmem:[%s1 + $0x10] sm:$0xff]
    %v70 = vld [vmem:[%s1 + $0x18] sm:$0xff]
    %v71 = vld [vmem:[%s3] sm:$0x1]
    %v73 = vlaneseq
    %v74 = vshrl.u32 %v73, 7
    %v75 = vsub.s32 0, %v74
    %v76 = vrot.slane %v71, %v75
    %vm78 = vcmask 261120
    %v80 = vsel %vm78, %v58, 0
    %v83 = vsel %vm78, %v59, 0
    %v86 = vsel %vm78, %v60, 0
    %v89 = vsel %vm78, %v61, 0
    %v92 = vsel %vm78, %v62, 0
    %v95 = vsel %vm78, %v63, 0
    %v98 = vsel %vm78, %v64, 0
    %v101 = vsel %vm78, %v65, 0
    %v104 = vsel %vm78, %v66, 0
    %106 = vmatprep.subr.mxu0 0.0
    %107 = vmatpush1.msra.mxu0 %v67
    %108 = vmatprep.subr.mxu0 0.0
    %109 = vmatpush1.msra.mxu0 %v68
    %110 = vmatprep.subr.mxu0 0.0
    %111 = vmatpush1.msra.mxu0 %v69
    %112 = vmatprep.subr.mxu0 0.0
    %113 = vmatpush1.msra.mxu0 %v70
    %114 = vmatprep.subr.mxu0 0.0
    %115 = vmatpush1.msra.mxu0 0.0
    %116 = vmatprep.subr.mxu0 0.0
    %117 = vmatpush1.msra.mxu0 0.0
    %118 = vmatprep.subr.mxu0 0.0
    %119 = vmatpush1.msra.mxu0 0.0
    %120 = vmatprep.subr.mxu0 0.0
    %121 = vmatpush1.msra.mxu0 0.0
    %122 = vmatprep.subr.mxu0 0.0
    %123 = vmatpush1.msra.mxu0 0.0
    %124 = vmatprep.subr.mxu0 0.0
    %125 = vmatpush1.msra.mxu0 0.0
    %126 = vmatprep.subr.mxu0 0.0
    %127 = vmatpush1.msra.mxu0 0.0
    %128 = vmatprep.subr.mxu0 0.0
    %129 = vmatpush1.msra.mxu0 0.0
    %130 = vmatprep.subr.mxu0 0.0
    %131 = vmatpush1.msra.mxu0 0.0
    %132 = vmatprep.subr.mxu0 0.0
    %133 = vmatpush1.msra.mxu0 0.0
    %134 = vmatprep.subr.mxu0 0.0
    %135 = vmatpush1.msra.mxu0 0.0
    %136 = vmatprep.subr.mxu0 0.0
    %137 = vmatpush1.msra.mxu0 0.0
    %138 = vmatprep.subr.mxu0 0.0
    %139 = vmatpush1.msra.mxu0 0.0
    %140 = vmatprep.subr.mxu0 0.0
    %141 = vmatpush1.msra.mxu0 0.0
    %142 = vmatprep.subr.mxu0 0.0
    %143 = vmatpush1.msra.mxu0 0.0
    %144 = vmatprep.subr.mxu0 0.0
    %145 = vmatpush1.msra.mxu0 0.0
    %146 = vmatprep.subr.mxu0 0.0
    %147 = vmatpush1.msra.mxu0 0.0
    %148 = vmatprep.subr.mxu0 0.0
    %149 = vmatpush1.msra.mxu0 0.0
    %150 = vmatprep.subr.mxu0 0.0
    %151 = vmatpush1.msra.mxu0 0.0
    %152 = vmatprep.subr.mxu0 0.0
    %153 = vmatpush1.msra.mxu0 0.0
    %154 = vmatprep.subr.mxu0 0.0
    %155 = vmatpush1.msra.mxu0 0.0
    %156 = vmatprep.subr.mxu0 0.0
    %157 = vmatpush1.msra.mxu0 0.0
    %158 = vmatprep.subr.mxu0 0.0
    %159 = vmatpush1.msra.mxu0 0.0
    %160 = vmatprep.subr.mxu0 0.0
    %161 = vmatpush1.msra.mxu0 0.0
    %162 = vmatprep.subr.mxu0 0.0
    %163 = vmatpush1.msra.mxu0 0.0
    %164 = vmatprep.subr.mxu0 0.0
    %165 = vmatpush1.msra.mxu0 0.0
    %166 = vmatprep.subr.mxu0 0.0
    %167 = vmatpush1.msra.mxu0 0.0
    %168 = vmatprep.subr.mxu0 0.0
    %169 = vmatpush1.msra.mxu0 0.0
    %170 = vmatprep.mubr.f32.mxu0 0.0
    %171 = vmatmul.mubr.f32.gmra.mrb[0].mxu0 %v80
    %v172 = vpop.f32.mrb[0].mxu0
    %v173 = vadd.f32 %v76, %v172
    %v174 = vpop.f32.mrb[0].mxu0
    %175 = vmatprep.mubr.f32.mxu0 0.0
    %176 = vmatmul.mubr.f32.gmra.mrb[0].mxu0 %v83
    %v177 = vpop.f32.mrb[0].mxu0
    %v178 = vadd.f32 %v76, %v177
    %v179 = vpop.f32.mrb[0].mxu0
    %180 = vmatprep.mubr.f32.mxu0 0.0
    %181 = vmatmul.mubr.f32.gmra.mrb[0].mxu0 %v86
    %v182 = vpop.f32.mrb[0].mxu0
    %v183 = vadd.f32 %v76, %v182
    %v184 = vpop.f32.mrb[0].mxu0
    %185 = vmatprep.mubr.f32.mxu0 0.0
    %186 = vmatmul.mubr.f32.gmra.mrb[0].mxu0 %v89
    %v187 = vpop.f32.mrb[0].mxu0
    %v188 = vadd.f32 %v76, %v187
    %v189 = vpop.f32.mrb[0].mxu0
    %190 = vmatprep.mubr.f32.mxu0 0.0
    %191 = vmatmul.mubr.f32.gmra.mrb[0].mxu0 %v92
    %v192 = vpop.f32.mrb[0].mxu0
    %v193 = vadd.f32 %v76, %v192
    %v194 = vpop.f32.mrb[0].mxu0
    %195 = vmatprep.mubr.f32.mxu0 0.0
    %196 = vmatmul.mubr.f32.gmra.mrb[0].mxu0 %v95
    %v197 = vpop.f32.mrb[0].mxu0
    %v198 = vadd.f32 %v76, %v197
    %v199 = vpop.f32.mrb[0].mxu0
    %200 = vmatprep.mubr.f32.mxu0 0.0
    %201 = vmatmul.mubr.f32.gmra.mrb[0].mxu0 %v98
    %v202 = vpop.f32.mrb[0].mxu0
    %v203 = vadd.f32 %v76, %v202
    %v204 = vpop.f32.mrb[0].mxu0
    %205 = vmatprep.mubr.f32.mxu0 0.0
    %206 = vmatmul.mubr.f32.gmra.mrb[0].mxu0 %v101
    %v207 = vpop.f32.mrb[0].mxu0
    %v208 = vadd.f32 %v76, %v207
    %v209 = vpop.f32.mrb[0].mxu0
    %210 = vmatprep.mubr.f32.mxu0 0.0
    %211 = vmatmul.mubr.f32.gmra.mrb[0].mxu0 %v104
    %v212 = vpop.f32.mrb[0].mxu0
    %v213 = vadd.f32 %v76, %v212
    %v214 = vpop.f32.mrb[0].mxu0
    %215 = vdwg.mxu0
    %216 = vst [vmem:[#allocation2] sm:$0xff] %v173
    %217 = vst [vmem:[#allocation2 + $0x8] sm:$0xff] %v178
    %218 = vst [vmem:[#allocation2 + $0x10] sm:$0xff] %v183
    %219 = vst [vmem:[#allocation2 + $0x18] sm:$0xff] %v188
    %220 = vst [vmem:[#allocation2 + $0x20] sm:$0xff] %v193
    %221 = vst [vmem:[#allocation2 + $0x28] sm:$0xff] %v198
    %222 = vst [vmem:[#allocation2 + $0x30] sm:$0xff] %v203
    %223 = vst [vmem:[#allocation2 + $0x38] sm:$0xff] %v208
    %224 = vst [vmem:[#allocation2 + $0x40] sm:$0xff] %v213
    %v225 = vld [vmem:[#allocation3] sm:$0xff]
    %v226 = vld [vmem:[#allocation3 + $0x8] sm:$0xff]
    %v227 = vld [vmem:[#allocation3 + $0x10] sm:$0xff]
    %v228 = vld [vmem:[#allocation3 + $0x18] sm:$0xff]
    %v229 = vld [vmem:[%s4] sm:$0xff]
    %v230 = vld [vmem:[%s4 + $0x8] sm:$0xff]
    %v231 = vld [vmem:[%s4 + $0x10] sm:$0xff]
    %v232 = vld [vmem:[%s4 + $0x18] sm:$0xff]
    %v233 = vld [vmem:[%s4 + $0x20] sm:$0xff]
    %v234 = vld [vmem:[%s4 + $0x28] sm:$0xff]
    %v235 = vld [vmem:[%s4 + $0x30] sm:$0xff]
    %v236 = vld [vmem:[%s4 + $0x38] sm:$0xff]
    %v237 = vld [vmem:[%s5] sm:$0x1]
    %v239 = vlaneseq
    %v240 = vshrl.u32 %v239, 7
    %v241 = vsub.s32 0, %v240
    %v242 = vrot.slane %v237, %v241
    %v244 = vld [vmem:[#allocation6] sm:$0xff]
    %v245 = vld [vmem:[#allocation6 + $0x8] sm:$0xff]
    %v246 = vld [vmem:[#allocation6 + $0x10] sm:$0xff]
    %v247 = vld [vmem:[#allocation6 + $0x18] sm:$0xff]
    %v248 = vld [vmem:[%s7] sm:$0x1]
    %v250 = vlaneseq
    %v251 = vshrl.u32 %v250, 7
    %v252 = vsub.s32 0, %v251
    %v253 = vrot.slane %v248, %v252
    %v255 = vlaneseq
    %v256 = vand.u32 %v255, 127
    %vm257 = vcmp.lt.s32.totalorder %v256, 96
    %v258 = vsel %vm257, 0.5, 1.0
    %v259 = vsel %vm257, 0.5, 0.0
    %v260 = vld [vmem:[#allocation2] sm:$0xff]
    %v262 = vsel %vm78, 0.0, 0
    %264 = vmatprep.subr.mxu0 0.0
    %265 = vmatpush1.msra.mxu0 %v225
    %266 = vmatprep.subr.mxu0 0.0
    %267 = vmatpush1.msra.mxu0 %v226
    %268 = vmatprep.subr.mxu0 0.0
    %269 = vmatpush1.msra.mxu0 %v227
    %270 = vmatprep.subr.mxu0 0.0
    %271 = vmatpush1.msra.mxu0 %v228
    %272 = vmatprep.subr.mxu0 0.0
    %273 = vmatpush1.msra.mxu0 0.0
    %274 = vmatprep.subr.mxu0 0.0
    %275 = vmatpush1.msra.mxu0 0.0
    %276 = vmatprep.subr.mxu0 0.0
    %277 = vmatpush1.msra.mxu0 0.0
    %278 = vmatprep.subr.mxu0 0.0
    %279 = vmatpush1.msra.mxu0 0.0
    %280 = vmatprep.subr.mxu0 0.0
    %281 = vmatpush1.msra.mxu0 0.0
    %282 = vmatprep.subr.mxu0 0.0
    %283 = vmatpush1.msra.mxu0 0.0
    %284 = vmatprep.subr.mxu0 0.0
    %285 = vmatpush1.msra.mxu0 0.0
    %286 = vmatprep.subr.mxu0 0.0
    %287 = vmatpush1.msra.mxu0 0.0
    %288 = vmatprep.subr.mxu0 0.0
    %289 = vmatpush1.msra.mxu0 0.0
    %290 = vmatprep.subr.mxu0 0.0
    %291 = vmatpush1.msra.mxu0 0.0
    %292 = vmatprep.subr.mxu0 0.0
    %293 = vmatpush1.msra.mxu0 0.0
    %294 = vmatprep.subr.mxu0 0.0
    %295 = vmatpush1.msra.mxu0 0.0
    %296 = vmatprep.subr.mxu0 0.0
    %297 = vmatpush1.msra.mxu0 0.0
    %298 = vmatprep.subr.mxu0 0.0
    %299 = vmatpush1.msra.mxu0 0.0
    %300 = vmatprep.subr.mxu0 0.0
    %301 = vmatpush1.msra.mxu0 0.0
    %302 = vmatprep.subr.mxu0 0.0
    %303 = vmatpush1.msra.mxu0 0.0
    %304 = vmatprep.subr.mxu0 0.0
    %305 = vmatpush1.msra.mxu0 0.0
    %306 = vmatprep.subr.mxu0 0.0
    %307 = vmatpush1.msra.mxu0 0.0
    %308 = vmatprep.subr.mxu0 0.0
    %309 = vmatpush1.msra.mxu0 0.0
    %310 = vmatprep.subr.mxu0 0.0
    %311 = vmatpush1.msra.mxu0 0.0
    %312 = vmatprep.subr.mxu0 0.0
    %313 = vmatpush1.msra.mxu0 0.0
    %314 = vmatprep.subr.mxu0 0.0
    %315 = vmatpush1.msra.mxu0 0.0
    %316 = vmatprep.subr.mxu0 0.0
    %317 = vmatpush1.msra.mxu0 0.0
    %318 = vmatprep.subr.mxu0 0.0
    %319 = vmatpush1.msra.mxu0 0.0
    %320 = vmatprep.subr.mxu0 0.0
    %321 = vmatpush1.msra.mxu0 0.0
    %322 = vmatprep.subr.mxu0 0.0
    %323 = vmatpush1.msra.mxu0 0.0
    %324 = vmatprep.subr.mxu0 0.0
    %325 = vmatpush1.msra.mxu0 0.0
    %326 = vmatprep.subr.mxu0 0.0
    %327 = vmatpush1.msra.mxu0 0.0
    %328 = vmatprep.mubr.f32.mxu0 0.0
    %329 = vmatmul.mubr.f32.gmra.mrb[0].mxu0 %v262
    %v330 = vpop.f32.mrb[0].mxu0
    %v331 = vadd.f32 0.0, %v330
    %v332 = vpop.f32.mrb[0].mxu0
    %333 = vdwg.mxu0
    %v334 = vadd.f32 %v260, %v331
    %v335 = vmul.f32 %v334, %v258
    %v336 = vtanh.pop %v335
    %v337 = vmul.f32 %v336, %v258
    %v338 = vadd.f32 %v337, %v259
    %v339 = vmul.f32 %v338, 0.0
    %341 = vrot.lane.b32.xlu0 %v338, 32
    %v342 = vpop.permute.xlu0 %341
    %v344 = vmul.f32 %v338, %v342
    %346 = vrot.lane.b32.xlu0 %v344, 32
    %v347 = vpop.permute.xlu0 %346
    %v349 = vadd.f32 %v339, %v347
    %v350 = vtanh.pop %v349
    %352 = vrot.lane.b32.xlu0 %v350, 32
    %v353 = vpop.permute.xlu0 %352
    %v355 = vmul.f32 %v338, %v353
    %357 = vrot.lane.b32.xlu0 %v355, 64
    %v358 = vpop.permute.xlu0 %357
    %v360 = vsel %vm78, %v358, 0.0
    %vm361 = vcmask 523264
    %v363 = vsel %vm361, %v360, 0
    %365 = vmatprep.subr.mxu0 0.0
    %366 = vmatpush1.msra.mxu0 %v229
    %367 = vmatprep.subr.mxu0 0.0
    %368 = vmatpush1.msra.mxu0 %v230
    %369 = vmatprep.subr.mxu0 0.0
    %370 = vmatpush1.msra.mxu0 %v231
    %371 = vmatprep.subr.mxu0 0.0
    %372 = vmatpush1.msra.mxu0 %v232
    %373 = vmatprep.subr.mxu0 0.0
    %374 = vmatpush1.msra.mxu0 %v233
    %375 = vmatprep.subr.mxu0 0.0
    %376 = vmatpush1.msra.mxu0 %v234
    %377 = vmatprep.subr.mxu0 0.0
    %378 = vmatpush1.msra.mxu0 %v235
    %379 = vmatprep.subr.mxu0 0.0
    %380 = vmatpush1.msra.mxu0 %v236
    %381 = vmatprep.subr.mxu0 0.0
    %382 = vmatpush1.msra.mxu0 0.0
    %383 = vmatprep.subr.mxu0 0.0
    %384 = vmatpush1.msra.mxu0 0.0
    %385 = vmatprep.subr.mxu0 0.0
    %386 = vmatpush1.msra.mxu0 0.0
    %387 = vmatprep.subr.mxu0 0.0
    %388 = vmatpush1.msra.mxu0 0.0
    %389 = vmatprep.subr.mxu0 0.0
    %390 = vmatpush1.msra.mxu0 0.0
    %391 = vmatprep.subr.mxu0 0.0
    %392 = vmatpush1.msra.mxu0 0.0
    %393 = vmatprep.subr.mxu0 0.0
    %394 = vmatpush1.msra.mxu0 0.0
    %395 = vmatprep.subr.mxu0 0.0
    %396 = vmatpush1.msra.mxu0 0.0
    %397 = vmatprep.subr.mxu0 0.0
    %398 = vmatpush1.msra.mxu0 0.0
    %399 = vmatprep.subr.mxu0 0.0
    %400 = vmatpush1.msra.mxu0 0.0
    %401 = vmatprep.subr.mxu0 0.0
    %402 = vmatpush1.msra.mxu0 0.0
    %403 = vmatprep.subr.mxu0 0.0
    %404 = vmatpush1.msra.mxu0 0.0
    %405 = vmatprep.subr.mxu0 0.0
    %406 = vmatpush1.msra.mxu0 0.0
    %407 = vmatprep.subr.mxu0 0.0
    %408 = vmatpush1.msra.mxu0 0.0
    %409 = vmatprep.subr.mxu0 0.0
    %410 = vmatpush1.msra.mxu0 0.0
    %411 = vmatprep.subr.mxu0 0.0
    %412 = vmatpush1.msra.mxu0 0.0
    %413 = vmatprep.subr.mxu0 0.0
    %414 = vmatpush1.msra.mxu0 0.0
    %415 = vmatprep.subr.mxu0 0.0
    %416 = vmatpush1.msra.mxu0 0.0
    %417 = vmatprep.subr.mxu0 0.0
    %418 = vmatpush1.msra.mxu0 0.0
    %419 = vmatprep.subr.mxu0 0.0
    %420 = vmatpush1.msra.mxu0 0.0
    %421 = vmatprep.subr.mxu0 0.0
    %422 = vmatpush1.msra.mxu0 0.0
    %423 = vmatprep.subr.mxu0 0.0
    %424 = vmatpush1.msra.mxu0 0.0
    %425 = vmatprep.subr.mxu0 0.0
    %426 = vmatpush1.msra.mxu0 0.0
    %427 = vmatprep.subr.mxu0 0.0
    %428 = vmatpush1.msra.mxu0 0.0
    %429 = vmatprep.mubr.f32.mxu0 0.0
    %430 = vmatmul.mubr.f32.gmra.mrb[0].mxu0 %v363
    %v431 = vpop.f32.mrb[0].mxu0
    %v432 = vadd.f32 %v242, %v431
    %v433 = vpop.f32.mrb[0].mxu0
    %434 = vdwg.mxu0
    %v435 = vmul.f32 %v432, %v258
    %v436 = vtanh.pop %v435
    %v437 = vmul.f32 %v436, %v258
    %v438 = vadd.f32 %v437, %v259
    %v439 = vmul.f32 %v438, 0.0
    %441 = vrot.lane.b32.xlu0 %v438, 32
    %v442 = vpop.permute.xlu0 %441
    %v444 = vmul.f32 %v438, %v442
    %446 = vrot.lane.b32.xlu0 %v444, 32
    %v447 = vpop.permute.xlu0 %446
    %v449 = vadd.f32 %v439, %v447
    %v450 = vtanh.pop %v449
    %452 = vrot.lane.b32.xlu0 %v450, 32
    %v453 = vpop.permute.xlu0 %452
    %v455 = vmul.f32 %v438, %v453
    %457 = vrot.lane.b32.xlu0 %v455, 64
    %v458 = vpop.permute.xlu0 %457
    %v459 = vsel %vm78, %v458, 0
    %461 = vmatprep.subr.mxu0 0.0
    %462 = vmatpush1.msra.mxu0 %v244
    %463 = vmatprep.subr.mxu0 0.0
    %464 = vmatpush1.msra.mxu0 %v245
    %465 = vmatprep.subr.mxu0 0.0
    %466 = vmatpush1.msra.mxu0 %v246
    %467 = vmatprep.subr.mxu0 0.0
    %468 = vmatpush1.msra.mxu0 %v247
    %469 = vmatprep.subr.mxu0 0.0
    %470 = vmatpush1.msra.mxu0 0.0
    %471 = vmatprep.subr.mxu0 0.0
    %472 = vmatpush1.msra.mxu0 0.0
    %473 = vmatprep.subr.mxu0 0.0
    %474 = vmatpush1.msra.mxu0 0.0
    %475 = vmatprep.subr.mxu0 0.0
    %476 = vmatpush1.msra.mxu0 0.0
    %477 = vmatprep.subr.mxu0 0.0
    %478 = vmatpush1.msra.mxu0 0.0
    %479 = vmatprep.subr.mxu0 0.0
    %480 = vmatpush1.msra.mxu0 0.0
    %481 = vmatprep.subr.mxu0 0.0
    %482 = vmatpush1.msra.mxu0 0.0
    %483 = vmatprep.subr.mxu0 0.0
    %484 = vmatpush1.msra.mxu0 0.0
    %485 = vmatprep.subr.mxu0 0.0
    %486 = vmatpush1.msra.mxu0 0.0
    %487 = vmatprep.subr.mxu0 0.0
    %488 = vmatpush1.msra.mxu0 0.0
    %489 = vmatprep.subr.mxu0 0.0
    %490 = vmatpush1.msra.mxu0 0.0
    %491 = vmatprep.subr.mxu0 0.0
    %492 = vmatpush1.msra.mxu0 0.0
    %493 = vmatprep.subr.mxu0 0.0
    %494 = vmatpush1.msra.mxu0 0.0
    %495 = vmatprep.subr.mxu0 0.0
    %496 = vmatpush1.msra.mxu0 0.0
    %497 = vmatprep.subr.mxu0 0.0
    %498 = vmatpush1.msra.mxu0 0.0
    %499 = vmatprep.subr.mxu0 0.0
    %500 = vmatpush1.msra.mxu0 0.0
    %501 = vmatprep.subr.mxu0 0.0
    %502 = vmatpush1.msra.mxu0 0.0
    %503 = vmatprep.subr.mxu0 0.0
    %504 = vmatpush1.msra.mxu0 0.0
    %505 = vmatprep.subr.mxu0 0.0
    %506 = vmatpush1.msra.mxu0 0.0
    %507 = vmatprep.subr.mxu0 0.0
    %508 = vmatpush1.msra.mxu0 0.0
    %509 = vmatprep.subr.mxu0 0.0
    %510 = vmatpush1.msra.mxu0 0.0
    %511 = vmatprep.subr.mxu0 0.0
    %512 = vmatpush1.msra.mxu0 0.0
    %513 = vmatprep.subr.mxu0 0.0
    %514 = vmatpush1.msra.mxu0 0.0
    %515 = vmatprep.subr.mxu0 0.0
    %516 = vmatpush1.msra.mxu0 0.0
    %517 = vmatprep.subr.mxu0 0.0
    %518 = vmatpush1.msra.mxu0 0.0
    %519 = vmatprep.subr.mxu0 0.0
    %520 = vmatpush1.msra.mxu0 0.0
    %521 = vmatprep.subr.mxu0 0.0
    %522 = vmatpush1.msra.mxu0 0.0
    %523 = vmatprep.subr.mxu0 0.0
    %524 = vmatpush1.msra.mxu0 0.0
    %525 = vmatprep.mubr.f32.mxu0 0.0
    %526 = vmatmul.mubr.f32.gmra.mrb[0].mxu0 %v459
    %v527 = vpop.f32.mrb[0].mxu0
    %v528 = vadd.f32 %v253, %v527
    %v529 = vpop.f32.mrb[0].mxu0
    %530 = vdwg.mxu0
    %531 = vst [vmem:[#allocation8] sm:$0xff] %v528
    %v532 = vld [vmem:[#allocation2 + $0x8] sm:$0xff]
    %v533 = vsel %vm78, %v358, 0
    %535 = vmatprep.subr.mxu0 0.0
    %536 = vmatpush1.msra.mxu0 %v225
    %537 = vmatprep.subr.mxu0 0.0
    %538 = vmatpush1.msra.mxu0 %v226
    %539 = vmatprep.subr.mxu0 0.0
    %540 = vmatpush1.msra.mxu0 %v227
    %541 = vmatprep.subr.mxu0 0.0
    %542 = vmatpush1.msra.mxu0 %v228
    %543 = vmatprep.subr.mxu0 0.0
    %544 = vmatpush1.msra.mxu0 0.0
    %545 = vmatprep.subr.mxu0 0.0
    %546 = vmatpush1.msra.mxu0 0.0
    %547 = vmatprep.subr.mxu0 0.0
    %548 = vmatpush1.msra.mxu0 0.0
    %549 = vmatprep.subr.mxu0 0.0
    %550 = vmatpush1.msra.mxu0 0.0
    %551 = vmatprep.subr.mxu0 0.0
    %552 = vmatpush1.msra.mxu0 0.0
    %553 = vmatprep.subr.mxu0 0.0
    %554 = vmatpush1.msra.mxu0 0.0
    %555 = vmatprep.subr.mxu0 0.0
    %556 = vmatpush1.msra.mxu0 0.0
    %557 = vmatprep.subr.mxu0 0.0
    %558 = vmatpush1.msra.mxu0 0.0
    %559 = vmatprep.subr.mxu0 0.0
    %560 = vmatpush1.msra.mxu0 0.0
    %561 = vmatprep.subr.mxu0 0.0
    %562 = vmatpush1.msra.mxu0 0.0
    %563 = vmatprep.subr.mxu0 0.0
    %564 = vmatpush1.msra.mxu0 0.0
    %565 = vmatprep.subr.mxu0 0.0
    %566 = vmatpush1.msra.mxu0 0.0
    %567 = vmatprep.subr.mxu0 0.0
    %568 = vmatpush1.msra.mxu0 0.0
    %569 = vmatprep.subr.mxu0 0.0
    %570 = vmatpush1.msra.mxu0 0.0
    %571 = vmatprep.subr.mxu0 0.0
    %572 = vmatpush1.msra.mxu0 0.0
    %573 = vmatprep.subr.mxu0 0.0
    %574 = vmatpush1.msra.mxu0 0.0
    %575 = vmatprep.subr.mxu0 0.0
    %576 = vmatpush1.msra.mxu0 0.0
    %577 = vmatprep.subr.mxu0 0.0
    %578 = vmatpush1.msra.mxu0 0.0
    %579 = vmatprep.subr.mxu0 0.0
    %580 = vmatpush1.msra.mxu0 0.0
    %581 = vmatprep.subr.mxu0 0.0
    %582 = vmatpush1.msra.mxu0 0.0
    %583 = vmatprep.subr.mxu0 0.0
    %584 = vmatpush1.msra.mxu0 0.0
    %585 = vmatprep.subr.mxu0 0.0
    %586 = vmatpush1.msra.mxu0 0.0
    %587 = vmatprep.subr.mxu0 0.0
    %588 = vmatpush1.msra.mxu0 0.0
    %589 = vmatprep.subr.mxu0 0.0
    %590 = vmatpush1.msra.mxu0 0.0
    %591 = vmatprep.subr.mxu0 0.0
    %592 = vmatpush1.msra.mxu0 0.0
    %593 = vmatprep.subr.mxu0 0.0
    %594 = vmatpush1.msra.mxu0 0.0
    %595 = vmatprep.subr.mxu0 0.0
    %596 = vmatpush1.msra.mxu0 0.0
    %597 = vmatprep.subr.mxu0 0.0
    %598 = vmatpush1.msra.mxu0 0.0
    %599 = vmatprep.mubr.f32.mxu0 0.0
    %600 = vmatmul.mubr.f32.gmra.mrb[0].mxu0 %v533
    %v601 = vpop.f32.mrb[0].mxu0
    %v602 = vadd.f32 0.0, %v601
    %v603 = vpop.f32.mrb[0].mxu0
    %604 = vdwg.mxu0
    %v605 = vadd.f32 %v532, %v602
    %v606 = vmul.f32 %v605, %v258
    %v607 = vtanh.pop %v606
    %v608 = vmul.f32 %v607, %v258
    %v609 = vadd.f32 %v608, %v259
    %v610 = vmul.f32 %v609, %v349
    %612 = vrot.lane.b32.xlu0 %v609, 32
    %v613 = vpop.permute.xlu0 %612
    %v615 = vmul.f32 %v609, %v613
    %617 = vrot.lane.b32.xlu0 %v615, 32
    %v618 = vpop.permute.xlu0 %617
    %v620 = vadd.f32 %v610, %v618
    %v621 = vtanh.pop %v620
    %623 = vrot.lane.b32.xlu0 %v621, 32
    %v624 = vpop.permute.xlu0 %623
    %v626 = vmul.f32 %v609, %v624
    %628 = vrot.lane.b32.xlu0 %v626, 64
    %v629 = vpop.permute.xlu0 %628
    %631 = vrot.lane.b32.xlu0 %v455, 96
    %v632 = vpop.permute.xlu0 %631
    %v634 = vsel %vm78, %v629, %v632
    %v636 = vsel %vm361, %v634, 0
    %638 = vmatprep.subr.mxu0 0.0
    %639 = vmatpush1.msra.mxu0 %v229
    %640 = vmatprep.subr.mxu0 0.0
    %641 = vmatpush1.msra.mxu0 %v230
    %642 = vmatprep.subr.mxu0 0.0
    %643 = vmatpush1.msra.mxu0 %v231
    %644 = vmatprep.subr.mxu0 0.0
    %645 = vmatpush1.msra.mxu0 %v232
    %646 = vmatprep.subr.mxu0 0.0
    %647 = vmatpush1.msra.mxu0 %v233
    %648 = vmatprep.subr.mxu0 0.0
    %649 = vmatpush1.msra.mxu0 %v234
    %650 = vmatprep.subr.mxu0 0.0
    %651 = vmatpush1.msra.mxu0 %v235
    %652 = vmatprep.subr.mxu0 0.0
    %653 = vmatpush1.msra.mxu0 %v236
    %654 = vmatprep.subr.mxu0 0.0
    %655 = vmatpush1.msra.mxu0 0.0
    %656 = vmatprep.subr.mxu0 0.0
    %657 = vmatpush1.msra.mxu0 0.0
    %658 = vmatprep.subr.mxu0 0.0
    %659 = vmatpush1.msra.mxu0 0.0
    %660 = vmatprep.subr.mxu0 0.0
    %661 = vmatpush1.msra.mxu0 0.0
    %662 = vmatprep.subr.mxu0 0.0
    %663 = vmatpush1.msra.mxu0 0.0
    %664 = vmatprep.subr.mxu0 0.0
    %665 = vmatpush1.msra.mxu0 0.0
    %666 = vmatprep.subr.mxu0 0.0
    %667 = vmatpush1.msra.mxu0 0.0
    %668 = vmatprep.subr.mxu0 0.0
    %669 = vmatpush1.msra.mxu0 0.0
    %670 = vmatprep.subr.mxu0 0.0
    %671 = vmatpush1.msra.mxu0 0.0
    %672 = vmatprep.subr.mxu0 0.0
    %673 = vmatpush1.msra.mxu0 0.0
    %674 = vmatprep.subr.mxu0 0.0
    %675 = vmatpush1.msra.mxu0 0.0
    %676 = vmatprep.subr.mxu0 0.0
    %677 = vmatpush1.msra.mxu0 0.0
    %678 = vmatprep.subr.mxu0 0.0
    %679 = vmatpush1.msra.mxu0 0.0
    %680 = vmatprep.subr.mxu0 0.0
    %681 = vmatpush1.msra.mxu0 0.0
    %682 = vmatprep.subr.mxu0 0.0
    %683 = vmatpush1.msra.mxu0 0.0
    %684 = vmatprep.subr.mxu0 0.0
    %685 = vmatpush1.msra.mxu0 0.0
    %686 = vmatprep.subr.mxu0 0.0
    %687 = vmatpush1.msra.mxu0 0.0
    %688 = vmatprep.subr.mxu0 0.0
    %689 = vmatpush1.msra.mxu0 0.0
    %690 = vmatprep.subr.mxu0 0.0
    %691 = vmatpush1.msra.mxu0 0.0
    %692 = vmatprep.subr.mxu0 0.0
    %693 = vmatpush1.msra.mxu0 0.0
    %694 = vmatprep.subr.mxu0 0.0
    %695 = vmatpush1.msra.mxu0 0.0
    %696 = vmatprep.subr.mxu0 0.0
    %697 = vmatpush1.msra.mxu0 0.0
    %698 = vmatprep.subr.mxu0 0.0
    %699 = vmatpush1.msra.mxu0 0.0
    %700 = vmatprep.subr.mxu0 0.0
    %701 = vmatpush1.msra.mxu0 0.0
    %702 = vmatprep.mubr.f32.mxu0 0.0
    %703 = vmatmul.mubr.f32.gmra.mrb[0].mxu0 %v636
    %v704 = vpop.f32.mrb[0].mxu0
    %v705 = vadd.f32 %v242, %v704
    %v706 = vpop.f32.mrb[0].mxu0
    %707 = vdwg.mxu0
    %v708 = vmul.f32 %v705, %v258
    %v709 = vtanh.pop %v708
    %v710 = vmul.f32 %v709, %v258
    %v711 = vadd.f32 %v710, %v259
    %v712 = vmul.f32 %v711, %v449
    %714 = vrot.lane.b32.xlu0 %v711, 32
    %v715 = vpop.permute.xlu0 %714
    %v717 = vmul.f32 %v711, %v715
    %719 = vrot.lane.b32.xlu0 %v717, 32
    %v720 = vpop.permute.xlu0 %719
    %v722 = vadd.f32 %v712, %v720
    %v723 = vtanh.pop %v722
    %725 = vrot.lane.b32.xlu0 %v723, 32
    %v726 = vpop.permute.xlu0 %725
    %v728 = vmul.f32 %v711, %v726
    %730 = vrot.lane.b32.xlu0 %v728, 64
    %v731 = vpop.permute.xlu0 %730
    %v732 = vsel %vm78, %v731, 0
    %734 = vmatprep.subr.mxu0 0.0
    %735 = vmatpush1.msra.mxu0 %v244
    %736 = vmatprep.subr.mxu0 0.0
    %737 = vmatpush1.msra.mxu0 %v245
    %738 = vmatprep.subr.mxu0 0.0
    %739 = vmatpush1.msra.mxu0 %v246
    %740 = vmatprep.subr.mxu0 0.0
    %741 = vmatpush1.msra.mxu0 %v247
    %742 = vmatprep.subr.mxu0 0.0
    %743 = vmatpush1.msra.mxu0 0.0
    %744 = vmatprep.subr.mxu0 0.0
    %745 = vmatpush1.msra.mxu0 0.0
    %746 = vmatprep.subr.mxu0 0.0
    %747 = vmatpush1.msra.mxu0 0.0
    %748 = vmatprep.subr.mxu0 0.0
    %749 = vmatpush1.msra.mxu0 0.0
    %750 = vmatprep.subr.mxu0 0.0
    %751 = vmatpush1.msra.mxu0 0.0
    %752 = vmatprep.subr.mxu0 0.0
    %753 = vmatpush1.msra.mxu0 0.0
    %754 = vmatprep.subr.mxu0 0.0
    %755 = vmatpush1.msra.mxu0 0.0
    %756 = vmatprep.subr.mxu0 0.0
    %757 = vmatpush1.msra.mxu0 0.0
    %758 = vmatprep.subr.mxu0 0.0
    %759 = vmatpush1.msra.mxu0 0.0
    %760 = vmatprep.subr.mxu0 0.0
    %761 = vmatpush1.msra.mxu0 0.0
    %762 = vmatprep.subr.mxu0 0.0
    %763 = vmatpush1.msra.mxu0 0.0
    %764 = vmatprep.subr.mxu0 0.0
    %765 = vmatpush1.msra.mxu0 0.0
    %766 = vmatprep.subr.mxu0 0.0
    %767 = vmatpush1.msra.mxu0 0.0
    %768 = vmatprep.subr.mxu0 0.0
    %769 = vmatpush1.msra.mxu0 0.0
    %770 = vmatprep.subr.mxu0 0.0
    %771 = vmatpush1.msra.mxu0 0.0
    %772 = vmatprep.subr.mxu0 0.0
    %773 = vmatpush1.msra.mxu0 0.0
    %774 = vmatprep.subr.mxu0 0.0
    %775 = vmatpush1.msra.mxu0 0.0
    %776 = vmatprep.subr.mxu0 0.0
    %777 = vmatpush1.msra.mxu0 0.0
    %778 = vmatprep.subr.mxu0 0.0
    %779 = vmatpush1.msra.mxu0 0.0
    %780 = vmatprep.subr.mxu0 0.0
    %781 = vmatpush1.msra.mxu0 0.0
    %782 = vmatprep.subr.mxu0 0.0
    %783 = vmatpush1.msra.mxu0 0.0
    %784 = vmatprep.subr.mxu0 0.0
    %785 = vmatpush1.msra.mxu0 0.0
    %786 = vmatprep.subr.mxu0 0.0
    %787 = vmatpush1.msra.mxu0 0.0
    %788 = vmatprep.subr.mxu0 0.0
    %789 = vmatpush1.msra.mxu0 0.0
    %790 = vmatprep.subr.mxu0 0.0
    %791 = vmatpush1.msra.mxu0 0.0
    %792 = vmatprep.subr.mxu0 0.0
    %793 = vmatpush1.msra.mxu0 0.0
    %794 = vmatprep.subr.mxu0 0.0
    %795 = vmatpush1.msra.mxu0 0.0
    %796 = vmatprep.subr.mxu0 0.0
    %797 = vmatpush1.msra.mxu0 0.0
    %798 = vmatprep.mubr.f32.mxu0 0.0
    %799 = vmatmul.mubr.f32.gmra.mrb[0].mxu0 %v732
    %v800 = vpop.f32.mrb[0].mxu0
    %v801 = vadd.f32 %v253, %v800
    %v802 = vpop.f32.mrb[0].mxu0
    %803 = vdwg.mxu0
    %804 = vst [vmem:[#allocation8 + $0x8] sm:$0xff] %v801
    %v805 = vld [vmem:[#allocation2 + $0x10] sm:$0xff]
    %v806 = vsel %vm78, %v629, 0
    %808 = vmatprep.subr.mxu0 0.0
    %809 = vmatpush1.msra.mxu0 %v225
    %810 = vmatprep.subr.mxu0 0.0
    %811 = vmatpush1.msra.mxu0 %v226
    %812 = vmatprep.subr.mxu0 0.0
    %813 = vmatpush1.msra.mxu0 %v227
    %814 = vmatprep.subr.mxu0 0.0
    %815 = vmatpush1.msra.mxu0 %v228
    %816 = vmatprep.subr.mxu0 0.0
    %817 = vmatpush1.msra.mxu0 0.0
    %818 = vmatprep.subr.mxu0 0.0
    %819 = vmatpush1.msra.mxu0 0.0
    %820 = vmatprep.subr.mxu0 0.0
    %821 = vmatpush1.msra.mxu0 0.0
    %822 = vmatprep.subr.mxu0 0.0
    %823 = vmatpush1.msra.mxu0 0.0
    %824 = vmatprep.subr.mxu0 0.0
    %825 = vmatpush1.msra.mxu0 0.0
    %826 = vmatprep.subr.mxu0 0.0
    %827 = vmatpush1.msra.mxu0 0.0
    %828 = vmatprep.subr.mxu0 0.0
    %829 = vmatpush1.msra.mxu0 0.0
    %830 = vmatprep.subr.mxu0 0.0
    %831 = vmatpush1.msra.mxu0 0.0
    %832 = vmatprep.subr.mxu0 0.0
    %833 = vmatpush1.msra.mxu0 0.0
    %834 = vmatprep.subr.mxu0 0.0
    %835 = vmatpush1.msra.mxu0 0.0
    %836 = vmatprep.subr.mxu0 0.0
    %837 = vmatpush1.msra.mxu0 0.0
    %838 = vmatprep.subr.mxu0 0.0
    %839 = vmatpush1.msra.mxu0 0.0
    %840 = vmatprep.subr.mxu0 0.0
    %841 = vmatpush1.msra.mxu0 0.0
    %842 = vmatprep.subr.mxu0 0.0
    %843 = vmatpush1.msra.mxu0 0.0
    %844 = vmatprep.subr.mxu0 0.0
    %845 = vmatpush1.msra.mxu0 0.0
    %846 = vmatprep.subr.mxu0 0.0
    %847 = vmatpush1.msra.mxu0 0.0
    %848 = vmatprep.subr.mxu0 0.0
    %849 = vmatpush1.msra.mxu0 0.0
    %850 = vmatprep.subr.mxu0 0.0
    %851 = vmatpush1.msra.mxu0 0.0
    %852 = vmatprep.subr.mxu0 0.0
    %853 = vmatpush1.msra.mxu0 0.0
    %854 = vmatprep.subr.mxu0 0.0
    %855 = vmatpush1.msra.mxu0 0.0
    %856 = vmatprep.subr.mxu0 0.0
    %857 = vmatpush1.msra.mxu0 0.0
    %858 = vmatprep.subr.mxu0 0.0
    %859 = vmatpush1.msra.mxu0 0.0
    %860 = vmatprep.subr.mxu0 0.0
    %861 = vmatpush1.msra.mxu0 0.0
    %862 = vmatprep.subr.mxu0 0.0
    %863 = vmatpush1.msra.mxu0 0.0
    %864 = vmatprep.subr.mxu0 0.0
    %865 = vmatpush1.msra.mxu0 0.0
    %866 = vmatprep.subr.mxu0 0.0
    %867 = vmatpush1.msra.mxu0 0.0
    %868 = vmatprep.subr.mxu0 0.0
    %869 = vmatpush1.msra.mxu0 0.0
    %870 = vmatprep.subr.mxu0 0.0
    %871 = vmatpush1.msra.mxu0 0.0
    %872 = vmatprep.mubr.f32.mxu0 0.0
    %873 = vmatmul.mubr.f32.gmra.mrb[0].mxu0 %v806
    %v874 = vpop.f32.mrb[0].mxu0
    %v875 = vadd.f32 0.0, %v874
    %v876 = vpop.f32.mrb[0].mxu0
    %877 = vdwg.mxu0
    %v878 = vadd.f32 %v805, %v875
    %v879 = vmul.f32 %v878, %v258
    %v880 = vtanh.pop %v879
    %v881 = vmul.f32 %v880, %v258
    %v882 = vadd.f32 %v881, %v259
    %v883 = vmul.f32 %v882, %v620
    %885 = vrot.lane.b32.xlu0 %v882, 32
    %v886 = vpop.permute.xlu0 %885
    %v888 = vmul.f32 %v882, %v886
    %890 = vrot.lane.b32.xlu0 %v888, 32
    %v891 = vpop.permute.xlu0 %890
    %v893 = vadd.f32 %v883, %v891
    %v894 = vtanh.pop %v893
    %896 = vrot.lane.b32.xlu0 %v894, 32
    %v897 = vpop.permute.xlu0 %896
    %v899 = vmul.f32 %v882, %v897
    %901 = vrot.lane.b32.xlu0 %v899, 64
    %v902 = vpop.permute.xlu0 %901
    %904 = vrot.lane.b32.xlu0 %v728, 96
    %v905 = vpop.permute.xlu0 %904
    %v907 = vsel %vm78, %v902, %v905
    %v909 = vsel %vm361, %v907, 0
    %911 = vmatprep.subr.mxu0 0.0
    %912 = vmatpush1.msra.mxu0 %v229
    %913 = vmatprep.subr.mxu0 0.0
    %914 = vmatpush1.msra.mxu0 %v230
    %915 = vmatprep.subr.mxu0 0.0
    %916 = vmatpush1.msra.mxu0 %v231
    %917 = vmatprep.subr.mxu0 0.0
    %918 = vmatpush1.msra.mxu0 %v232
    %919 = vmatprep.subr.mxu0 0.0
    %920 = vmatpush1.msra.mxu0 %v233
    %921 = vmatprep.subr.mxu0 0.0
    %922 = vmatpush1.msra.mxu0 %v234
    %923 = vmatprep.subr.mxu0 0.0
    %924 = vmatpush1.msra.mxu0 %v235
    %925 = vmatprep.subr.mxu0 0.0
    %926 = vmatpush1.msra.mxu0 %v236
    %927 = vmatprep.subr.mxu0 0.0
    %928 = vmatpush1.msra.mxu0 0.0
    %929 = vmatprep.subr.mxu0 0.0
    %930 = vmatpush1.msra.mxu0 0.0
    %931 = vmatprep.subr.mxu0 0.0
    %932 = vmatpush1.msra.mxu0 0.0
    %933 = vmatprep.subr.mxu0 0.0
    %934 = vmatpush1.msra.mxu0 0.0
    %935 = vmatprep.subr.mxu0 0.0
    %936 = vmatpush1.msra.mxu0 0.0
    %937 = vmatprep.subr.mxu0 0.0
    %938 = vmatpush1.msra.mxu0 0.0
    %939 = vmatprep.subr.mxu0 0.0
    %940 = vmatpush1.msra.mxu0 0.0
    %941 = vmatprep.subr.mxu0 0.0
    %942 = vmatpush1.msra.mxu0 0.0
    %943 = vmatprep.subr.mxu0 0.0
    %944 = vmatpush1.msra.mxu0 0.0
    %945 = vmatprep.subr.mxu0 0.0
    %946 = vmatpush1.msra.mxu0 0.0
    %947 = vmatprep.subr.mxu0 0.0
    %948 = vmatpush1.msra.mxu0 0.0
    %949 = vmatprep.subr.mxu0 0.0
    %950 = vmatpush1.msra.mxu0 0.0
    %951 = vmatprep.subr.mxu0 0.0
    %952 = vmatpush1.msra.mxu0 0.0
    %953 = vmatprep.subr.mxu0 0.0
    %954 = vmatpush1.msra.mxu0 0.0
    %955 = vmatprep.subr.mxu0 0.0
    %956 = vmatpush1.msra.mxu0 0.0
    %957 = vmatprep.subr.mxu0 0.0
    %958 = vmatpush1.msra.mxu0 0.0
    %959 = vmatprep.subr.mxu0 0.0
    %960 = vmatpush1.msra.mxu0 0.0
    %961 = vmatprep.subr.mxu0 0.0
    %962 = vmatpush1.msra.mxu0 0.0
    %963 = vmatprep.subr.mxu0 0.0
    %964 = vmatpush1.msra.mxu0 0.0
    %965 = vmatprep.subr.mxu0 0.0
    %966 = vmatpush1.msra.mxu0 0.0
    %967 = vmatprep.subr.mxu0 0.0
    %968 = vmatpush1.msra.mxu0 0.0
    %969 = vmatprep.subr.mxu0 0.0
    %970 = vmatpush1.msra.mxu0 0.0
    %971 = vmatprep.subr.mxu0 0.0
    %972 = vmatpush1.msra.mxu0 0.0
    %973 = vmatprep.subr.mxu0 0.0
    %974 = vmatpush1.msra.mxu0 0.0
    %975 = vmatprep.mubr.f32.mxu0 0.0
    %976 = vmatmul.mubr.f32.gmra.mrb[0].mxu0 %v909
    %v977 = vpop.f32.mrb[0].mxu0
    %v978 = vadd.f32 %v242, %v977
    %v979 = vpop.f32.mrb[0].mxu0
    %980 = vdwg.mxu0
    %v981 = vmul.f32 %v978, %v258
    %v982 = vtanh.pop %v981
    %v983 = vmul.f32 %v982, %v258
    %v984 = vadd.f32 %v983, %v259
    %v985 = vmul.f32 %v984, %v722
    %987 = vrot.lane.b32.xlu0 %v984, 32
    %v988 = vpop.permute.xlu0 %987
    %v990 = vmul.f32 %v984, %v988
    %992 = vrot.lane.b32.xlu0 %v990, 32
    %v993 = vpop.permute.xlu0 %992
    %v995 = vadd.f32 %v985, %v993
    %v996 = vtanh.pop %v995
    %998 = vrot.lane.b32.xlu0 %v996, 32
    %v999 = vpop.permute.xlu0 %998
    %v1001 = vmul.f32 %v984, %v999
    %1003 = vrot.lane.b32.xlu0 %v1001, 64
    %v1004 = vpop.permute.xlu0 %1003
    %v1005 = vsel %vm78, %v1004, 0
    %1007 = vmatprep.subr.mxu0 0.0
    %1008 = vmatpush1.msra.mxu0 %v244
    %1009 = vmatprep.subr.mxu0 0.0
    %1010 = vmatpush1.msra.mxu0 %v245
    %1011 = vmatprep.subr.mxu0 0.0
    %1012 = vmatpush1.msra.mxu0 %v246
    %1013 = vmatprep.subr.mxu0 0.0
    %1014 = vmatpush1.msra.mxu0 %v247
    %1015 = vmatprep.subr.mxu0 0.0
    %1016 = vmatpush1.msra.mxu0 0.0
    %1017 = vmatprep.subr.mxu0 0.0
    %1018 = vmatpush1.msra.mxu0 0.0
    %1019 = vmatprep.subr.mxu0 0.0
    %1020 = vmatpush1.msra.mxu0 0.0
    %1021 = vmatprep.subr.mxu0 0.0
    %1022 = vmatpush1.msra.mxu0 0.0
    %1023 = vmatprep.subr.mxu0 0.0
    %1024 = vmatpush1.msra.mxu0 0.0
    %1025 = vmatprep.subr.mxu0 0.0
    %1026 = vmatpush1.msra.mxu0 0.0
    %1027 = vmatprep.subr.mxu0 0.0
    %1028 = vmatpush1.msra.mxu0 0.0
    %1029 = vmatprep.subr.mxu0 0.0
    %1030 = vmatpush1.msra.mxu0 0.0
    %1031 = vmatprep.subr.mxu0 0.0
    %1032 = vmatpush1.msra.mxu0 0.0
    %1033 = vmatprep.subr.mxu0 0.0
    %1034 = vmatpush1.msra.mxu0 0.0
    %1035 = vmatprep.subr.mxu0 0.0
    %1036 = vmatpush1.msra.mxu0 0.0
    %1037 = vmatprep.subr.mxu0 0.0
    %1038 = vmatpush1.msra.mxu0 0.0
    %1039 = vmatprep.subr.mxu0 0.0
    %1040 = vmatpush1.msra.mxu0 0.0
    %1041 = vmatprep.subr.mxu0 0.0
    %1042 = vmatpush1.msra.mxu0 0.0
    %1043 = vmatprep.subr.mxu0 0.0
    %1044 = vmatpush1.msra.mxu0 0.0
    %1045 = vmatprep.subr.mxu0 0.0
    %1046 = vmatpush1.msra.mxu0 0.0
    %1047 = vmatprep.subr.mxu0 0.0
    %1048 = vmatpush1.msra.mxu0 0.0
    %1049 = vmatprep.subr.mxu0 0.0
    %1050 = vmatpush1.msra.mxu0 0.0
    %1051 = vmatprep.subr.mxu0 0.0
    %1052 = vmatpush1.msra.mxu0 0.0
    %1053 = vmatprep.subr.mxu0 0.0
    %1054 = vmatpush1.msra.mxu0 0.0
    %1055 = vmatprep.subr.mxu0 0.0
    %1056 = vmatpush1.msra.mxu0 0.0
    %1057 = vmatprep.subr.mxu0 0.0
    %1058 = vmatpush1.msra.mxu0 0.0
    %1059 = vmatprep.subr.mxu0 0.0
    %1060 = vmatpush1.msra.mxu0 0.0
    %1061 = vmatprep.subr.mxu0 0.0
    %1062 = vmatpush1.msra.mxu0 0.0
    %1063 = vmatprep.subr.mxu0 0.0
    %1064 = vmatpush1.msra.mxu0 0.0
    %1065 = vmatprep.subr.mxu0 0.0
    %1066 = vmatpush1.msra.mxu0 0.0
    %1067 = vmatprep.subr.mxu0 0.0
    %1068 = vmatpush1.msra.mxu0 0.0
    %1069 = vmatprep.subr.mxu0 0.0
    %1070 = vmatpush1.msra.mxu0 0.0
    %1071 = vmatprep.mubr.f32.mxu0 0.0
    %1072 = vmatmul.mubr.f32.gmra.mrb[0].mxu0 %v1005
    %v1073 = vpop.f32.mrb[0].mxu0
    %v1074 = vadd.f32 %v253, %v1073
    %v1075 = vpop.f32.mrb[0].mxu0
    %1076 = vdwg.mxu0
    %1077 = vst [vmem:[#allocation8 + $0x10] sm:$0xff] %v1074
    %v1078 = vld [vmem:[#allocation2 + $0x18] sm:$0xff]
    %v1079 = vsel %vm78, %v902, 0
    %1081 = vmatprep.subr.mxu0 0.0
    %1082 = vmatpush1.msra.mxu0 %v225
    %1083 = vmatprep.subr.mxu0 0.0
    %1084 = vmatpush1.msra.mxu0 %v226
    %1085 = vmatprep.subr.mxu0 0.0
    %1086 = vmatpush1.msra.mxu0 %v227
    %1087 = vmatprep.subr.mxu0 0.0
    %1088 = vmatpush1.msra.mxu0 %v228
    %1089 = vmatprep.subr.mxu0 0.0
    %1090 = vmatpush1.msra.mxu0 0.0
    %1091 = vmatprep.subr.mxu0 0.0
    %1092 = vmatpush1.msra.mxu0 0.0
    %1093 = vmatprep.subr.mxu0 0.0
    %1094 = vmatpush1.msra.mxu0 0.0
    %1095 = vmatprep.subr.mxu0 0.0
    %1096 = vmatpush1.msra.mxu0 0.0
    %1097 = vmatprep.subr.mxu0 0.0
    %1098 = vmatpush1.msra.mxu0 0.0
    %1099 = vmatprep.subr.mxu0 0.0
    %1100 = vmatpush1.msra.mxu0 0.0
    %1101 = vmatprep.subr.mxu0 0.0
    %1102 = vmatpush1.msra.mxu0 0.0
    %1103 = vmatprep.subr.mxu0 0.0
    %1104 = vmatpush1.msra.mxu0 0.0
    %1105 = vmatprep.subr.mxu0 0.0
    %1106 = vmatpush1.msra.mxu0 0.0
    %1107 = vmatprep.subr.mxu0 0.0
    %1108 = vmatpush1.msra.mxu0 0.0
    %1109 = vmatprep.subr.mxu0 0.0
    %1110 = vmatpush1.msra.mxu0 0.0
    %1111 = vmatprep.subr.mxu0 0.0
    %1112 = vmatpush1.msra.mxu0 0.0
    %1113 = vmatprep.subr.mxu0 0.0
    %1114 = vmatpush1.msra.mxu0 0.0
    %1115 = vmatprep.subr.mxu0 0.0
    %1116 = vmatpush1.msra.mxu0 0.0
    %1117 = vmatprep.subr.mxu0 0.0
    %1118 = vmatpush1.msra.mxu0 0.0
    %1119 = vmatprep.subr.mxu0 0.0
    %1120 = vmatpush1.msra.mxu0 0.0
    %1121 = vmatprep.subr.mxu0 0.0
    %1122 = vmatpush1.msra.mxu0 0.0
    %1123 = vmatprep.subr.mxu0 0.0
    %1124 = vmatpush1.msra.mxu0 0.0
    %1125 = vmatprep.subr.mxu0 0.0
    %1126 = vmatpush1.msra.mxu0 0.0
    %1127 = vmatprep.subr.mxu0 0.0
    %1128 = vmatpush1.msra.mxu0 0.0
    %1129 = vmatprep.subr.mxu0 0.0
    %1130 = vmatpush1.msra.mxu0 0.0
    %1131 = vmatprep.subr.mxu0 0.0
    %1132 = vmatpush1.msra.mxu0 0.0
    %1133 = vmatprep.subr.mxu0 0.0
    %1134 = vmatpush1.msra.mxu0 0.0
    %1135 = vmatprep.subr.mxu0 0.0
    %1136 = vmatpush1.msra.mxu0 0.0
    %1137 = vmatprep.subr.mxu0 0.0
    %1138 = vmatpush1.msra.mxu0 0.0
    %1139 = vmatprep.subr.mxu0 0.0
    %1140 = vmatpush1.msra.mxu0 0.0
    %1141 = vmatprep.subr.mxu0 0.0
    %1142 = vmatpush1.msra.mxu0 0.0
    %1143 = vmatprep.subr.mxu0 0.0
    %1144 = vmatpush1.msra.mxu0 0.0
    %1145 = vmatprep.mubr.f32.mxu0 0.0
    %1146 = vmatmul.mubr.f32.gmra.mrb[0].mxu0 %v1079
    %v1147 = vpop.f32.mrb[0].mxu0
    %v1148 = vadd.f32 0.0, %v1147
    %v1149 = vpop.f32.mrb[0].mxu0
    %1150 = vdwg.mxu0
    %v1151 = vadd.f32 %v1078, %v1148
    %v1152 = vmul.f32 %v1151, %v258
    %v1153 = vtanh.pop %v1152
    %v1154 = vmul.f32 %v1153, %v258
    %v1155 = vadd.f32 %v1154, %v259
    %v1156 = vmul.f32 %v1155, %v893
    %1158 = vrot.lane.b32.xlu0 %v1155, 32
    %v1159 = vpop.permute.xlu0 %1158
    %v1161 = vmul.f32 %v1155, %v1159
    %1163 = vrot.lane.b32.xlu0 %v1161, 32
    %v1164 = vpop.permute.xlu0 %1163
    %v1166 = vadd.f32 %v1156, %v1164
    %v1167 = vtanh.pop %v1166
    %1169 = vrot.lane.b32.xlu0 %v1167, 32
    %v1170 = vpop.permute.xlu0 %1169
    %v1172 = vmul.f32 %v1155, %v1170
    %1174 = vrot.lane.b32.xlu0 %v1172, 64
    %v1175 = vpop.permute.xlu0 %1174
    %1177 = vrot.lane.b32.xlu0 %v1001, 96
    %v1178 = vpop.permute.xlu0 %1177
    %v1180 = vsel %vm78, %v1175, %v1178
    %v1182 = vsel %vm361, %v1180, 0
    %1184 = vmatprep.subr.mxu0 0.0
    %1185 = vmatpush1.msra.mxu0 %v229
    %1186 = vmatprep.subr.mxu0 0.0
    %1187 = vmatpush1.msra.mxu0 %v230
    %1188 = vmatprep.subr.mxu0 0.0
    %1189 = vmatpush1.msra.mxu0 %v231
    %1190 = vmatprep.subr.mxu0 0.0
    %1191 = vmatpush1.msra.mxu0 %v232
    %1192 = vmatprep.subr.mxu0 0.0
    %1193 = vmatpush1.msra.mxu0 %v233
    %1194 = vmatprep.subr.mxu0 0.0
    %1195 = vmatpush1.msra.mxu0 %v234
    %1196 = vmatprep.subr.mxu0 0.0
    %1197 = vmatpush1.msra.mxu0 %v235
    %1198 = vmatprep.subr.mxu0 0.0
    %1199 = vmatpush1.msra.mxu0 %v236
    %1200 = vmatprep.subr.mxu0 0.0
    %1201 = vmatpush1.msra.mxu0 0.0
    %1202 = vmatprep.subr.mxu0 0.0
    %1203 = vmatpush1.msra.mxu0 0.0
    %1204 = vmatprep.subr.mxu0 0.0
    %1205 = vmatpush1.msra.mxu0 0.0
    %1206 = vmatprep.subr.mxu0 0.0
    %1207 = vmatpush1.msra.mxu0 0.0
    %1208 = vmatprep.subr.mxu0 0.0
    %1209 = vmatpush1.msra.mxu0 0.0
    %1210 = vmatprep.subr.mxu0 0.0
    %1211 = vmatpush1.msra.mxu0 0.0
    %1212 = vmatprep.subr.mxu0 0.0
    %1213 = vmatpush1.msra.mxu0 0.0
    %1214 = vmatprep.subr.mxu0 0.0
    %1215 = vmatpush1.msra.mxu0 0.0
    %1216 = vmatprep.subr.mxu0 0.0
    %1217 = vmatpush1.msra.mxu0 0.0
    %1218 = vmatprep.subr.mxu0 0.0
    %1219 = vmatpush1.msra.mxu0 0.0
    %1220 = vmatprep.subr.mxu0 0.0
    %1221 = vmatpush1.msra.mxu0 0.0
    %1222 = vmatprep.subr.mxu0 0.0
    %1223 = vmatpush1.msra.mxu0 0.0
    %1224 = vmatprep.subr.mxu0 0.0
    %1225 = vmatpush1.msra.mxu0 0.0
    %1226 = vmatprep.subr.mxu0 0.0
    %1227 = vmatpush1.msra.mxu0 0.0
    %1228 = vmatprep.subr.mxu0 0.0
    %1229 = vmatpush1.msra.mxu0 0.0
    %1230 = vmatprep.subr.mxu0 0.0
    %1231 = vmatpush1.msra.mxu0 0.0
    %1232 = vmatprep.subr.mxu0 0.0
    %1233 = vmatpush1.msra.mxu0 0.0
    %1234 = vmatprep.subr.mxu0 0.0
    %1235 = vmatpush1.msra.mxu0 0.0
    %1236 = vmatprep.subr.mxu0 0.0
    %1237 = vmatpush1.msra.mxu0 0.0
    %1238 = vmatprep.subr.mxu0 0.0
    %1239 = vmatpush1.msra.mxu0 0.0
    %1240 = vmatprep.subr.mxu0 0.0
    %1241 = vmatpush1.msra.mxu0 0.0
    %1242 = vmatprep.subr.mxu0 0.0
    %1243 = vmatpush1.msra.mxu0 0.0
    %1244 = vmatprep.subr.mxu0 0.0
    %1245 = vmatpush1.msra.mxu0 0.0
    %1246 = vmatprep.subr.mxu0 0.0
    %1247 = vmatpush1.msra.mxu0 0.0
    %1248 = vmatprep.mubr.f32.mxu0 0.0
    %1249 = vmatmul.mubr.f32.gmra.mrb[0].mxu0 %v1182
    %v1250 = vpop.f32.mrb[0].mxu0
    %v1251 = vadd.f32 %v242, %v1250
    %v1252 = vpop.f32.mrb[0].mxu0
    %1253 = vdwg.mxu0
    %v1254 = vmul.f32 %v1251, %v258
    %v1255 = vtanh.pop %v1254
    %v1256 = vmul.f32 %v1255, %v258
    %v1257 = vadd.f32 %v1256, %v259
    %v1258 = vmul.f32 %v1257, %v995
    %1260 = vrot.lane.b32.xlu0 %v1257, 32
    %v1261 = vpop.permute.xlu0 %1260
    %v1263 = vmul.f32 %v1257, %v1261
    %1265 = vrot.lane.b32.xlu0 %v1263, 32
    %v1266 = vpop.permute.xlu0 %1265
    %v1268 = vadd.f32 %v1258, %v1266
    %v1269 = vtanh.pop %v1268
    %1271 = vrot.lane.b32.xlu0 %v1269, 32
    %v1272 = vpop.permute.xlu0 %1271
    %v1274 = vmul.f32 %v1257, %v1272
    %1276 = vrot.lane.b32.xlu0 %v1274, 64
    %v1277 = vpop.permute.xlu0 %1276
    %v1278 = vsel %vm78, %v1277, 0
    %1280 = vmatprep.subr.mxu0 0.0
    %1281 = vmatpush1.msra.mxu0 %v244
    %1282 = vmatprep.subr.mxu0 0.0
    %1283 = vmatpush1.msra.mxu0 %v245
    %1284 = vmatprep.subr.mxu0 0.0
    %1285 = vmatpush1.msra.mxu0 %v246
    %1286 = vmatprep.subr.mxu0 0.0
    %1287 = vmatpush1.msra.mxu0 %v247
    %1288 = vmatprep.subr.mxu0 0.0
    %1289 = vmatpush1.msra.mxu0 0.0
    %1290 = vmatprep.subr.mxu0 0.0
    %1291 = vmatpush1.msra.mxu0 0.0
    %1292 = vmatprep.subr.mxu0 0.0
    %1293 = vmatpush1.msra.mxu0 0.0
    %1294 = vmatprep.subr.mxu0 0.0
    %1295 = vmatpush1.msra.mxu0 0.0
    %1296 = vmatprep.subr.mxu0 0.0
    %1297 = vmatpush1.msra.mxu0 0.0
    %1298 = vmatprep.subr.mxu0 0.0
    %1299 = vmatpush1.msra.mxu0 0.0
    %1300 = vmatprep.subr.mxu0 0.0
    %1301 = vmatpush1.msra.mxu0 0.0
    %1302 = vmatprep.subr.mxu0 0.0
    %1303 = vmatpush1.msra.mxu0 0.0
    %1304 = vmatprep.subr.mxu0 0.0
    %1305 = vmatpush1.msra.mxu0 0.0
    %1306 = vmatprep.subr.mxu0 0.0
    %1307 = vmatpush1.msra.mxu0 0.0
    %1308 = vmatprep.subr.mxu0 0.0
    %1309 = vmatpush1.msra.mxu0 0.0
    %1310 = vmatprep.subr.mxu0 0.0
    %1311 = vmatpush1.msra.mxu0 0.0
    %1312 = vmatprep.subr.mxu0 0.0
    %1313 = vmatpush1.msra.mxu0 0.0
    %1314 = vmatprep.subr.mxu0 0.0
    %1315 = vmatpush1.msra.mxu0 0.0
    %1316 = vmatprep.subr.mxu0 0.0
    %1317 = vmatpush1.msra.mxu0 0.0
    %1318 = vmatprep.subr.mxu0 0.0
    %1319 = vmatpush1.msra.mxu0 0.0
    %1320 = vmatprep.subr.mxu0 0.0
    %1321 = vmatpush1.msra.mxu0 0.0
    %1322 = vmatprep.subr.mxu0 0.0
    %1323 = vmatpush1.msra.mxu0 0.0
    %1324 = vmatprep.subr.mxu0 0.0
    %1325 = vmatpush1.msra.mxu0 0.0
    %1326 = vmatprep.subr.mxu0 0.0
    %1327 = vmatpush1.msra.mxu0 0.0
    %1328 = vmatprep.subr.mxu0 0.0
    %1329 = vmatpush1.msra.mxu0 0.0
    %1330 = vmatprep.subr.mxu0 0.0
    %1331 = vmatpush1.msra.mxu0 0.0
    %1332 = vmatprep.subr.mxu0 0.0
    %1333 = vmatpush1.msra.mxu0 0.0
    %1334 = vmatprep.subr.mxu0 0.0
    %1335 = vmatpush1.msra.mxu0 0.0
    %1336 = vmatprep.subr.mxu0 0.0
    %1337 = vmatpush1.msra.mxu0 0.0
    %1338 = vmatprep.subr.mxu0 0.0
    %1339 = vmatpush1.msra.mxu0 0.0
    %1340 = vmatprep.subr.mxu0 0.0
    %1341 = vmatpush1.msra.mxu0 0.0
    %1342 = vmatprep.subr.mxu0 0.0
    %1343 = vmatpush1.msra.mxu0 0.0
    %1344 = vmatprep.mubr.f32.mxu0 0.0
    %1345 = vmatmul.mubr.f32.gmra.mrb[0].mxu0 %v1278
    %v1346 = vpop.f32.mrb[0].mxu0
    %v1347 = vadd.f32 %v253, %v1346
    %v1348 = vpop.f32.mrb[0].mxu0
    %1349 = vdwg.mxu0
    %1350 = vst [vmem:[#allocation8 + $0x18] sm:$0xff] %v1347
    %v1351 = vld [vmem:[#allocation2 + $0x20] sm:$0xff]
    %v1352 = vsel %vm78, %v1175, 0
    %1354 = vmatprep.subr.mxu0 0.0
    %1355 = vmatpush1.msra.mxu0 %v225
    %1356 = vmatprep.subr.mxu0 0.0
    %1357 = vmatpush1.msra.mxu0 %v226
    %1358 = vmatprep.subr.mxu0 0.0
    %1359 = vmatpush1.msra.mxu0 %v227
    %1360 = vmatprep.subr.mxu0 0.0
    %1361 = vmatpush1.msra.mxu0 %v228
    %1362 = vmatprep.subr.mxu0 0.0
    %1363 = vmatpush1.msra.mxu0 0.0
    %1364 = vmatprep.subr.mxu0 0.0
    %1365 = vmatpush1.msra.mxu0 0.0
    %1366 = vmatprep.subr.mxu0 0.0
    %1367 = vmatpush1.msra.mxu0 0.0
    %1368 = vmatprep.subr.mxu0 0.0
    %1369 = vmatpush1.msra.mxu0 0.0
    %1370 = vmatprep.subr.mxu0 0.0
    %1371 = vmatpush1.msra.mxu0 0.0
    %1372 = vmatprep.subr.mxu0 0.0
    %1373 = vmatpush1.msra.mxu0 0.0
    %1374 = vmatprep.subr.mxu0 0.0
    %1375 = vmatpush1.msra.mxu0 0.0
    %1376 = vmatprep.subr.mxu0 0.0
    %1377 = vmatpush1.msra.mxu0 0.0
    %1378 = vmatprep.subr.mxu0 0.0
    %1379 = vmatpush1.msra.mxu0 0.0
    %1380 = vmatprep.subr.mxu0 0.0
    %1381 = vmatpush1.msra.mxu0 0.0
    %1382 = vmatprep.subr.mxu0 0.0
    %1383 = vmatpush1.msra.mxu0 0.0
    %1384 = vmatprep.subr.mxu0 0.0
    %1385 = vmatpush1.msra.mxu0 0.0
    %1386 = vmatprep.subr.mxu0 0.0
    %1387 = vmatpush1.msra.mxu0 0.0
    %1388 = vmatprep.subr.mxu0 0.0
    %1389 = vmatpush1.msra.mxu0 0.0
    %1390 = vmatprep.subr.mxu0 0.0
    %1391 = vmatpush1.msra.mxu0 0.0
    %1392 = vmatprep.subr.mxu0 0.0
    %1393 = vmatpush1.msra.mxu0 0.0
    %1394 = vmatprep.subr.mxu0 0.0
    %1395 = vmatpush1.msra.mxu0 0.0
    %1396 = vmatprep.subr.mxu0 0.0
    %1397 = vmatpush1.msra.mxu0 0.0
    %1398 = vmatprep.subr.mxu0 0.0
    %1399 = vmatpush1.msra.mxu0 0.0
    %1400 = vmatprep.subr.mxu0 0.0
    %1401 = vmatpush1.msra.mxu0 0.0
    %1402 = vmatprep.subr.mxu0 0.0
    %1403 = vmatpush1.msra.mxu0 0.0
    %1404 = vmatprep.subr.mxu0 0.0
    %1405 = vmatpush1.msra.mxu0 0.0
    %1406 = vmatprep.subr.mxu0 0.0
    %1407 = vmatpush1.msra.mxu0 0.0
    %1408 = vmatprep.subr.mxu0 0.0
    %1409 = vmatpush1.msra.mxu0 0.0
    %1410 = vmatprep.subr.mxu0 0.0
    %1411 = vmatpush1.msra.mxu0 0.0
    %1412 = vmatprep.subr.mxu0 0.0
    %1413 = vmatpush1.msra.mxu0 0.0
    %1414 = vmatprep.subr.mxu0 0.0
    %1415 = vmatpush1.msra.mxu0 0.0
    %1416 = vmatprep.subr.mxu0 0.0
    %1417 = vmatpush1.msra.mxu0 0.0
    %1418 = vmatprep.mubr.f32.mxu0 0.0
    %1419 = vmatmul.mubr.f32.gmra.mrb[0].mxu0 %v1352
    %v1420 = vpop.f32.mrb[0].mxu0
    %v1421 = vadd.f32 0.0, %v1420
    %v1422 = vpop.f32.mrb[0].mxu0
    %1423 = vdwg.mxu0
    %v1424 = vadd.f32 %v1351, %v1421
    %v1425 = vmul.f32 %v1424, %v258
    %v1426 = vtanh.pop %v1425
    %v1427 = vmul.f32 %v1426, %v258
    %v1428 = vadd.f32 %v1427, %v259
    %v1429 = vmul.f32 %v1428, %v1166
    %1431 = vrot.lane.b32.xlu0 %v1428, 32
    %v1432 = vpop.permute.xlu0 %1431
    %v1434 = vmul.f32 %v1428, %v1432
    %1436 = vrot.lane.b32.xlu0 %v1434, 32
    %v1437 = vpop.permute.xlu0 %1436
    %v1439 = vadd.f32 %v1429, %v1437
    %v1440 = vtanh.pop %v1439
    %1442 = vrot.lane.b32.xlu0 %v1440, 32
    %v1443 = vpop.permute.xlu0 %1442
    %v1445 = vmul.f32 %v1428, %v1443
    %1447 = vrot.lane.b32.xlu0 %v1445, 64
    %v1448 = vpop.permute.xlu0 %1447
    %1450 = vrot.lane.b32.xlu0 %v1274, 96
    %v1451 = vpop.permute.xlu0 %1450
    %v1453 = vsel %vm78, %v1448, %v1451
    %v1455 = vsel %vm361, %v1453, 0
    %1457 = vmatprep.subr.mxu0 0.0
    %1458 = vmatpush1.msra.mxu0 %v229
    %1459 = vmatprep.subr.mxu0 0.0
    %1460 = vmatpush1.msra.mxu0 %v230
    %1461 = vmatprep.subr.mxu0 0.0
    %1462 = vmatpush1.msra.mxu0 %v231
    %1463 = vmatprep.subr.mxu0 0.0
    %1464 = vmatpush1.msra.mxu0 %v232
    %1465 = vmatprep.subr.mxu0 0.0
    %1466 = vmatpush1.msra.mxu0 %v233
    %1467 = vmatprep.subr.mxu0 0.0
    %1468 = vmatpush1.msra.mxu0 %v234
    %1469 = vmatprep.subr.mxu0 0.0
    %1470 = vmatpush1.msra.mxu0 %v235
    %1471 = vmatprep.subr.mxu0 0.0
    %1472 = vmatpush1.msra.mxu0 %v236
    %1473 = vmatprep.subr.mxu0 0.0
    %1474 = vmatpush1.msra.mxu0 0.0
    %1475 = vmatprep.subr.mxu0 0.0
    %1476 = vmatpush1.msra.mxu0 0.0
    %1477 = vmatprep.subr.mxu0 0.0
    %1478 = vmatpush1.msra.mxu0 0.0
    %1479 = vmatprep.subr.mxu0 0.0
    %1480 = vmatpush1.msra.mxu0 0.0
    %1481 = vmatprep.subr.mxu0 0.0
    %1482 = vmatpush1.msra.mxu0 0.0
    %1483 = vmatprep.subr.mxu0 0.0
    %1484 = vmatpush1.msra.mxu0 0.0
    %1485 = vmatprep.subr.mxu0 0.0
    %1486 = vmatpush1.msra.mxu0 0.0
    %1487 = vmatprep.subr.mxu0 0.0
    %1488 = vmatpush1.msra.mxu0 0.0
    %1489 = vmatprep.subr.mxu0 0.0
    %1490 = vmatpush1.msra.mxu0 0.0
    %1491 = vmatprep.subr.mxu0 0.0
    %1492 = vmatpush1.msra.mxu0 0.0
    %1493 = vmatprep.subr.mxu0 0.0
    %1494 = vmatpush1.msra.mxu0 0.0
    %1495 = vmatprep.subr.mxu0 0.0
    %1496 = vmatpush1.msra.mxu0 0.0
    %1497 = vmatprep.subr.mxu0 0.0
    %1498 = vmatpush1.msra.mxu0 0.0
    %1499 = vmatprep.subr.mxu0 0.0
    %1500 = vmatpush1.msra.mxu0 0.0
    %1501 = vmatprep.subr.mxu0 0.0
    %1502 = vmatpush1.msra.mxu0 0.0
    %1503 = vmatprep.subr.mxu0 0.0
    %1504 = vmatpush1.msra.mxu0 0.0
    %1505 = vmatprep.subr.mxu0 0.0
    %1506 = vmatpush1.msra.mxu0 0.0
    %1507 = vmatprep.subr.mxu0 0.0
    %1508 = vmatpush1.msra.mxu0 0.0
    %1509 = vmatprep.subr.mxu0 0.0
    %1510 = vmatpush1.msra.mxu0 0.0
    %1511 = vmatprep.subr.mxu0 0.0
    %1512 = vmatpush1.msra.mxu0 0.0
    %1513 = vmatprep.subr.mxu0 0.0
    %1514 = vmatpush1.msra.mxu0 0.0
    %1515 = vmatprep.subr.mxu0 0.0
    %1516 = vmatpush1.msra.mxu0 0.0
    %1517 = vmatprep.subr.mxu0 0.0
    %1518 = vmatpush1.msra.mxu0 0.0
    %1519 = vmatprep.subr.mxu0 0.0
    %1520 = vmatpush1.msra.mxu0 0.0
    %1521 = vmatprep.mubr.f32.mxu0 0.0
    %1522 = vmatmul.mubr.f32.gmra.mrb[0].mxu0 %v1455
    %v1523 = vpop.f32.mrb[0].mxu0
    %v1524 = vadd.f32 %v242, %v1523
    %v1525 = vpop.f32.mrb[0].mxu0
    %1526 = vdwg.mxu0
    %v1527 = vmul.f32 %v1524, %v258
    %v1528 = vtanh.pop %v1527
    %v1529 = vmul.f32 %v1528, %v258
    %v1530 = vadd.f32 %v1529, %v259
    %v1531 = vmul.f32 %v1530, %v1268
    %1533 = vrot.lane.b32.xlu0 %v1530, 32
    %v1534 = vpop.permute.xlu0 %1533
    %v1536 = vmul.f32 %v1530, %v1534
    %1538 = vrot.lane.b32.xlu0 %v1536, 32
    %v1539 = vpop.permute.xlu0 %1538
    %v1541 = vadd.f32 %v1531, %v1539
    %v1542 = vtanh.pop %v1541
    %1544 = vrot.lane.b32.xlu0 %v1542, 32
    %v1545 = vpop.permute.xlu0 %1544
    %v1547 = vmul.f32 %v1530, %v1545
    %1549 = vrot.lane.b32.xlu0 %v1547, 64
    %v1550 = vpop.permute.xlu0 %1549
    %v1551 = vsel %vm78, %v1550, 0
    %1553 = vmatprep.subr.mxu0 0.0
    %1554 = vmatpush1.msra.mxu0 %v244
    %1555 = vmatprep.subr.mxu0 0.0
    %1556 = vmatpush1.msra.mxu0 %v245
    %1557 = vmatprep.subr.mxu0 0.0
    %1558 = vmatpush1.msra.mxu0 %v246
    %1559 = vmatprep.subr.mxu0 0.0
    %1560 = vmatpush1.msra.mxu0 %v247
    %1561 = vmatprep.subr.mxu0 0.0
    %1562 = vmatpush1.msra.mxu0 0.0
    %1563 = vmatprep.subr.mxu0 0.0
    %1564 = vmatpush1.msra.mxu0 0.0
    %1565 = vmatprep.subr.mxu0 0.0
    %1566 = vmatpush1.msra.mxu0 0.0
    %1567 = vmatprep.subr.mxu0 0.0
    %1568 = vmatpush1.msra.mxu0 0.0
    %1569 = vmatprep.subr.mxu0 0.0
    %1570 = vmatpush1.msra.mxu0 0.0
    %1571 = vmatprep.subr.mxu0 0.0
    %1572 = vmatpush1.msra.mxu0 0.0
    %1573 = vmatprep.subr.mxu0 0.0
    %1574 = vmatpush1.msra.mxu0 0.0
    %1575 = vmatprep.subr.mxu0 0.0
    %1576 = vmatpush1.msra.mxu0 0.0
    %1577 = vmatprep.subr.mxu0 0.0
    %1578 = vmatpush1.msra.mxu0 0.0
    %1579 = vmatprep.subr.mxu0 0.0
    %1580 = vmatpush1.msra.mxu0 0.0
    %1581 = vmatprep.subr.mxu0 0.0
    %1582 = vmatpush1.msra.mxu0 0.0
    %1583 = vmatprep.subr.mxu0 0.0
    %1584 = vmatpush1.msra.mxu0 0.0
    %1585 = vmatprep.subr.mxu0 0.0
    %1586 = vmatpush1.msra.mxu0 0.0
    %1587 = vmatprep.subr.mxu0 0.0
    %1588 = vmatpush1.msra.mxu0 0.0
    %1589 = vmatprep.subr.mxu0 0.0
    %1590 = vmatpush1.msra.mxu0 0.0
    %1591 = vmatprep.subr.mxu0 0.0
    %1592 = vmatpush1.msra.mxu0 0.0
    %1593 = vmatprep.subr.mxu0 0.0
    %1594 = vmatpush1.msra.mxu0 0.0
    %1595 = vmatprep.subr.mxu0 0.0
    %1596 = vmatpush1.msra.mxu0 0.0
    %1597 = vmatprep.subr.mxu0 0.0
    %1598 = vmatpush1.msra.mxu0 0.0
    %1599 = vmatprep.subr.mxu0 0.0
    %1600 = vmatpush1.msra.mxu0 0.0
    %1601 = vmatprep.subr.mxu0 0.0
    %1602 = vmatpush1.msra.mxu0 0.0
    %1603 = vmatprep.subr.mxu0 0.0
    %1604 = vmatpush1.msra.mxu0 0.0
    %1605 = vmatprep.subr.mxu0 0.0
    %1606 = vmatpush1.msra.mxu0 0.0
    %1607 = vmatprep.subr.mxu0 0.0
    %1608 = vmatpush1.msra.mxu0 0.0
    %1609 = vmatprep.subr.mxu0 0.0
    %1610 = vmatpush1.msra.mxu0 0.0
    %1611 = vmatprep.subr.mxu0 0.0
    %1612 = vmatpush1.msra.mxu0 0.0
    %1613 = vmatprep.subr.mxu0 0.0
    %1614 = vmatpush1.msra.mxu0 0.0
    %1615 = vmatprep.subr.mxu0 0.0
    %1616 = vmatpush1.msra.mxu0 0.0
    %1617 = vmatprep.mubr.f32.mxu0 0.0
    %1618 = vmatmul.mubr.f32.gmra.mrb[0].mxu0 %v1551
    %v1619 = vpop.f32.mrb[0].mxu0
    %v1620 = vadd.f32 %v253, %v1619
    %v1621 = vpop.f32.mrb[0].mxu0
    %1622 = vdwg.mxu0
    %1623 = vst [vmem:[#allocation8 + $0x20] sm:$0xff] %v1620
    %v1624 = vld [vmem:[#allocation2 + $0x28] sm:$0xff]
    %v1625 = vsel %vm78, %v1448, 0
    %1627 = vmatprep.subr.mxu0 0.0
    %1628 = vmatpush1.msra.mxu0 %v225
    %1629 = vmatprep.subr.mxu0 0.0
    %1630 = vmatpush1.msra.mxu0 %v226
    %1631 = vmatprep.subr.mxu0 0.0
    %1632 = vmatpush1.msra.mxu0 %v227
    %1633 = vmatprep.subr.mxu0 0.0
    %1634 = vmatpush1.msra.mxu0 %v228
    %1635 = vmatprep.subr.mxu0 0.0
    %1636 = vmatpush1.msra.mxu0 0.0
    %1637 = vmatprep.subr.mxu0 0.0
    %1638 = vmatpush1.msra.mxu0 0.0
    %1639 = vmatprep.subr.mxu0 0.0
    %1640 = vmatpush1.msra.mxu0 0.0
    %1641 = vmatprep.subr.mxu0 0.0
    %1642 = vmatpush1.msra.mxu0 0.0
    %1643 = vmatprep.subr.mxu0 0.0
    %1644 = vmatpush1.msra.mxu0 0.0
    %1645 = vmatprep.subr.mxu0 0.0
    %1646 = vmatpush1.msra.mxu0 0.0
    %1647 = vmatprep.subr.mxu0 0.0
    %1648 = vmatpush1.msra.mxu0 0.0
    %1649 = vmatprep.subr.mxu0 0.0
    %1650 = vmatpush1.msra.mxu0 0.0
    %1651 = vmatprep.subr.mxu0 0.0
    %1652 = vmatpush1.msra.mxu0 0.0
    %1653 = vmatprep.subr.mxu0 0.0
    %1654 = vmatpush1.msra.mxu0 0.0
    %1655 = vmatprep.subr.mxu0 0.0
    %1656 = vmatpush1.msra.mxu0 0.0
    %1657 = vmatprep.subr.mxu0 0.0
    %1658 = vmatpush1.msra.mxu0 0.0
    %1659 = vmatprep.subr.mxu0 0.0
    %1660 = vmatpush1.msra.mxu0 0.0
    %1661 = vmatprep.subr.mxu0 0.0
    %1662 = vmatpush1.msra.mxu0 0.0
    %1663 = vmatprep.subr.mxu0 0.0
    %1664 = vmatpush1.msra.mxu0 0.0
    %1665 = vmatprep.subr.mxu0 0.0
    %1666 = vmatpush1.msra.mxu0 0.0
    %1667 = vmatprep.subr.mxu0 0.0
    %1668 = vmatpush1.msra.mxu0 0.0
    %1669 = vmatprep.subr.mxu0 0.0
    %1670 = vmatpush1.msra.mxu0 0.0
    %1671 = vmatprep.subr.mxu0 0.0
    %1672 = vmatpush1.msra.mxu0 0.0
    %1673 = vmatprep.subr.mxu0 0.0
    %1674 = vmatpush1.msra.mxu0 0.0
    %1675 = vmatprep.subr.mxu0 0.0
    %1676 = vmatpush1.msra.mxu0 0.0
    %1677 = vmatprep.subr.mxu0 0.0
    %1678 = vmatpush1.msra.mxu0 0.0
    %1679 = vmatprep.subr.mxu0 0.0
    %1680 = vmatpush1.msra.mxu0 0.0
    %1681 = vmatprep.subr.mxu0 0.0
    %1682 = vmatpush1.msra.mxu0 0.0
    %1683 = vmatprep.subr.mxu0 0.0
    %1684 = vmatpush1.msra.mxu0 0.0
    %1685 = vmatprep.subr.mxu0 0.0
    %1686 = vmatpush1.msra.mxu0 0.0
    %1687 = vmatprep.subr.mxu0 0.0
    %1688 = vmatpush1.msra.mxu0 0.0
    %1689 = vmatprep.subr.mxu0 0.0
    %1690 = vmatpush1.msra.mxu0 0.0
    %1691 = vmatprep.mubr.f32.mxu0 0.0
    %1692 = vmatmul.mubr.f32.gmra.mrb[0].mxu0 %v1625
    %v1693 = vpop.f32.mrb[0].mxu0
    %v1694 = vadd.f32 0.0, %v1693
    %v1695 = vpop.f32.mrb[0].mxu0
    %1696 = vdwg.mxu0
    %v1697 = vadd.f32 %v1624, %v1694
    %v1698 = vmul.f32 %v1697, %v258
    %v1699 = vtanh.pop %v1698
    %v1700 = vmul.f32 %v1699, %v258
    %v1701 = vadd.f32 %v1700, %v259
    %v1702 = vmul.f32 %v1701, %v1439
    %1704 = vrot.lane.b32.xlu0 %v1701, 32
    %v1705 = vpop.permute.xlu0 %1704
    %v1707 = vmul.f32 %v1701, %v1705
    %1709 = vrot.lane.b32.xlu0 %v1707, 32
    %v1710 = vpop.permute.xlu0 %1709
    %v1712 = vadd.f32 %v1702, %v1710
    %v1713 = vtanh.pop %v1712
    %1715 = vrot.lane.b32.xlu0 %v1713, 32
    %v1716 = vpop.permute.xlu0 %1715
    %v1718 = vmul.f32 %v1701, %v1716
    %1720 = vrot.lane.b32.xlu0 %v1718, 64
    %v1721 = vpop.permute.xlu0 %1720
    %1723 = vrot.lane.b32.xlu0 %v1547, 96
    %v1724 = vpop.permute.xlu0 %1723
    %v1726 = vsel %vm78, %v1721, %v1724
    %v1728 = vsel %vm361, %v1726, 0
    %1730 = vmatprep.subr.mxu0 0.0
    %1731 = vmatpush1.msra.mxu0 %v229
    %1732 = vmatprep.subr.mxu0 0.0
    %1733 = vmatpush1.msra.mxu0 %v230
    %1734 = vmatprep.subr.mxu0 0.0
    %1735 = vmatpush1.msra.mxu0 %v231
    %1736 = vmatprep.subr.mxu0 0.0
    %1737 = vmatpush1.msra.mxu0 %v232
    %1738 = vmatprep.subr.mxu0 0.0
    %1739 = vmatpush1.msra.mxu0 %v233
    %1740 = vmatprep.subr.mxu0 0.0
    %1741 = vmatpush1.msra.mxu0 %v234
    %1742 = vmatprep.subr.mxu0 0.0
    %1743 = vmatpush1.msra.mxu0 %v235
    %1744 = vmatprep.subr.mxu0 0.0
    %1745 = vmatpush1.msra.mxu0 %v236
    %1746 = vmatprep.subr.mxu0 0.0
    %1747 = vmatpush1.msra.mxu0 0.0
    %1748 = vmatprep.subr.mxu0 0.0
    %1749 = vmatpush1.msra.mxu0 0.0
    %1750 = vmatprep.subr.mxu0 0.0
    %1751 = vmatpush1.msra.mxu0 0.0
    %1752 = vmatprep.subr.mxu0 0.0
    %1753 = vmatpush1.msra.mxu0 0.0
    %1754 = vmatprep.subr.mxu0 0.0
    %1755 = vmatpush1.msra.mxu0 0.0
    %1756 = vmatprep.subr.mxu0 0.0
    %1757 = vmatpush1.msra.mxu0 0.0
    %1758 = vmatprep.subr.mxu0 0.0
    %1759 = vmatpush1.msra.mxu0 0.0
    %1760 = vmatprep.subr.mxu0 0.0
    %1761 = vmatpush1.msra.mxu0 0.0
    %1762 = vmatprep.subr.mxu0 0.0
    %1763 = vmatpush1.msra.mxu0 0.0
    %1764 = vmatprep.subr.mxu0 0.0
    %1765 = vmatpush1.msra.mxu0 0.0
    %1766 = vmatprep.subr.mxu0 0.0
    %1767 = vmatpush1.msra.mxu0 0.0
    %1768 = vmatprep.subr.mxu0 0.0
    %1769 = vmatpush1.msra.mxu0 0.0
    %1770 = vmatprep.subr.mxu0 0.0
    %1771 = vmatpush1.msra.mxu0 0.0
    %1772 = vmatprep.subr.mxu0 0.0
    %1773 = vmatpush1.msra.mxu0 0.0
    %1774 = vmatprep.subr.mxu0 0.0
    %1775 = vmatpush1.msra.mxu0 0.0
    %1776 = vmatprep.subr.mxu0 0.0
    %1777 = vmatpush1.msra.mxu0 0.0
    %1778 = vmatprep.subr.mxu0 0.0
    %1779 = vmatpush1.msra.mxu0 0.0
    %1780 = vmatprep.subr.mxu0 0.0
    %1781 = vmatpush1.msra.mxu0 0.0
    %1782 = vmatprep.subr.mxu0 0.0
    %1783 = vmatpush1.msra.mxu0 0.0
    %1784 = vmatprep.subr.mxu0 0.0
    %1785 = vmatpush1.msra.mxu0 0.0
    %1786 = vmatprep.subr.mxu0 0.0
    %1787 = vmatpush1.msra.mxu0 0.0
    %1788 = vmatprep.subr.mxu0 0.0
    %1789 = vmatpush1.msra.mxu0 0.0
    %1790 = vmatprep.subr.mxu0 0.0
    %1791 = vmatpush1.msra.mxu0 0.0
    %1792 = vmatprep.subr.mxu0 0.0
    %1793 = vmatpush1.msra.mxu0 0.0
    %1794 = vmatprep.mubr.f32.mxu0 0.0
    %1795 = vmatmul.mubr.f32.gmra.mrb[0].mxu0 %v1728
    %v1796 = vpop.f32.mrb[0].mxu0
    %v1797 = vadd.f32 %v242, %v1796
    %v1798 = vpop.f32.mrb[0].mxu0
    %1799 = vdwg.mxu0
    %v1800 = vmul.f32 %v1797, %v258
    %v1801 = vtanh.pop %v1800
    %v1802 = vmul.f32 %v1801, %v258
    %v1803 = vadd.f32 %v1802, %v259
    %v1804 = vmul.f32 %v1803, %v1541
    %1806 = vrot.lane.b32.xlu0 %v1803, 32
    %v1807 = vpop.permute.xlu0 %1806
    %v1809 = vmul.f32 %v1803, %v1807
    %1811 = vrot.lane.b32.xlu0 %v1809, 32
    %v1812 = vpop.permute.xlu0 %1811
    %v1814 = vadd.f32 %v1804, %v1812
    %v1815 = vtanh.pop %v1814
    %1817 = vrot.lane.b32.xlu0 %v1815, 32
    %v1818 = vpop.permute.xlu0 %1817
    %v1820 = vmul.f32 %v1803, %v1818
    %1822 = vrot.lane.b32.xlu0 %v1820, 64
    %v1823 = vpop.permute.xlu0 %1822
    %v1824 = vsel %vm78, %v1823, 0
    %1826 = vmatprep.subr.mxu0 0.0
    %1827 = vmatpush1.msra.mxu0 %v244
    %1828 = vmatprep.subr.mxu0 0.0
    %1829 = vmatpush1.msra.mxu0 %v245
    %1830 = vmatprep.subr.mxu0 0.0
    %1831 = vmatpush1.msra.mxu0 %v246
    %1832 = vmatprep.subr.mxu0 0.0
    %1833 = vmatpush1.msra.mxu0 %v247
    %1834 = vmatprep.subr.mxu0 0.0
    %1835 = vmatpush1.msra.mxu0 0.0
    %1836 = vmatprep.subr.mxu0 0.0
    %1837 = vmatpush1.msra.mxu0 0.0
    %1838 = vmatprep.subr.mxu0 0.0
    %1839 = vmatpush1.msra.mxu0 0.0
    %1840 = vmatprep.subr.mxu0 0.0
    %1841 = vmatpush1.msra.mxu0 0.0
    %1842 = vmatprep.subr.mxu0 0.0
    %1843 = vmatpush1.msra.mxu0 0.0
    %1844 = vmatprep.subr.mxu0 0.0
    %1845 = vmatpush1.msra.mxu0 0.0
    %1846 = vmatprep.subr.mxu0 0.0
    %1847 = vmatpush1.msra.mxu0 0.0
    %1848 = vmatprep.subr.mxu0 0.0
    %1849 = vmatpush1.msra.mxu0 0.0
    %1850 = vmatprep.subr.mxu0 0.0
    %1851 = vmatpush1.msra.mxu0 0.0
    %1852 = vmatprep.subr.mxu0 0.0
    %1853 = vmatpush1.msra.mxu0 0.0
    %1854 = vmatprep.subr.mxu0 0.0
    %1855 = vmatpush1.msra.mxu0 0.0
    %1856 = vmatprep.subr.mxu0 0.0
    %1857 = vmatpush1.msra.mxu0 0.0
    %1858 = vmatprep.subr.mxu0 0.0
    %1859 = vmatpush1.msra.mxu0 0.0
    %1860 = vmatprep.subr.mxu0 0.0
    %1861 = vmatpush1.msra.mxu0 0.0
    %1862 = vmatprep.subr.mxu0 0.0
    %1863 = vmatpush1.msra.mxu0 0.0
    %1864 = vmatprep.subr.mxu0 0.0
    %1865 = vmatpush1.msra.mxu0 0.0
    %1866 = vmatprep.subr.mxu0 0.0
    %1867 = vmatpush1.msra.mxu0 0.0
    %1868 = vmatprep.subr.mxu0 0.0
    %1869 = vmatpush1.msra.mxu0 0.0
    %1870 = vmatprep.subr.mxu0 0.0
    %1871 = vmatpush1.msra.mxu0 0.0
    %1872 = vmatprep.subr.mxu0 0.0
    %1873 = vmatpush1.msra.mxu0 0.0
    %1874 = vmatprep.subr.mxu0 0.0
    %1875 = vmatpush1.msra.mxu0 0.0
    %1876 = vmatprep.subr.mxu0 0.0
    %1877 = vmatpush1.msra.mxu0 0.0
    %1878 = vmatprep.subr.mxu0 0.0
    %1879 = vmatpush1.msra.mxu0 0.0
    %1880 = vmatprep.subr.mxu0 0.0
    %1881 = vmatpush1.msra.mxu0 0.0
    %1882 = vmatprep.subr.mxu0 0.0
    %1883 = vmatpush1.msra.mxu0 0.0
    %1884 = vmatprep.subr.mxu0 0.0
    %1885 = vmatpush1.msra.mxu0 0.0
    %1886 = vmatprep.subr.mxu0 0.0
    %1887 = vmatpush1.msra.mxu0 0.0
    %1888 = vmatprep.subr.mxu0 0.0
    %1889 = vmatpush1.msra.mxu0 0.0
    %1890 = vmatprep.mubr.f32.mxu0 0.0
    %1891 = vmatmul.mubr.f32.gmra.mrb[0].mxu0 %v1824
    %v1892 = vpop.f32.mrb[0].mxu0
    %v1893 = vadd.f32 %v253, %v1892
    %v1894 = vpop.f32.mrb[0].mxu0
    %1895 = vdwg.mxu0
    %1896 = vst [vmem:[#allocation8 + $0x28] sm:$0xff] %v1893
    %v1897 = vld [vmem:[#allocation2 + $0x30] sm:$0xff]
    %v1898 = vsel %vm78, %v1721, 0
    %1900 = vmatprep.subr.mxu0 0.0
    %1901 = vmatpush1.msra.mxu0 %v225
    %1902 = vmatprep.subr.mxu0 0.0
    %1903 = vmatpush1.msra.mxu0 %v226
    %1904 = vmatprep.subr.mxu0 0.0
    %1905 = vmatpush1.msra.mxu0 %v227
    %1906 = vmatprep.subr.mxu0 0.0
    %1907 = vmatpush1.msra.mxu0 %v228
    %1908 = vmatprep.subr.mxu0 0.0
    %1909 = vmatpush1.msra.mxu0 0.0
    %1910 = vmatprep.subr.mxu0 0.0
    %1911 = vmatpush1.msra.mxu0 0.0
    %1912 = vmatprep.subr.mxu0 0.0
    %1913 = vmatpush1.msra.mxu0 0.0
    %1914 = vmatprep.subr.mxu0 0.0
    %1915 = vmatpush1.msra.mxu0 0.0
    %1916 = vmatprep.subr.mxu0 0.0
    %1917 = vmatpush1.msra.mxu0 0.0
    %1918 = vmatprep.subr.mxu0 0.0
    %1919 = vmatpush1.msra.mxu0 0.0
    %1920 = vmatprep.subr.mxu0 0.0
    %1921 = vmatpush1.msra.mxu0 0.0
    %1922 = vmatprep.subr.mxu0 0.0
    %1923 = vmatpush1.msra.mxu0 0.0
    %1924 = vmatprep.subr.mxu0 0.0
    %1925 = vmatpush1.msra.mxu0 0.0
    %1926 = vmatprep.subr.mxu0 0.0
    %1927 = vmatpush1.msra.mxu0 0.0
    %1928 = vmatprep.subr.mxu0 0.0
    %1929 = vmatpush1.msra.mxu0 0.0
    %1930 = vmatprep.subr.mxu0 0.0
    %1931 = vmatpush1.msra.mxu0 0.0
    %1932 = vmatprep.subr.mxu0 0.0
    %1933 = vmatpush1.msra.mxu0 0.0
    %1934 = vmatprep.subr.mxu0 0.0
    %1935 = vmatpush1.msra.mxu0 0.0
    %1936 = vmatprep.subr.mxu0 0.0
    %1937 = vmatpush1.msra.mxu0 0.0
    %1938 = vmatprep.subr.mxu0 0.0
    %1939 = vmatpush1.msra.mxu0 0.0
    %1940 = vmatprep.subr.mxu0 0.0
    %1941 = vmatpush1.msra.mxu0 0.0
    %1942 = vmatprep.subr.mxu0 0.0
    %1943 = vmatpush1.msra.mxu0 0.0
    %1944 = vmatprep.subr.mxu0 0.0
    %1945 = vmatpush1.msra.mxu0 0.0
    %1946 = vmatprep.subr.mxu0 0.0
    %1947 = vmatpush1.msra.mxu0 0.0
    %1948 = vmatprep.subr.mxu0 0.0
    %1949 = vmatpush1.msra.mxu0 0.0
    %1950 = vmatprep.subr.mxu0 0.0
    %1951 = vmatpush1.msra.mxu0 0.0
    %1952 = vmatprep.subr.mxu0 0.0
    %1953 = vmatpush1.msra.mxu0 0.0
    %1954 = vmatprep.subr.mxu0 0.0
    %1955 = vmatpush1.msra.mxu0 0.0
    %1956 = vmatprep.subr.mxu0 0.0
    %1957 = vmatpush1.msra.mxu0 0.0
    %1958 = vmatprep.subr.mxu0 0.0
    %1959 = vmatpush1.msra.mxu0 0.0
    %1960 = vmatprep.subr.mxu0 0.0
    %1961 = vmatpush1.msra.mxu0 0.0
    %1962 = vmatprep.subr.mxu0 0.0
    %1963 = vmatpush1.msra.mxu0 0.0
    %1964 = vmatprep.mubr.f32.mxu0 0.0
    %1965 = vmatmul.mubr.f32.gmra.mrb[0].mxu0 %v1898
    %v1966 = vpop.f32.mrb[0].mxu0
    %v1967 = vadd.f32 0.0, %v1966
    %v1968 = vpop.f32.mrb[0].mxu0
    %1969 = vdwg.mxu0
    %v1970 = vadd.f32 %v1897, %v1967
    %v1971 = vmul.f32 %v1970, %v258
    %v1972 = vtanh.pop %v1971
    %v1973 = vmul.f32 %v1972, %v258
    %v1974 = vadd.f32 %v1973, %v259
    %v1975 = vmul.f32 %v1974, %v1712
    %1977 = vrot.lane.b32.xlu0 %v1974, 32
    %v1978 = vpop.permute.xlu0 %1977
    %v1980 = vmul.f32 %v1974, %v1978
    %1982 = vrot.lane.b32.xlu0 %v1980, 32
    %v1983 = vpop.permute.xlu0 %1982
    %v1985 = vadd.f32 %v1975, %v1983
    %v1986 = vtanh.pop %v1985
    %1988 = vrot.lane.b32.xlu0 %v1986, 32
    %v1989 = vpop.permute.xlu0 %1988
    %v1991 = vmul.f32 %v1974, %v1989
    %1993 = vrot.lane.b32.xlu0 %v1991, 64
    %v1994 = vpop.permute.xlu0 %1993
    %1996 = vrot.lane.b32.xlu0 %v1820, 96
    %v1997 = vpop.permute.xlu0 %1996
    %v1999 = vsel %vm78, %v1994, %v1997
    %v2001 = vsel %vm361, %v1999, 0
    %2003 = vmatprep.subr.mxu0 0.0
    %2004 = vmatpush1.msra.mxu0 %v229
    %2005 = vmatprep.subr.mxu0 0.0
    %2006 = vmatpush1.msra.mxu0 %v230
    %2007 = vmatprep.subr.mxu0 0.0
    %2008 = vmatpush1.msra.mxu0 %v231
    %2009 = vmatprep.subr.mxu0 0.0
    %2010 = vmatpush1.msra.mxu0 %v232
    %2011 = vmatprep.subr.mxu0 0.0
    %2012 = vmatpush1.msra.mxu0 %v233
    %2013 = vmatprep.subr.mxu0 0.0
    %2014 = vmatpush1.msra.mxu0 %v234
    %2015 = vmatprep.subr.mxu0 0.0
    %2016 = vmatpush1.msra.mxu0 %v235
    %2017 = vmatprep.subr.mxu0 0.0
    %2018 = vmatpush1.msra.mxu0 %v236
    %2019 = vmatprep.subr.mxu0 0.0
    %2020 = vmatpush1.msra.mxu0 0.0
    %2021 = vmatprep.subr.mxu0 0.0
    %2022 = vmatpush1.msra.mxu0 0.0
    %2023 = vmatprep.subr.mxu0 0.0
    %2024 = vmatpush1.msra.mxu0 0.0
    %2025 = vmatprep.subr.mxu0 0.0
    %2026 = vmatpush1.msra.mxu0 0.0
    %2027 = vmatprep.subr.mxu0 0.0
    %2028 = vmatpush1.msra.mxu0 0.0
    %2029 = vmatprep.subr.mxu0 0.0
    %2030 = vmatpush1.msra.mxu0 0.0
    %2031 = vmatprep.subr.mxu0 0.0
    %2032 = vmatpush1.msra.mxu0 0.0
    %2033 = vmatprep.subr.mxu0 0.0
    %2034 = vmatpush1.msra.mxu0 0.0
    %2035 = vmatprep.subr.mxu0 0.0
    %2036 = vmatpush1.msra.mxu0 0.0
    %2037 = vmatprep.subr.mxu0 0.0
    %2038 = vmatpush1.msra.mxu0 0.0
    %2039 = vmatprep.subr.mxu0 0.0
    %2040 = vmatpush1.msra.mxu0 0.0
    %2041 = vmatprep.subr.mxu0 0.0
    %2042 = vmatpush1.msra.mxu0 0.0
    %2043 = vmatprep.subr.mxu0 0.0
    %2044 = vmatpush1.msra.mxu0 0.0
    %2045 = vmatprep.subr.mxu0 0.0
    %2046 = vmatpush1.msra.mxu0 0.0
    %2047 = vmatprep.subr.mxu0 0.0
    %2048 = vmatpush1.msra.mxu0 0.0
    %2049 = vmatprep.subr.mxu0 0.0
    %2050 = vmatpush1.msra.mxu0 0.0
    %2051 = vmatprep.subr.mxu0 0.0
    %2052 = vmatpush1.msra.mxu0 0.0
    %2053 = vmatprep.subr.mxu0 0.0
    %2054 = vmatpush1.msra.mxu0 0.0
    %2055 = vmatprep.subr.mxu0 0.0
    %2056 = vmatpush1.msra.mxu0 0.0
    %2057 = vmatprep.subr.mxu0 0.0
    %2058 = vmatpush1.msra.mxu0 0.0
    %2059 = vmatprep.subr.mxu0 0.0
    %2060 = vmatpush1.msra.mxu0 0.0
    %2061 = vmatprep.subr.mxu0 0.0
    %2062 = vmatpush1.msra.mxu0 0.0
    %2063 = vmatprep.subr.mxu0 0.0
    %2064 = vmatpush1.msra.mxu0 0.0
    %2065 = vmatprep.subr.mxu0 0.0
    %2066 = vmatpush1.msra.mxu0 0.0
    %2067 = vmatprep.mubr.f32.mxu0 0.0
    %2068 = vmatmul.mubr.f32.gmra.mrb[0].mxu0 %v2001
    %v2069 = vpop.f32.mrb[0].mxu0
    %v2070 = vadd.f32 %v242, %v2069
    %v2071 = vpop.f32.mrb[0].mxu0
    %2072 = vdwg.mxu0
    %v2073 = vmul.f32 %v2070, %v258
    %v2074 = vtanh.pop %v2073
    %v2075 = vmul.f32 %v2074, %v258
    %v2076 = vadd.f32 %v2075, %v259
    %v2077 = vmul.f32 %v2076, %v1814
    %2079 = vrot.lane.b32.xlu0 %v2076, 32
    %v2080 = vpop.permute.xlu0 %2079
    %v2082 = vmul.f32 %v2076, %v2080
    %2084 = vrot.lane.b32.xlu0 %v2082, 32
    %v2085 = vpop.permute.xlu0 %2084
    %v2087 = vadd.f32 %v2077, %v2085
    %v2088 = vtanh.pop %v2087
    %2090 = vrot.lane.b32.xlu0 %v2088, 32
    %v2091 = vpop.permute.xlu0 %2090
    %v2093 = vmul.f32 %v2076, %v2091
    %2095 = vrot.lane.b32.xlu0 %v2093, 64
    %v2096 = vpop.permute.xlu0 %2095
    %v2097 = vsel %vm78, %v2096, 0
    %2099 = vmatprep.subr.mxu0 0.0
    %2100 = vmatpush1.msra.mxu0 %v244
    %2101 = vmatprep.subr.mxu0 0.0
    %2102 = vmatpush1.msra.mxu0 %v245
    %2103 = vmatprep.subr.mxu0 0.0
    %2104 = vmatpush1.msra.mxu0 %v246
    %2105 = vmatprep.subr.mxu0 0.0
    %2106 = vmatpush1.msra.mxu0 %v247
    %2107 = vmatprep.subr.mxu0 0.0
    %2108 = vmatpush1.msra.mxu0 0.0
    %2109 = vmatprep.subr.mxu0 0.0
    %2110 = vmatpush1.msra.mxu0 0.0
    %2111 = vmatprep.subr.mxu0 0.0
    %2112 = vmatpush1.msra.mxu0 0.0
    %2113 = vmatprep.subr.mxu0 0.0
    %2114 = vmatpush1.msra.mxu0 0.0
    %2115 = vmatprep.subr.mxu0 0.0
    %2116 = vmatpush1.msra.mxu0 0.0
    %2117 = vmatprep.subr.mxu0 0.0
    %2118 = vmatpush1.msra.mxu0 0.0
    %2119 = vmatprep.subr.mxu0 0.0
    %2120 = vmatpush1.msra.mxu0 0.0
    %2121 = vmatprep.subr.mxu0 0.0
    %2122 = vmatpush1.msra.mxu0 0.0
    %2123 = vmatprep.subr.mxu0 0.0
    %2124 = vmatpush1.msra.mxu0 0.0
    %2125 = vmatprep.subr.mxu0 0.0
    %2126 = vmatpush1.msra.mxu0 0.0
    %2127 = vmatprep.subr.mxu0 0.0
    %2128 = vmatpush1.msra.mxu0 0.0
    %2129 = vmatprep.subr.mxu0 0.0
    %2130 = vmatpush1.msra.mxu0 0.0
    %2131 = vmatprep.subr.mxu0 0.0
    %2132 = vmatpush1.msra.mxu0 0.0
    %2133 = vmatprep.subr.mxu0 0.0
    %2134 = vmatpush1.msra.mxu0 0.0
    %2135 = vmatprep.subr.mxu0 0.0
    %2136 = vmatpush1.msra.mxu0 0.0
    %2137 = vmatprep.subr.mxu0 0.0
    %2138 = vmatpush1.msra.mxu0 0.0
    %2139 = vmatprep.subr.mxu0 0.0
    %2140 = vmatpush1.msra.mxu0 0.0
    %2141 = vmatprep.subr.mxu0 0.0
    %2142 = vmatpush1.msra.mxu0 0.0
    %2143 = vmatprep.subr.mxu0 0.0
    %2144 = vmatpush1.msra.mxu0 0.0
    %2145 = vmatprep.subr.mxu0 0.0
    %2146 = vmatpush1.msra.mxu0 0.0
    %2147 = vmatprep.subr.mxu0 0.0
    %2148 = vmatpush1.msra.mxu0 0.0
    %2149 = vmatprep.subr.mxu0 0.0
    %2150 = vmatpush1.msra.mxu0 0.0
    %2151 = vmatprep.subr.mxu0 0.0
    %2152 = vmatpush1.msra.mxu0 0.0
    %2153 = vmatprep.subr.mxu0 0.0
    %2154 = vmatpush1.msra.mxu0 0.0
    %2155 = vmatprep.subr.mxu0 0.0
    %2156 = vmatpush1.msra.mxu0 0.0
    %2157 = vmatprep.subr.mxu0 0.0
    %2158 = vmatpush1.msra.mxu0 0.0
    %2159 = vmatprep.subr.mxu0 0.0
    %2160 = vmatpush1.msra.mxu0 0.0
    %2161 = vmatprep.subr.mxu0 0.0
    %2162 = vmatpush1.msra.mxu0 0.0
    %2163 = vmatprep.mubr.f32.mxu0 0.0
    %2164 = vmatmul.mubr.f32.gmra.mrb[0].mxu0 %v2097
    %v2165 = vpop.f32.mrb[0].mxu0
    %v2166 = vadd.f32 %v253, %v2165
    %v2167 = vpop.f32.mrb[0].mxu0
    %2168 = vdwg.mxu0
    %2169 = vst [vmem:[#allocation8 + $0x30] sm:$0xff] %v2166
    %v2170 = vld [vmem:[#allocation2 + $0x38] sm:$0xff]
    %v2171 = vsel %vm78, %v1994, 0
    %2173 = vmatprep.subr.mxu0 0.0
    %2174 = vmatpush1.msra.mxu0 %v225
    %2175 = vmatprep.subr.mxu0 0.0
    %2176 = vmatpush1.msra.mxu0 %v226
    %2177 = vmatprep.subr.mxu0 0.0
    %2178 = vmatpush1.msra.mxu0 %v227
    %2179 = vmatprep.subr.mxu0 0.0
    %2180 = vmatpush1.msra.mxu0 %v228
    %2181 = vmatprep.subr.mxu0 0.0
    %2182 = vmatpush1.msra.mxu0 0.0
    %2183 = vmatprep.subr.mxu0 0.0
    %2184 = vmatpush1.msra.mxu0 0.0
    %2185 = vmatprep.subr.mxu0 0.0
    %2186 = vmatpush1.msra.mxu0 0.0
    %2187 = vmatprep.subr.mxu0 0.0
    %2188 = vmatpush1.msra.mxu0 0.0
    %2189 = vmatprep.subr.mxu0 0.0
    %2190 = vmatpush1.msra.mxu0 0.0
    %2191 = vmatprep.subr.mxu0 0.0
    %2192 = vmatpush1.msra.mxu0 0.0
    %2193 = vmatprep.subr.mxu0 0.0
    %2194 = vmatpush1.msra.mxu0 0.0
    %2195 = vmatprep.subr.mxu0 0.0
    %2196 = vmatpush1.msra.mxu0 0.0
    %2197 = vmatprep.subr.mxu0 0.0
    %2198 = vmatpush1.msra.mxu0 0.0
    %2199 = vmatprep.subr.mxu0 0.0
    %2200 = vmatpush1.msra.mxu0 0.0
    %2201 = vmatprep.subr.mxu0 0.0
    %2202 = vmatpush1.msra.mxu0 0.0
    %2203 = vmatprep.subr.mxu0 0.0
    %2204 = vmatpush1.msra.mxu0 0.0
    %2205 = vmatprep.subr.mxu0 0.0
    %2206 = vmatpush1.msra.mxu0 0.0
    %2207 = vmatprep.subr.mxu0 0.0
    %2208 = vmatpush1.msra.mxu0 0.0
    %2209 = vmatprep.subr.mxu0 0.0
    %2210 = vmatpush1.msra.mxu0 0.0
    %2211 = vmatprep.subr.mxu0 0.0
    %2212 = vmatpush1.msra.mxu0 0.0
    %2213 = vmatprep.subr.mxu0 0.0
    %2214 = vmatpush1.msra.mxu0 0.0
    %2215 = vmatprep.subr.mxu0 0.0
    %2216 = vmatpush1.msra.mxu0 0.0
    %2217 = vmatprep.subr.mxu0 0.0
    %2218 = vmatpush1.msra.mxu0 0.0
    %2219 = vmatprep.subr.mxu0 0.0
    %2220 = vmatpush1.msra.mxu0 0.0
    %2221 = vmatprep.subr.mxu0 0.0
    %2222 = vmatpush1.msra.mxu0 0.0
    %2223 = vmatprep.subr.mxu0 0.0
    %2224 = vmatpush1.msra.mxu0 0.0
    %2225 = vmatprep.subr.mxu0 0.0
    %2226 = vmatpush1.msra.mxu0 0.0
    %2227 = vmatprep.subr.mxu0 0.0
    %2228 = vmatpush1.msra.mxu0 0.0
    %2229 = vmatprep.subr.mxu0 0.0
    %2230 = vmatpush1.msra.mxu0 0.0
    %2231 = vmatprep.subr.mxu0 0.0
    %2232 = vmatpush1.msra.mxu0 0.0
    %2233 = vmatprep.subr.mxu0 0.0
    %2234 = vmatpush1.msra.mxu0 0.0
    %2235 = vmatprep.subr.mxu0 0.0
    %2236 = vmatpush1.msra.mxu0 0.0
    %2237 = vmatprep.mubr.f32.mxu0 0.0
    %2238 = vmatmul.mubr.f32.gmra.mrb[0].mxu0 %v2171
    %v2239 = vpop.f32.mrb[0].mxu0
    %v2240 = vadd.f32 0.0, %v2239
    %v2241 = vpop.f32.mrb[0].mxu0
    %2242 = vdwg.mxu0
    %v2243 = vadd.f32 %v2170, %v2240
    %v2244 = vmul.f32 %v2243, %v258
    %v2245 = vtanh.pop %v2244
    %v2246 = vmul.f32 %v2245, %v258
    %v2247 = vadd.f32 %v2246, %v259
    %v2248 = vmul.f32 %v2247, %v1985
    %2250 = vrot.lane.b32.xlu0 %v2247, 32
    %v2251 = vpop.permute.xlu0 %2250
    %v2253 = vmul.f32 %v2247, %v2251
    %2255 = vrot.lane.b32.xlu0 %v2253, 32
    %v2256 = vpop.permute.xlu0 %2255
    %v2258 = vadd.f32 %v2248, %v2256
    %v2259 = vtanh.pop %v2258
    %2261 = vrot.lane.b32.xlu0 %v2259, 32
    %v2262 = vpop.permute.xlu0 %2261
    %v2264 = vmul.f32 %v2247, %v2262
    %2266 = vrot.lane.b32.xlu0 %v2264, 64
    %v2267 = vpop.permute.xlu0 %2266
    %2269 = vrot.lane.b32.xlu0 %v2093, 96
    %v2270 = vpop.permute.xlu0 %2269
    %v2272 = vsel %vm78, %v2267, %v2270
    %v2274 = vsel %vm361, %v2272, 0
    %2276 = vmatprep.subr.mxu0 0.0
    %2277 = vmatpush1.msra.mxu0 %v229
    %2278 = vmatprep.subr.mxu0 0.0
    %2279 = vmatpush1.msra.mxu0 %v230
    %2280 = vmatprep.subr.mxu0 0.0
    %2281 = vmatpush1.msra.mxu0 %v231
    %2282 = vmatprep.subr.mxu0 0.0
    %2283 = vmatpush1.msra.mxu0 %v232
    %2284 = vmatprep.subr.mxu0 0.0
    %2285 = vmatpush1.msra.mxu0 %v233
    %2286 = vmatprep.subr.mxu0 0.0
    %2287 = vmatpush1.msra.mxu0 %v234
    %2288 = vmatprep.subr.mxu0 0.0
    %2289 = vmatpush1.msra.mxu0 %v235
    %2290 = vmatprep.subr.mxu0 0.0
    %2291 = vmatpush1.msra.mxu0 %v236
    %2292 = vmatprep.subr.mxu0 0.0
    %2293 = vmatpush1.msra.mxu0 0.0
    %2294 = vmatprep.subr.mxu0 0.0
    %2295 = vmatpush1.msra.mxu0 0.0
    %2296 = vmatprep.subr.mxu0 0.0
    %2297 = vmatpush1.msra.mxu0 0.0
    %2298 = vmatprep.subr.mxu0 0.0
    %2299 = vmatpush1.msra.mxu0 0.0
    %2300 = vmatprep.subr.mxu0 0.0
    %2301 = vmatpush1.msra.mxu0 0.0
    %2302 = vmatprep.subr.mxu0 0.0
    %2303 = vmatpush1.msra.mxu0 0.0
    %2304 = vmatprep.subr.mxu0 0.0
    %2305 = vmatpush1.msra.mxu0 0.0
    %2306 = vmatprep.subr.mxu0 0.0
    %2307 = vmatpush1.msra.mxu0 0.0
    %2308 = vmatprep.subr.mxu0 0.0
    %2309 = vmatpush1.msra.mxu0 0.0
    %2310 = vmatprep.subr.mxu0 0.0
    %2311 = vmatpush1.msra.mxu0 0.0
    %2312 = vmatprep.subr.mxu0 0.0
    %2313 = vmatpush1.msra.mxu0 0.0
    %2314 = vmatprep.subr.mxu0 0.0
    %2315 = vmatpush1.msra.mxu0 0.0
    %2316 = vmatprep.subr.mxu0 0.0
    %2317 = vmatpush1.msra.mxu0 0.0
    %2318 = vmatprep.subr.mxu0 0.0
    %2319 = vmatpush1.msra.mxu0 0.0
    %2320 = vmatprep.subr.mxu0 0.0
    %2321 = vmatpush1.msra.mxu0 0.0
    %2322 = vmatprep.subr.mxu0 0.0
    %2323 = vmatpush1.msra.mxu0 0.0
    %2324 = vmatprep.subr.mxu0 0.0
    %2325 = vmatpush1.msra.mxu0 0.0
    %2326 = vmatprep.subr.mxu0 0.0
    %2327 = vmatpush1.msra.mxu0 0.0
    %2328 = vmatprep.subr.mxu0 0.0
    %2329 = vmatpush1.msra.mxu0 0.0
    %2330 = vmatprep.subr.mxu0 0.0
    %2331 = vmatpush1.msra.mxu0 0.0
    %2332 = vmatprep.subr.mxu0 0.0
    %2333 = vmatpush1.msra.mxu0 0.0
    %2334 = vmatprep.subr.mxu0 0.0
    %2335 = vmatpush1.msra.mxu0 0.0
    %2336 = vmatprep.subr.mxu0 0.0
    %2337 = vmatpush1.msra.mxu0 0.0
    %2338 = vmatprep.subr.mxu0 0.0
    %2339 = vmatpush1.msra.mxu0 0.0
    %2340 = vmatprep.mubr.f32.mxu0 0.0
    %2341 = vmatmul.mubr.f32.gmra.mrb[0].mxu0 %v2274
    %v2342 = vpop.f32.mrb[0].mxu0
    %v2343 = vadd.f32 %v242, %v2342
    %v2344 = vpop.f32.mrb[0].mxu0
    %2345 = vdwg.mxu0
    %v2346 = vmul.f32 %v2343, %v258
    %v2347 = vtanh.pop %v2346
    %v2348 = vmul.f32 %v2347, %v258
    %v2349 = vadd.f32 %v2348, %v259
    %v2350 = vmul.f32 %v2349, %v2087
    %2352 = vrot.lane.b32.xlu0 %v2349, 32
    %v2353 = vpop.permute.xlu0 %2352
    %v2355 = vmul.f32 %v2349, %v2353
    %2357 = vrot.lane.b32.xlu0 %v2355, 32
    %v2358 = vpop.permute.xlu0 %2357
    %v2360 = vadd.f32 %v2350, %v2358
    %v2361 = vtanh.pop %v2360
    %2363 = vrot.lane.b32.xlu0 %v2361, 32
    %v2364 = vpop.permute.xlu0 %2363
    %v2366 = vmul.f32 %v2349, %v2364
    %2368 = vrot.lane.b32.xlu0 %v2366, 64
    %v2369 = vpop.permute.xlu0 %2368
    %v2370 = vsel %vm78, %v2369, 0
    %2372 = vmatprep.subr.mxu0 0.0
    %2373 = vmatpush1.msra.mxu0 %v244
    %2374 = vmatprep.subr.mxu0 0.0
    %2375 = vmatpush1.msra.mxu0 %v245
    %2376 = vmatprep.subr.mxu0 0.0
    %2377 = vmatpush1.msra.mxu0 %v246
    %2378 = vmatprep.subr.mxu0 0.0
    %2379 = vmatpush1.msra.mxu0 %v247
    %2380 = vmatprep.subr.mxu0 0.0
    %2381 = vmatpush1.msra.mxu0 0.0
    %2382 = vmatprep.subr.mxu0 0.0
    %2383 = vmatpush1.msra.mxu0 0.0
    %2384 = vmatprep.subr.mxu0 0.0
    %2385 = vmatpush1.msra.mxu0 0.0
    %2386 = vmatprep.subr.mxu0 0.0
    %2387 = vmatpush1.msra.mxu0 0.0
    %2388 = vmatprep.subr.mxu0 0.0
    %2389 = vmatpush1.msra.mxu0 0.0
    %2390 = vmatprep.subr.mxu0 0.0
    %2391 = vmatpush1.msra.mxu0 0.0
    %2392 = vmatprep.subr.mxu0 0.0
    %2393 = vmatpush1.msra.mxu0 0.0
    %2394 = vmatprep.subr.mxu0 0.0
    %2395 = vmatpush1.msra.mxu0 0.0
    %2396 = vmatprep.subr.mxu0 0.0
    %2397 = vmatpush1.msra.mxu0 0.0
    %2398 = vmatprep.subr.mxu0 0.0
    %2399 = vmatpush1.msra.mxu0 0.0
    %2400 = vmatprep.subr.mxu0 0.0
    %2401 = vmatpush1.msra.mxu0 0.0
    %2402 = vmatprep.subr.mxu0 0.0
    %2403 = vmatpush1.msra.mxu0 0.0
    %2404 = vmatprep.subr.mxu0 0.0
    %2405 = vmatpush1.msra.mxu0 0.0
    %2406 = vmatprep.subr.mxu0 0.0
    %2407 = vmatpush1.msra.mxu0 0.0
    %2408 = vmatprep.subr.mxu0 0.0
    %2409 = vmatpush1.msra.mxu0 0.0
    %2410 = vmatprep.subr.mxu0 0.0
    %2411 = vmatpush1.msra.mxu0 0.0
    %2412 = vmatprep.subr.mxu0 0.0
    %2413 = vmatpush1.msra.mxu0 0.0
    %2414 = vmatprep.subr.mxu0 0.0
    %2415 = vmatpush1.msra.mxu0 0.0
    %2416 = vmatprep.subr.mxu0 0.0
    %2417 = vmatpush1.msra.mxu0 0.0
    %2418 = vmatprep.subr.mxu0 0.0
    %2419 = vmatpush1.msra.mxu0 0.0
    %2420 = vmatprep.subr.mxu0 0.0
    %2421 = vmatpush1.msra.mxu0 0.0
    %2422 = vmatprep.subr.mxu0 0.0
    %2423 = vmatpush1.msra.mxu0 0.0
    %2424 = vmatprep.subr.mxu0 0.0
    %2425 = vmatpush1.msra.mxu0 0.0
    %2426 = vmatprep.subr.mxu0 0.0
    %2427 = vmatpush1.msra.mxu0 0.0
    %2428 = vmatprep.subr.mxu0 0.0
    %2429 = vmatpush1.msra.mxu0 0.0
    %2430 = vmatprep.subr.mxu0 0.0
    %2431 = vmatpush1.msra.mxu0 0.0
    %2432 = vmatprep.subr.mxu0 0.0
    %2433 = vmatpush1.msra.mxu0 0.0
    %2434 = vmatprep.subr.mxu0 0.0
    %2435 = vmatpush1.msra.mxu0 0.0
    %2436 = vmatprep.mubr.f32.mxu0 0.0
    %2437 = vmatmul.mubr.f32.gmra.mrb[0].mxu0 %v2370
    %v2438 = vpop.f32.mrb[0].mxu0
    %v2439 = vadd.f32 %v253, %v2438
    %v2440 = vpop.f32.mrb[0].mxu0
    %2441 = vdwg.mxu0
    %2442 = vst [vmem:[#allocation8 + $0x38] sm:$0xff] %v2439
    %v2443 = vld [vmem:[#allocation2 + $0x40] sm:$0xff]
    %v2444 = vsel %vm78, %v2267, 0
    %2446 = vmatprep.subr.mxu0 0.0
    %2447 = vmatpush1.msra.mxu0 %v225
    %2448 = vmatprep.subr.mxu0 0.0
    %2449 = vmatpush1.msra.mxu0 %v226
    %2450 = vmatprep.subr.mxu0 0.0
    %2451 = vmatpush1.msra.mxu0 %v227
    %2452 = vmatprep.subr.mxu0 0.0
    %2453 = vmatpush1.msra.mxu0 %v228
    %2454 = vmatprep.subr.mxu0 0.0
    %2455 = vmatpush1.msra.mxu0 0.0
    %2456 = vmatprep.subr.mxu0 0.0
    %2457 = vmatpush1.msra.mxu0 0.0
    %2458 = vmatprep.subr.mxu0 0.0
    %2459 = vmatpush1.msra.mxu0 0.0
    %2460 = vmatprep.subr.mxu0 0.0
    %2461 = vmatpush1.msra.mxu0 0.0
    %2462 = vmatprep.subr.mxu0 0.0
    %2463 = vmatpush1.msra.mxu0 0.0
    %2464 = vmatprep.subr.mxu0 0.0
    %2465 = vmatpush1.msra.mxu0 0.0
    %2466 = vmatprep.subr.mxu0 0.0
    %2467 = vmatpush1.msra.mxu0 0.0
    %2468 = vmatprep.subr.mxu0 0.0
    %2469 = vmatpush1.msra.mxu0 0.0
    %2470 = vmatprep.subr.mxu0 0.0
    %2471 = vmatpush1.msra.mxu0 0.0
    %2472 = vmatprep.subr.mxu0 0.0
    %2473 = vmatpush1.msra.mxu0 0.0
    %2474 = vmatprep.subr.mxu0 0.0
    %2475 = vmatpush1.msra.mxu0 0.0
    %2476 = vmatprep.subr.mxu0 0.0
    %2477 = vmatpush1.msra.mxu0 0.0
    %2478 = vmatprep.subr.mxu0 0.0
    %2479 = vmatpush1.msra.mxu0 0.0
    %2480 = vmatprep.subr.mxu0 0.0
    %2481 = vmatpush1.msra.mxu0 0.0
    %2482 = vmatprep.subr.mxu0 0.0
    %2483 = vmatpush1.msra.mxu0 0.0
    %2484 = vmatprep.subr.mxu0 0.0
    %2485 = vmatpush1.msra.mxu0 0.0
    %2486 = vmatprep.subr.mxu0 0.0
    %2487 = vmatpush1.msra.mxu0 0.0
    %2488 = vmatprep.subr.mxu0 0.0
    %2489 = vmatpush1.msra.mxu0 0.0
    %2490 = vmatprep.subr.mxu0 0.0
    %2491 = vmatpush1.msra.mxu0 0.0
    %2492 = vmatprep.subr.mxu0 0.0
    %2493 = vmatpush1.msra.mxu0 0.0
    %2494 = vmatprep.subr.mxu0 0.0
    %2495 = vmatpush1.msra.mxu0 0.0
    %2496 = vmatprep.subr.mxu0 0.0
    %2497 = vmatpush1.msra.mxu0 0.0
    %2498 = vmatprep.subr.mxu0 0.0
    %2499 = vmatpush1.msra.mxu0 0.0
    %2500 = vmatprep.subr.mxu0 0.0
    %2501 = vmatpush1.msra.mxu0 0.0
    %2502 = vmatprep.subr.mxu0 0.0
    %2503 = vmatpush1.msra.mxu0 0.0
    %2504 = vmatprep.subr.mxu0 0.0
    %2505 = vmatpush1.msra.mxu0 0.0
    %2506 = vmatprep.subr.mxu0 0.0
    %2507 = vmatpush1.msra.mxu0 0.0
    %2508 = vmatprep.subr.mxu0 0.0
    %2509 = vmatpush1.msra.mxu0 0.0
    %2510 = vmatprep.mubr.f32.mxu0 0.0
    %2511 = vmatmul.mubr.f32.gmra.mrb[0].mxu0 %v2444
    %v2512 = vpop.f32.mrb[0].mxu0
    %v2513 = vadd.f32 0.0, %v2512
    %v2514 = vpop.f32.mrb[0].mxu0
    %2515 = vdwg.mxu0
    %v2516 = vadd.f32 %v2443, %v2513
    %v2517 = vmul.f32 %v2516, %v258
    %v2518 = vtanh.pop %v2517
    %v2519 = vmul.f32 %v2518, %v258
    %v2520 = vadd.f32 %v2519, %v259
    %v2521 = vmul.f32 %v2520, %v2258
    %2523 = vrot.lane.b32.xlu0 %v2520, 32
    %v2524 = vpop.permute.xlu0 %2523
    %v2526 = vmul.f32 %v2520, %v2524
    %2528 = vrot.lane.b32.xlu0 %v2526, 32
    %v2529 = vpop.permute.xlu0 %2528
    %v2531 = vadd.f32 %v2521, %v2529
    %v2532 = vtanh.pop %v2531
    %2534 = vrot.lane.b32.xlu0 %v2532, 32
    %v2535 = vpop.permute.xlu0 %2534
    %v2537 = vmul.f32 %v2520, %v2535
    %2539 = vrot.lane.b32.xlu0 %v2537, 64
    %v2540 = vpop.permute.xlu0 %2539
    %2542 = vrot.lane.b32.xlu0 %v2366, 96
    %v2543 = vpop.permute.xlu0 %2542
    %v2545 = vsel %vm78, %v2540, %v2543
    %v2547 = vsel %vm361, %v2545, 0
    %2549 = vmatprep.subr.mxu0 0.0
    %2550 = vmatpush1.msra.mxu0 %v229
    %2551 = vmatprep.subr.mxu0 0.0
    %2552 = vmatpush1.msra.mxu0 %v230
    %2553 = vmatprep.subr.mxu0 0.0
    %2554 = vmatpush1.msra.mxu0 %v231
    %2555 = vmatprep.subr.mxu0 0.0
    %2556 = vmatpush1.msra.mxu0 %v232
    %2557 = vmatprep.subr.mxu0 0.0
    %2558 = vmatpush1.msra.mxu0 %v233
    %2559 = vmatprep.subr.mxu0 0.0
    %2560 = vmatpush1.msra.mxu0 %v234
    %2561 = vmatprep.subr.mxu0 0.0
    %2562 = vmatpush1.msra.mxu0 %v235
    %2563 = vmatprep.subr.mxu0 0.0
    %2564 = vmatpush1.msra.mxu0 %v236
    %2565 = vmatprep.subr.mxu0 0.0
    %2566 = vmatpush1.msra.mxu0 0.0
    %2567 = vmatprep.subr.mxu0 0.0
    %2568 = vmatpush1.msra.mxu0 0.0
    %2569 = vmatprep.subr.mxu0 0.0
    %2570 = vmatpush1.msra.mxu0 0.0
    %2571 = vmatprep.subr.mxu0 0.0
    %2572 = vmatpush1.msra.mxu0 0.0
    %2573 = vmatprep.subr.mxu0 0.0
    %2574 = vmatpush1.msra.mxu0 0.0
    %2575 = vmatprep.subr.mxu0 0.0
    %2576 = vmatpush1.msra.mxu0 0.0
    %2577 = vmatprep.subr.mxu0 0.0
    %2578 = vmatpush1.msra.mxu0 0.0
    %2579 = vmatprep.subr.mxu0 0.0
    %2580 = vmatpush1.msra.mxu0 0.0
    %2581 = vmatprep.subr.mxu0 0.0
    %2582 = vmatpush1.msra.mxu0 0.0
    %2583 = vmatprep.subr.mxu0 0.0
    %2584 = vmatpush1.msra.mxu0 0.0
    %2585 = vmatprep.subr.mxu0 0.0
    %2586 = vmatpush1.msra.mxu0 0.0
    %2587 = vmatprep.subr.mxu0 0.0
    %2588 = vmatpush1.msra.mxu0 0.0
    %2589 = vmatprep.subr.mxu0 0.0
    %2590 = vmatpush1.msra.mxu0 0.0
    %2591 = vmatprep.subr.mxu0 0.0
    %2592 = vmatpush1.msra.mxu0 0.0
    %2593 = vmatprep.subr.mxu0 0.0
    %2594 = vmatpush1.msra.mxu0 0.0
    %2595 = vmatprep.subr.mxu0 0.0
    %2596 = vmatpush1.msra.mxu0 0.0
    %2597 = vmatprep.subr.mxu0 0.0
    %2598 = vmatpush1.msra.mxu0 0.0
    %2599 = vmatprep.subr.mxu0 0.0
    %2600 = vmatpush1.msra.mxu0 0.0
    %2601 = vmatprep.subr.mxu0 0.0
    %2602 = vmatpush1.msra.mxu0 0.0
    %2603 = vmatprep.subr.mxu0 0.0
    %2604 = vmatpush1.msra.mxu0 0.0
    %2605 = vmatprep.subr.mxu0 0.0
    %2606 = vmatpush1.msra.mxu0 0.0
    %2607 = vmatprep.subr.mxu0 0.0
    %2608 = vmatpush1.msra.mxu0 0.0
    %2609 = vmatprep.subr.mxu0 0.0
    %2610 = vmatpush1.msra.mxu0 0.0
    %2611 = vmatprep.subr.mxu0 0.0
    %2612 = vmatpush1.msra.mxu0 0.0
    %2613 = vmatprep.mubr.f32.mxu0 0.0
    %2614 = vmatmul.mubr.f32.gmra.mrb[0].mxu0 %v2547
    %v2615 = vpop.f32.mrb[0].mxu0
    %v2616 = vadd.f32 %v242, %v2615
    %v2617 = vpop.f32.mrb[0].mxu0
    %2618 = vdwg.mxu0
    %v2619 = vmul.f32 %v2616, %v258
    %v2620 = vtanh.pop %v2619
    %v2621 = vmul.f32 %v2620, %v258
    %v2622 = vadd.f32 %v2621, %v259
    %v2623 = vmul.f32 %v2622, %v2360
    %2625 = vrot.lane.b32.xlu0 %v2622, 32
    %v2626 = vpop.permute.xlu0 %2625
    %v2628 = vmul.f32 %v2622, %v2626
    %2630 = vrot.lane.b32.xlu0 %v2628, 32
    %v2631 = vpop.permute.xlu0 %2630
    %v2633 = vadd.f32 %v2623, %v2631
    %v2634 = vtanh.pop %v2633
    %2636 = vrot.lane.b32.xlu0 %v2634, 32
    %v2637 = vpop.permute.xlu0 %2636
    %v2639 = vmul.f32 %v2622, %v2637
    %2641 = vrot.lane.b32.xlu0 %v2639, 64
    %v2642 = vpop.permute.xlu0 %2641
    %v2643 = vsel %vm78, %v2642, 0
    %2645 = vmatprep.subr.mxu0 0.0
    %2646 = vmatpush1.msra.mxu0 %v244
    %2647 = vmatprep.subr.mxu0 0.0
    %2648 = vmatpush1.msra.mxu0 %v245
    %2649 = vmatprep.subr.mxu0 0.0
    %2650 = vmatpush1.msra.mxu0 %v246
    %2651 = vmatprep.subr.mxu0 0.0
    %2652 = vmatpush1.msra.mxu0 %v247
    %2653 = vmatprep.subr.mxu0 0.0
    %2654 = vmatpush1.msra.mxu0 0.0
    %2655 = vmatprep.subr.mxu0 0.0
    %2656 = vmatpush1.msra.mxu0 0.0
    %2657 = vmatprep.subr.mxu0 0.0
    %2658 = vmatpush1.msra.mxu0 0.0
    %2659 = vmatprep.subr.mxu0 0.0
    %2660 = vmatpush1.msra.mxu0 0.0
    %2661 = vmatprep.subr.mxu0 0.0
    %2662 = vmatpush1.msra.mxu0 0.0
    %2663 = vmatprep.subr.mxu0 0.0
    %2664 = vmatpush1.msra.mxu0 0.0
    %2665 = vmatprep.subr.mxu0 0.0
    %2666 = vmatpush1.msra.mxu0 0.0
    %2667 = vmatprep.subr.mxu0 0.0
    %2668 = vmatpush1.msra.mxu0 0.0
    %2669 = vmatprep.subr.mxu0 0.0
    %2670 = vmatpush1.msra.mxu0 0.0
    %2671 = vmatprep.subr.mxu0 0.0
    %2672 = vmatpush1.msra.mxu0 0.0
    %2673 = vmatprep.subr.mxu0 0.0
    %2674 = vmatpush1.msra.mxu0 0.0
    %2675 = vmatprep.subr.mxu0 0.0
    %2676 = vmatpush1.msra.mxu0 0.0
    %2677 = vmatprep.subr.mxu0 0.0
    %2678 = vmatpush1.msra.mxu0 0.0
    %2679 = vmatprep.subr.mxu0 0.0
    %2680 = vmatpush1.msra.mxu0 0.0
    %2681 = vmatprep.subr.mxu0 0.0
    %2682 = vmatpush1.msra.mxu0 0.0
    %2683 = vmatprep.subr.mxu0 0.0
    %2684 = vmatpush1.msra.mxu0 0.0
    %2685 = vmatprep.subr.mxu0 0.0
    %2686 = vmatpush1.msra.mxu0 0.0
    %2687 = vmatprep.subr.mxu0 0.0
    %2688 = vmatpush1.msra.mxu0 0.0
    %2689 = vmatprep.subr.mxu0 0.0
    %2690 = vmatpush1.msra.mxu0 0.0
    %2691 = vmatprep.subr.mxu0 0.0
    %2692 = vmatpush1.msra.mxu0 0.0
    %2693 = vmatprep.subr.mxu0 0.0
    %2694 = vmatpush1.msra.mxu0 0.0
    %2695 = vmatprep.subr.mxu0 0.0
    %2696 = vmatpush1.msra.mxu0 0.0
    %2697 = vmatprep.subr.mxu0 0.0
    %2698 = vmatpush1.msra.mxu0 0.0
    %2699 = vmatprep.subr.mxu0 0.0
    %2700 = vmatpush1.msra.mxu0 0.0
    %2701 = vmatprep.subr.mxu0 0.0
    %2702 = vmatpush1.msra.mxu0 0.0
    %2703 = vmatprep.subr.mxu0 0.0
    %2704 = vmatpush1.msra.mxu0 0.0
    %2705 = vmatprep.subr.mxu0 0.0
    %2706 = vmatpush1.msra.mxu0 0.0
    %2707 = vmatprep.subr.mxu0 0.0
    %2708 = vmatpush1.msra.mxu0 0.0
    %2709 = vmatprep.mubr.f32.mxu0 0.0
    %2710 = vmatmul.mubr.f32.gmra.mrb[0].mxu0 %v2643
    %v2711 = vpop.f32.mrb[0].mxu0
    %v2712 = vadd.f32 %v253, %v2711
    %v2713 = vpop.f32.mrb[0].mxu0
    %2714 = vdwg.mxu0
    %2715 = vst [vmem:[#allocation8 + $0x40] sm:$0xff] %v2712
    // Predicated region
    $region42: #{tpu_custom_call.1} parent=1 // pred_check
      _
    $region43: #{tpu_custom_call.1} parent=1 // pred_check_branch
      %2717 = sbr.rel (0) target = $region45
    $region44: #{tpu_custom_call.1} parent=1 // pred_region
      %s2719 = ssub.s32 1152, 1152
      %2720 = vsyncadd [#allocation5], %s2719
      %s2721 = sshll.u32 [#allocation8], 4
      %s2722 = int_to_ptr.vmem [resolvable:$true] %s2721
      %2727 = dma.vmem_to_hbm [thread:$0]  %s2722, 1152, %s8, [#allocation5], 128, 128, 8
    $region45: #{tpu_custom_call.1} parent=1 // pred_fallthru
      _
    // Predicated region
    $region46: #{tpu_custom_call.1} parent=1 // pred_check
      _
    $region47: #{tpu_custom_call.1} parent=1 // pred_check_branch
      %2729 = sbr.rel (0) target = $region49
    $region48: #{tpu_custom_call.1} parent=1 // pred_region
      %2730 = dma.done [#allocation5], 1152
    $region49: #{tpu_custom_call.1} parent=1 // pred_fallthru
      _
    %2731 = vsyncpa [#allocation4], 1
    %2732 = vsyncpa [#allocation7], 1
    %2733 = vsyncpa [#allocation5], 1

</llo_original>
